<compile_context>
chip_gen: v6e
topology: v6e:2x2x1
jax: 0.10.0
libtpu: 0.0.40
codegen_flags: <defaults>
</compile_context>

<pallas_src>
import functools

import numpy as np
import jax
import jax.numpy as jnp
from jax.experimental import pallas as pl
from jax.experimental.pallas import tpu as pltpu


def _ner_kernel(x_ref, len_ref, wi_ref, whf_ref, whb_ref, bg_ref,
                wpf_ref, wpb_ref, bp_ref,
                logits_ref,
                hf_buf, hb_buf,
                *, approx_sigmoid: bool):
    # x_ref:      VMEM (T*Bp, E) cdt   gathered embeddings, time-major rows (n = t*Bp + b)
    # len_ref:    VMEM (Bp, 1)   i32   true sequence lengths (0 for padded batch rows)
    # wi_ref:     VMEM (E, 8H)   cdt   [W_ih_f^T | W_ih_b^T], gate order (i, f, o, g)
    # whf_ref:    VMEM (H, 4H)   cdt   W_hh_f^T (same gate order)
    # whb_ref:    VMEM (H, 4H)   cdt   W_hh_b^T
    # bg_ref:     VMEM (1, 8H)   f32   [b_ih_f+b_hh_f | b_ih_b+b_hh_b]
    # wpf_ref:    VMEM (H, TP)   cdt   predictor weights, forward half (lane-padded)
    # wpb_ref:    VMEM (H, TP)   cdt   predictor weights, backward half
    # bp_ref:     VMEM (1, TP)   f32   predictor bias (lane-padded)
    # logits_ref: VMEM (T*Bp, TP)      lane-dense output, time-major rows
    # hf_buf:     VMEM (T*Bp, H) cdt   forward hidden states
    # hb_buf:     VMEM (T*Bp, H) cdt   backward hidden states
    TB, H = hf_buf.shape
    Bp = len_ref.shape[0]
    T = TB // Bp
    cdt = whf_ref.dtype                 # MXU operand / scratch dtype (bf16 perf, f32 exact)

    def sigmoid(v):
        # exp on EUP; reciprocal on EUP (vrcp) in the approx path, exact in the f32 path.
        return pl.reciprocal(1.0 + jnp.exp(-v), approx=approx_sigmoid)

    # ---- input-to-gate projection for BOTH directions, hoisted out of the recurrence ----
    xg = (jnp.dot(x_ref[...], wi_ref[...], preferred_element_type=jnp.float32)
          + bg_ref[...]).astype(cdt)                                   # (T*Bp, 8H)

    lens_col = len_ref[...]                                            # (Bp, 1) i32
    whf = whf_ref[...]
    whb = whb_ref[...]

    def cell(xg_t, h, c, w_hh_t):
        gates = jnp.dot(h.astype(cdt), w_hh_t,
                        preferred_element_type=jnp.float32) + xg_t     # (Bp, 4H) f32
        s = sigmoid(gates[:, 0:3 * H])      # sigmoid gates (i, f, o): 3H lanes of EUP work
        g = jnp.tanh(gates[:, 3 * H:4 * H])  # tanh gate g: H lanes
        i = s[:, 0:H]
        f = s[:, H:2 * H]
        o = s[:, 2 * H:3 * H]
        c_new = f * c + i * g
        h_new = o * jnp.tanh(c_new)
        return h_new, c_new

    zeros_h = jnp.zeros((Bp, H), jnp.float32)
    hf, cf = zeros_h, zeros_h
    hb, cb = zeros_h, zeros_h

    # ---- interleaved forward (t) / backward (T-1-t) recurrence: two independent chains
    # per iteration keep the MXU/EUP pipelines occupied. Static unroll (T is small).
    # TODO(synk): for T > ~16 switch to lax.fori_loop(..., unroll=small) carrying (h, c)
    # and index xg / hf_buf / hb_buf with pl.ds(pl.multiple_of(t * Bp, 8), Bp).
    for step in range(T):
        tf = step
        tb = T - 1 - step
        hf_new, cf_new = cell(xg[tf * Bp:(tf + 1) * Bp, 0:4 * H], hf, cf, whf)
        hb_new, cb_new = cell(xg[tb * Bp:(tb + 1) * Bp, 4 * H:8 * H], hb, cb, whb)
        mf = lens_col > tf                      # (Bp, 1) bool, packed-sequence validity
        mb = lens_col > tb
        hf = jnp.where(mf, hf_new, hf)          # freeze state past the end (fwd)
        cf = jnp.where(mf, cf_new, cf)
        hb = jnp.where(mb, hb_new, hb)          # state stays zero until t < len (bwd)
        cb = jnp.where(mb, cb_new, cb)
        hf_buf[tf * Bp:(tf + 1) * Bp, :] = jnp.where(mf, hf_new, 0.0).astype(hf_buf.dtype)
        hb_buf[tb * Bp:(tb + 1) * Bp, :] = jnp.where(mb, hb_new, 0.0).astype(hb_buf.dtype)

    # ---- predictor: hf @ Wp_f + hb @ Wp_b + b (no concat); lane-dense padded output ----
    logits = (jnp.dot(hf_buf[...], wpf_ref[...], preferred_element_type=jnp.float32)
              + jnp.dot(hb_buf[...], wpb_ref[...], preferred_element_type=jnp.float32)
              + bp_ref[...])
    logits_ref[...] = logits.astype(logits_ref.dtype)


def ner_forward(word_ids, lengths, p, compute_dtype=jnp.bfloat16):
    """word_ids: (B, T) int32, lengths: (B,) int32 -> tag_logits (B, T, num_tags)."""
    B, T = word_ids.shape
    V, E = p["emb"].shape
    H = p["w_hh_f"].shape[1]
    TAGS = p["w_pred"].shape[0]
    TP = ((TAGS + 127) // 128) * 128          # lane-dense (128-wide) padded tag dim
    Bp = max(8, ((B + 7) // 8) * 8)           # sublane-aligned internal batch
    cdt = compute_dtype
    out_dt = jnp.float32 if cdt == jnp.float32 else jnp.bfloat16

    def reorder(w, axis=0):
        # PyTorch gate order (i, f, g, o) -> kernel order (i, f, o, g): sigmoid gates
        # contiguous in lanes [0:3H], tanh gate in [3H:4H].
        i, f, g, o = jnp.split(w, 4, axis=axis)
        return jnp.concatenate([i, f, o, g], axis=axis)

    # --- host-side prep (ids -> time-major gather, padding, weight packing) ---
    ids = jnp.clip(word_ids.astype(jnp.int32), 0, V - 1)        # guard OOB ids
    ids_p = jnp.pad(ids, ((0, Bp - B), (0, 0)))                 # padded batch rows use id 0
    lens_p = jnp.pad(lengths.astype(jnp.int32), (0, Bp - B)).reshape(Bp, 1)

    ids_tm = ids_p.T.reshape(-1)                                # time-major, row n = t*Bp + b
    x = p["emb"].astype(jnp.float32)[ids_tm].astype(cdt)        # (T*Bp, E) wrapper-side gather

    wi_cat = jnp.concatenate([reorder(p["w_ih_f"]).T,
                              reorder(p["w_ih_b"]).T], axis=1).astype(cdt)       # (E, 8H)
    bg_cat = jnp.concatenate([reorder(p["b_ih_f"] + p["b_hh_f"]),
                              reorder(p["b_ih_b"] + p["b_hh_b"])]
                             ).reshape(1, -1).astype(jnp.float32)                # (1, 8H)
    whf = reorder(p["w_hh_f"]).T.astype(cdt)                                     # (H, 4H)
    whb = reorder(p["w_hh_b"]).T.astype(cdt)
    wp = jnp.pad(p["w_pred"].T, ((0, 0), (0, TP - TAGS)))                        # (2H, TP)
    wpf = wp[:H].astype(cdt)
    wpb = wp[H:].astype(cdt)
    bp = jnp.pad(p["b_pred"], (0, TP - TAGS)).reshape(1, TP).astype(jnp.float32)

    args = (x, lens_p, wi_cat, whf, whb, bg_cat, wpf, wpb, bp)
    vmem = pl.BlockSpec(memory_space=pltpu.MemorySpace.VMEM)

    out = pl.pallas_call(
        functools.partial(_ner_kernel, approx_sigmoid=(cdt != jnp.float32)),
        out_shape=jax.ShapeDtypeStruct((T * Bp, TP), out_dt),
        in_specs=[vmem] * len(args),
        out_specs=vmem,
        scratch_shapes=[
            pltpu.VMEM((T * Bp, H), cdt),    # forward hidden states
            pltpu.VMEM((T * Bp, H), cdt),    # backward hidden states
        ],
    )(*args)

    # (T*Bp, TP) time-major -> slice the small valid region first, then transpose.
    return out.reshape(T, Bp, TP)[:, :B, :TAGS].transpose(1, 0, 2)


def ner_forward_ref(word_ids, lengths, p):
    """Pure-JAX f32 reference of the PyTorch forward (packed BiLSTM + linear)."""
    B, T = word_ids.shape
    H = p["w_hh_f"].shape[1]
    emb = p["emb"][word_ids]                                      # (B, T, E)
    lens = lengths[:, None]

    def cell(x, h, c, w_ih, w_hh, b_ih, b_hh):
        gates = x @ w_ih.T + h @ w_hh.T + b_ih + b_hh
        i, f, g, o = jnp.split(gates, 4, axis=-1)
        i = 1.0 / (1.0 + jnp.exp(-i))
        f = 1.0 / (1.0 + jnp.exp(-f))
        o = 1.0 / (1.0 + jnp.exp(-o))
        g = jnp.tanh(g)
        c = f * c + i * g
        h = o * jnp.tanh(c)
        return h, c

    h = c = jnp.zeros((B, H), jnp.float32)
    hf = []
    for t in range(T):
        hn, cn = cell(emb[:, t], h, c, p["w_ih_f"], p["w_hh_f"], p["b_ih_f"], p["b_hh_f"])
        m = t < lens
        h = jnp.where(m, hn, h); c = jnp.where(m, cn, c)
        hf.append(jnp.where(m, h, 0.0))

    h = c = jnp.zeros((B, H), jnp.float32)
    hb = [None] * T
    for t in reversed(range(T)):
        hn, cn = cell(emb[:, t], h, c, p["w_ih_b"], p["w_hh_b"], p["b_ih_b"], p["b_hh_b"])
        m = t < lens
        h = jnp.where(m, hn, h); c = jnp.where(m, cn, c)
        hb[t] = jnp.where(m, h, 0.0)

    enc = jnp.concatenate([jnp.stack(hf, 1), jnp.stack(hb, 1)], axis=-1)  # (B, T, 2H)
    return enc @ p["w_pred"].T + p["b_pred"]


if __name__ == "__main__":
    # Small, deterministic setup: vocab=32, embedding=16, hidden=32, tags=8, batch=2, seq=8.
    V, E, H, TAGS = 32, 16, 32, 8
    B, T = 2, 8

    key = jax.random.PRNGKey(0)
    ks = jax.random.split(key, 12)

    def init(k, shape):
        return 0.1 * jax.random.normal(k, shape, dtype=jnp.float32)

    params = {
        "emb":    init(ks[0], (V, E)),
        "w_ih_f": init(ks[1], (4 * H, E)),
        "w_hh_f": init(ks[2], (4 * H, H)),
        "b_ih_f": init(ks[3], (4 * H,)),
        "b_hh_f": init(ks[4], (4 * H,)),
        "w_ih_b": init(ks[5], (4 * H, E)),
        "w_hh_b": init(ks[6], (4 * H, H)),
        "b_ih_b": init(ks[7], (4 * H,)),
        "b_hh_b": init(ks[8], (4 * H,)),
        "w_pred": init(ks[9], (TAGS, 2 * H)),
        "b_pred": init(ks[10], (TAGS,)),
    }

    # Deterministic "sentences": already converted to ids (<pad>=0, <unk>=1, words>=2),
    # with variable lengths to exercise the packed-sequence masking.
    lengths = jnp.array([T, 5], dtype=jnp.int32)
    raw_ids = jax.random.randint(ks[11], (B, T), 2, V, dtype=jnp.int32)
    pos = jnp.arange(T)[None, :]
    word_ids = jnp.where(pos < lengths[:, None], raw_ids, 0)   # pad index 0

    with jax.default_matmul_precision("highest"):              # true-f32 reference matmuls
        ref = ner_forward_ref(word_ids, lengths, params)

    # Exactness path: f32 MXU operands, exact reciprocal in sigmoid.
    out_f32 = jax.block_until_ready(
        ner_forward(word_ids, lengths, params, compute_dtype=jnp.float32))
    assert out_f32.shape == (B, T, TAGS), out_f32.shape
    np.testing.assert_allclose(np.asarray(out_f32), np.asarray(ref), rtol=1e-3, atol=1e-4)

    # Performance path: bf16 MXU operands / bf16 scratch / bf16 output, f32 gate math,
    # EUP-approx reciprocal in sigmoid. (bf16 is the right choice on v5e/v6e/v7x alike.)
    out_bf16 = jax.block_until_ready(
        ner_forward(word_ids, lengths, params, compute_dtype=jnp.bfloat16))
    assert out_bf16.shape == (B, T, TAGS), out_bf16.shape
    np.testing.assert_allclose(np.asarray(out_bf16.astype(jnp.float32)), np.asarray(ref),
                               rtol=5e-2, atol=2e-2)

    print("KERNEL_OK")
</pallas_src>

<mosaic_0001>
module attributes {stable_mosaic.version = 11 : i64} {
  func.func @_ner_kernel(%arg0: memref<64x16xf32, #tpu.memory_space<vmem>>, %arg1: memref<8x1xi32, #tpu.memory_space<vmem>>, %arg2: memref<16x256xf32, #tpu.memory_space<vmem>>, %arg3: memref<32x128xf32, #tpu.memory_space<vmem>>, %arg4: memref<32x128xf32, #tpu.memory_space<vmem>>, %arg5: memref<1x256xf32, #tpu.memory_space<vmem>>, %arg6: memref<32x128xf32, #tpu.memory_space<vmem>>, %arg7: memref<32x128xf32, #tpu.memory_space<vmem>>, %arg8: memref<1x128xf32, #tpu.memory_space<vmem>>, %arg9: memref<64x128xf32, #tpu.memory_space<vmem>>, %arg10: memref<64x32xf32, #tpu.memory_space<vmem>>, %arg11: memref<64x32xf32, #tpu.memory_space<vmem>>) attributes {dimension_semantics = [], scalar_prefetch = 0 : i64, scratch_operands = 2 : i64, tpu.core_type = #tpu.core_type<tc>} {
    %c0 = arith.constant 0 : index
    %c0_0 = arith.constant 0 : index
    %0 = vector.load %arg0[%c0, %c0_0] : memref<64x16xf32, #tpu.memory_space<vmem>>, vector<64x16xf32>
    %c0_1 = arith.constant 0 : index
    %c0_2 = arith.constant 0 : index
    %1 = vector.load %arg2[%c0_1, %c0_2] : memref<16x256xf32, #tpu.memory_space<vmem>>, vector<16x256xf32>
    %cst = arith.constant dense<0.000000e+00> : vector<64x256xf32>
    %2 = tpu.matmul %0, %1, %cst {dimension_numbers = #tpu.dot_dimension_numbers<[1], [0], [0], [1], [0, 0, 1, 1], [], []>} : vector<64x16xf32>, vector<16x256xf32>, vector<64x256xf32> -> vector<64x256xf32>
    %c0_3 = arith.constant 0 : index
    %c0_4 = arith.constant 0 : index
    %3 = vector.load %arg5[%c0_3, %c0_4] : memref<1x256xf32, #tpu.memory_space<vmem>>, vector<1x256xf32>
    %4 = vector.broadcast %3 : vector<1x256xf32> to vector<64x256xf32>
    %5 = arith.addf %2, %4 : vector<64x256xf32>
    %c0_5 = arith.constant 0 : index
    %c0_6 = arith.constant 0 : index
    %6 = vector.load %arg1[%c0_5, %c0_6] : memref<8x1xi32, #tpu.memory_space<vmem>>, vector<8x1xi32>
    %c0_7 = arith.constant 0 : index
    %c0_8 = arith.constant 0 : index
    %7 = vector.load %arg3[%c0_7, %c0_8] : memref<32x128xf32, #tpu.memory_space<vmem>>, vector<32x128xf32>
    %c0_9 = arith.constant 0 : index
    %c0_10 = arith.constant 0 : index
    %8 = vector.load %arg4[%c0_9, %c0_10] : memref<32x128xf32, #tpu.memory_space<vmem>>, vector<32x128xf32>
    %cst_11 = arith.constant 0.000000e+00 : f32
    %9 = vector.broadcast %cst_11 : f32 to vector<8x32xf32>
    %10 = vector.extract_strided_slice %5 {offsets = [0, 0], sizes = [8, 128], strides = [1, 1]} : vector<64x256xf32> to vector<8x128xf32>
    %cst_12 = arith.constant dense<0.000000e+00> : vector<8x128xf32>
    %11 = tpu.matmul %9, %7, %cst_12 {dimension_numbers = #tpu.dot_dimension_numbers<[1], [0], [0], [1], [0, 0, 1, 1], [], []>} : vector<8x32xf32>, vector<32x128xf32>, vector<8x128xf32> -> vector<8x128xf32>
    %12 = arith.addf %11, %10 : vector<8x128xf32>
    %13 = vector.extract_strided_slice %12 {offsets = [0, 0], sizes = [8, 96], strides = [1, 1]} : vector<8x128xf32> to vector<8x96xf32>
    %cst_13 = arith.constant 0.000000e+00 : f32
    %14 = vector.broadcast %cst_13 : f32 to vector<8x96xf32>
    %15 = arith.subf %14, %13 : vector<8x96xf32>
    %16 = math.exp %15 : vector<8x96xf32>
    %cst_14 = arith.constant 1.000000e+00 : f32
    %17 = vector.broadcast %cst_14 : f32 to vector<8x96xf32>
    %18 = arith.addf %17, %16 : vector<8x96xf32>
    %19 = tpu.reciprocal %18 : vector<8x96xf32> -> vector<8x96xf32>
    %20 = vector.extract_strided_slice %12 {offsets = [0, 96], sizes = [8, 32], strides = [1, 1]} : vector<8x128xf32> to vector<8x32xf32>
    %21 = math.tanh %20 : vector<8x32xf32>
    %22 = vector.extract_strided_slice %19 {offsets = [0, 0], sizes = [8, 32], strides = [1, 1]} : vector<8x96xf32> to vector<8x32xf32>
    %23 = vector.extract_strided_slice %19 {offsets = [0, 32], sizes = [8, 32], strides = [1, 1]} : vector<8x96xf32> to vector<8x32xf32>
    %24 = vector.extract_strided_slice %19 {offsets = [0, 64], sizes = [8, 32], strides = [1, 1]} : vector<8x96xf32> to vector<8x32xf32>
    %25 = arith.mulf %23, %9 : vector<8x32xf32>
    %26 = arith.mulf %22, %21 : vector<8x32xf32>
    %27 = arith.addf %25, %26 : vector<8x32xf32>
    %28 = math.tanh %27 : vector<8x32xf32>
    %29 = arith.mulf %24, %28 : vector<8x32xf32>
    %30 = vector.extract_strided_slice %5 {offsets = [56, 128], sizes = [8, 128], strides = [1, 1]} : vector<64x256xf32> to vector<8x128xf32>
    %cst_15 = arith.constant dense<0.000000e+00> : vector<8x128xf32>
    %31 = tpu.matmul %9, %8, %cst_15 {dimension_numbers = #tpu.dot_dimension_numbers<[1], [0], [0], [1], [0, 0, 1, 1], [], []>} : vector<8x32xf32>, vector<32x128xf32>, vector<8x128xf32> -> vector<8x128xf32>
    %32 = arith.addf %31, %30 : vector<8x128xf32>
    %33 = vector.extract_strided_slice %32 {offsets = [0, 0], sizes = [8, 96], strides = [1, 1]} : vector<8x128xf32> to vector<8x96xf32>
    %cst_16 = arith.constant 0.000000e+00 : f32
    %34 = vector.broadcast %cst_16 : f32 to vector<8x96xf32>
    %35 = arith.subf %34, %33 : vector<8x96xf32>
    %36 = math.exp %35 : vector<8x96xf32>
    %cst_17 = arith.constant 1.000000e+00 : f32
    %37 = vector.broadcast %cst_17 : f32 to vector<8x96xf32>
    %38 = arith.addf %37, %36 : vector<8x96xf32>
    %39 = tpu.reciprocal %38 : vector<8x96xf32> -> vector<8x96xf32>
    %40 = vector.extract_strided_slice %32 {offsets = [0, 96], sizes = [8, 32], strides = [1, 1]} : vector<8x128xf32> to vector<8x32xf32>
    %41 = math.tanh %40 : vector<8x32xf32>
    %42 = vector.extract_strided_slice %39 {offsets = [0, 0], sizes = [8, 32], strides = [1, 1]} : vector<8x96xf32> to vector<8x32xf32>
    %43 = vector.extract_strided_slice %39 {offsets = [0, 32], sizes = [8, 32], strides = [1, 1]} : vector<8x96xf32> to vector<8x32xf32>
    %44 = vector.extract_strided_slice %39 {offsets = [0, 64], sizes = [8, 32], strides = [1, 1]} : vector<8x96xf32> to vector<8x32xf32>
    %45 = arith.mulf %43, %9 : vector<8x32xf32>
    %46 = arith.mulf %42, %41 : vector<8x32xf32>
    %47 = arith.addf %45, %46 : vector<8x32xf32>
    %48 = math.tanh %47 : vector<8x32xf32>
    %49 = arith.mulf %44, %48 : vector<8x32xf32>
    %c0_i32 = arith.constant 0 : i32
    %50 = vector.broadcast %c0_i32 : i32 to vector<8x1xi32>
    %51 = arith.cmpi sgt, %6, %50 : vector<8x1xi32>
    %c7_i32 = arith.constant 7 : i32
    %52 = vector.broadcast %c7_i32 : i32 to vector<8x1xi32>
    %53 = arith.cmpi sgt, %6, %52 : vector<8x1xi32>
    %54 = vector.shape_cast %51 : vector<8x1xi1> to vector<8x1xi1>
    %55 = vector.broadcast %54 : vector<8x1xi1> to vector<8x32xi1>
    %56 = arith.select %55, %29, %9 : vector<8x32xi1>, vector<8x32xf32>
    %57 = vector.shape_cast %51 : vector<8x1xi1> to vector<8x1xi1>
    %58 = vector.broadcast %57 : vector<8x1xi1> to vector<8x32xi1>
    %59 = arith.select %58, %27, %9 : vector<8x32xi1>, vector<8x32xf32>
    %60 = vector.shape_cast %53 : vector<8x1xi1> to vector<8x1xi1>
    %61 = vector.broadcast %60 : vector<8x1xi1> to vector<8x32xi1>
    %62 = arith.select %61, %49, %9 : vector<8x32xi1>, vector<8x32xf32>
    %63 = vector.shape_cast %53 : vector<8x1xi1> to vector<8x1xi1>
    %64 = vector.broadcast %63 : vector<8x1xi1> to vector<8x32xi1>
    %65 = arith.select %64, %47, %9 : vector<8x32xi1>, vector<8x32xf32>
    %cst_18 = arith.constant 0.000000e+00 : f32
    %66 = vector.shape_cast %51 : vector<8x1xi1> to vector<8x1xi1>
    %67 = vector.broadcast %66 : vector<8x1xi1> to vector<8x32xi1>
    %68 = vector.broadcast %cst_18 : f32 to vector<8x32xf32>
    %69 = arith.select %67, %29, %68 : vector<8x32xi1>, vector<8x32xf32>
    %c0_19 = arith.constant 0 : index
    %c0_20 = arith.constant 0 : index
    %70 = vector.load %arg10[%c0_19, %c0_20] : memref<64x32xf32, #tpu.memory_space<vmem>>, vector<8x32xf32>
    tpu.vector_store %arg10[%c0_19, %c0_20], %69 {strides = array<i32>} : memref<64x32xf32, #tpu.memory_space<vmem>>, vector<8x32xf32>,
    %cst_21 = arith.constant 0.000000e+00 : f32
    %71 = vector.shape_cast %53 : vector<8x1xi1> to vector<8x1xi1>
    %72 = vector.broadcast %71 : vector<8x1xi1> to vector<8x32xi1>
    %73 = vector.broadcast %cst_21 : f32 to vector<8x32xf32>
    %74 = arith.select %72, %49, %73 : vector<8x32xi1>, vector<8x32xf32>
    %c56 = arith.constant 56 : index
    %c0_22 = arith.constant 0 : index
    %75 = vector.load %arg11[%c56, %c0_22] : memref<64x32xf32, #tpu.memory_space<vmem>>, vector<8x32xf32>
    tpu.vector_store %arg11[%c56, %c0_22], %74 {strides = array<i32>} : memref<64x32xf32, #tpu.memory_space<vmem>>, vector<8x32xf32>,
    %76 = vector.extract_strided_slice %5 {offsets = [8, 0], sizes = [8, 128], strides = [1, 1]} : vector<64x256xf32> to vector<8x128xf32>
    %cst_23 = arith.constant dense<0.000000e+00> : vector<8x128xf32>
    %77 = tpu.matmul %56, %7, %cst_23 {dimension_numbers = #tpu.dot_dimension_numbers<[1], [0], [0], [1], [0, 0, 1, 1], [], []>} : vector<8x32xf32>, vector<32x128xf32>, vector<8x128xf32> -> vector<8x128xf32>
    %78 = arith.addf %77, %76 : vector<8x128xf32>
    %79 = vector.extract_strided_slice %78 {offsets = [0, 0], sizes = [8, 96], strides = [1, 1]} : vector<8x128xf32> to vector<8x96xf32>
    %cst_24 = arith.constant 0.000000e+00 : f32
    %80 = vector.broadcast %cst_24 : f32 to vector<8x96xf32>
    %81 = arith.subf %80, %79 : vector<8x96xf32>
    %82 = math.exp %81 : vector<8x96xf32>
    %cst_25 = arith.constant 1.000000e+00 : f32
    %83 = vector.broadcast %cst_25 : f32 to vector<8x96xf32>
    %84 = arith.addf %83, %82 : vector<8x96xf32>
    %85 = tpu.reciprocal %84 : vector<8x96xf32> -> vector<8x96xf32>
    %86 = vector.extract_strided_slice %78 {offsets = [0, 96], sizes = [8, 32], strides = [1, 1]} : vector<8x128xf32> to vector<8x32xf32>
    %87 = math.tanh %86 : vector<8x32xf32>
    %88 = vector.extract_strided_slice %85 {offsets = [0, 0], sizes = [8, 32], strides = [1, 1]} : vector<8x96xf32> to vector<8x32xf32>
    %89 = vector.extract_strided_slice %85 {offsets = [0, 32], sizes = [8, 32], strides = [1, 1]} : vector<8x96xf32> to vector<8x32xf32>
    %90 = vector.extract_strided_slice %85 {offsets = [0, 64], sizes = [8, 32], strides = [1, 1]} : vector<8x96xf32> to vector<8x32xf32>
    %91 = arith.mulf %89, %59 : vector<8x32xf32>
    %92 = arith.mulf %88, %87 : vector<8x32xf32>
    %93 = arith.addf %91, %92 : vector<8x32xf32>
    %94 = math.tanh %93 : vector<8x32xf32>
    %95 = arith.mulf %90, %94 : vector<8x32xf32>
    %96 = vector.extract_strided_slice %5 {offsets = [48, 128], sizes = [8, 128], strides = [1, 1]} : vector<64x256xf32> to vector<8x128xf32>
    %cst_26 = arith.constant dense<0.000000e+00> : vector<8x128xf32>
    %97 = tpu.matmul %62, %8, %cst_26 {dimension_numbers = #tpu.dot_dimension_numbers<[1], [0], [0], [1], [0, 0, 1, 1], [], []>} : vector<8x32xf32>, vector<32x128xf32>, vector<8x128xf32> -> vector<8x128xf32>
    %98 = arith.addf %97, %96 : vector<8x128xf32>
    %99 = vector.extract_strided_slice %98 {offsets = [0, 0], sizes = [8, 96], strides = [1, 1]} : vector<8x128xf32> to vector<8x96xf32>
    %cst_27 = arith.constant 0.000000e+00 : f32
    %100 = vector.broadcast %cst_27 : f32 to vector<8x96xf32>
    %101 = arith.subf %100, %99 : vector<8x96xf32>
    %102 = math.exp %101 : vector<8x96xf32>
    %cst_28 = arith.constant 1.000000e+00 : f32
    %103 = vector.broadcast %cst_28 : f32 to vector<8x96xf32>
    %104 = arith.addf %103, %102 : vector<8x96xf32>
    %105 = tpu.reciprocal %104 : vector<8x96xf32> -> vector<8x96xf32>
    %106 = vector.extract_strided_slice %98 {offsets = [0, 96], sizes = [8, 32], strides = [1, 1]} : vector<8x128xf32> to vector<8x32xf32>
    %107 = math.tanh %106 : vector<8x32xf32>
    %108 = vector.extract_strided_slice %105 {offsets = [0, 0], sizes = [8, 32], strides = [1, 1]} : vector<8x96xf32> to vector<8x32xf32>
    %109 = vector.extract_strided_slice %105 {offsets = [0, 32], sizes = [8, 32], strides = [1, 1]} : vector<8x96xf32> to vector<8x32xf32>
    %110 = vector.extract_strided_slice %105 {offsets = [0, 64], sizes = [8, 32], strides = [1, 1]} : vector<8x96xf32> to vector<8x32xf32>
    %111 = arith.mulf %109, %65 : vector<8x32xf32>
    %112 = arith.mulf %108, %107 : vector<8x32xf32>
    %113 = arith.addf %111, %112 : vector<8x32xf32>
    %114 = math.tanh %113 : vector<8x32xf32>
    %115 = arith.mulf %110, %114 : vector<8x32xf32>
    %c1_i32 = arith.constant 1 : i32
    %116 = vector.broadcast %c1_i32 : i32 to vector<8x1xi32>
    %117 = arith.cmpi sgt, %6, %116 : vector<8x1xi32>
    %c6_i32 = arith.constant 6 : i32
    %118 = vector.broadcast %c6_i32 : i32 to vector<8x1xi32>
    %119 = arith.cmpi sgt, %6, %118 : vector<8x1xi32>
    %120 = vector.shape_cast %117 : vector<8x1xi1> to vector<8x1xi1>
    %121 = vector.broadcast %120 : vector<8x1xi1> to vector<8x32xi1>
    %122 = arith.select %121, %95, %56 : vector<8x32xi1>, vector<8x32xf32>
    %123 = vector.shape_cast %117 : vector<8x1xi1> to vector<8x1xi1>
    %124 = vector.broadcast %123 : vector<8x1xi1> to vector<8x32xi1>
    %125 = arith.select %124, %93, %59 : vector<8x32xi1>, vector<8x32xf32>
    %126 = vector.shape_cast %119 : vector<8x1xi1> to vector<8x1xi1>
    %127 = vector.broadcast %126 : vector<8x1xi1> to vector<8x32xi1>
    %128 = arith.select %127, %115, %62 : vector<8x32xi1>, vector<8x32xf32>
    %129 = vector.shape_cast %119 : vector<8x1xi1> to vector<8x1xi1>
    %130 = vector.broadcast %129 : vector<8x1xi1> to vector<8x32xi1>
    %131 = arith.select %130, %113, %65 : vector<8x32xi1>, vector<8x32xf32>
    %cst_29 = arith.constant 0.000000e+00 : f32
    %132 = vector.shape_cast %117 : vector<8x1xi1> to vector<8x1xi1>
    %133 = vector.broadcast %132 : vector<8x1xi1> to vector<8x32xi1>
    %134 = vector.broadcast %cst_29 : f32 to vector<8x32xf32>
    %135 = arith.select %133, %95, %134 : vector<8x32xi1>, vector<8x32xf32>
    %c8 = arith.constant 8 : index
    %c0_30 = arith.constant 0 : index
    %136 = vector.load %arg10[%c8, %c0_30] : memref<64x32xf32, #tpu.memory_space<vmem>>, vector<8x32xf32>
    tpu.vector_store %arg10[%c8, %c0_30], %135 {strides = array<i32>} : memref<64x32xf32, #tpu.memory_space<vmem>>, vector<8x32xf32>,
    %cst_31 = arith.constant 0.000000e+00 : f32
    %137 = vector.shape_cast %119 : vector<8x1xi1> to vector<8x1xi1>
    %138 = vector.broadcast %137 : vector<8x1xi1> to vector<8x32xi1>
    %139 = vector.broadcast %cst_31 : f32 to vector<8x32xf32>
    %140 = arith.select %138, %115, %139 : vector<8x32xi1>, vector<8x32xf32>
    %c48 = arith.constant 48 : index
    %c0_32 = arith.constant 0 : index
    %141 = vector.load %arg11[%c48, %c0_32] : memref<64x32xf32, #tpu.memory_space<vmem>>, vector<8x32xf32>
    tpu.vector_store %arg11[%c48, %c0_32], %140 {strides = array<i32>} : memref<64x32xf32, #tpu.memory_space<vmem>>, vector<8x32xf32>,
    %142 = vector.extract_strided_slice %5 {offsets = [16, 0], sizes = [8, 128], strides = [1, 1]} : vector<64x256xf32> to vector<8x128xf32>
    %cst_33 = arith.constant dense<0.000000e+00> : vector<8x128xf32>
    %143 = tpu.matmul %122, %7, %cst_33 {dimension_numbers = #tpu.dot_dimension_numbers<[1], [0], [0], [1], [0, 0, 1, 1], [], []>} : vector<8x32xf32>, vector<32x128xf32>, vector<8x128xf32> -> vector<8x128xf32>
    %144 = arith.addf %143, %142 : vector<8x128xf32>
    %145 = vector.extract_strided_slice %144 {offsets = [0, 0], sizes = [8, 96], strides = [1, 1]} : vector<8x128xf32> to vector<8x96xf32>
    %cst_34 = arith.constant 0.000000e+00 : f32
    %146 = vector.broadcast %cst_34 : f32 to vector<8x96xf32>
    %147 = arith.subf %146, %145 : vector<8x96xf32>
    %148 = math.exp %147 : vector<8x96xf32>
    %cst_35 = arith.constant 1.000000e+00 : f32
    %149 = vector.broadcast %cst_35 : f32 to vector<8x96xf32>
    %150 = arith.addf %149, %148 : vector<8x96xf32>
    %151 = tpu.reciprocal %150 : vector<8x96xf32> -> vector<8x96xf32>
    %152 = vector.extract_strided_slice %144 {offsets = [0, 96], sizes = [8, 32], strides = [1, 1]} : vector<8x128xf32> to vector<8x32xf32>
    %153 = math.tanh %152 : vector<8x32xf32>
    %154 = vector.extract_strided_slice %151 {offsets = [0, 0], sizes = [8, 32], strides = [1, 1]} : vector<8x96xf32> to vector<8x32xf32>
    %155 = vector.extract_strided_slice %151 {offsets = [0, 32], sizes = [8, 32], strides = [1, 1]} : vector<8x96xf32> to vector<8x32xf32>
    %156 = vector.extract_strided_slice %151 {offsets = [0, 64], sizes = [8, 32], strides = [1, 1]} : vector<8x96xf32> to vector<8x32xf32>
    %157 = arith.mulf %155, %125 : vector<8x32xf32>
    %158 = arith.mulf %154, %153 : vector<8x32xf32>
    %159 = arith.addf %157, %158 : vector<8x32xf32>
    %160 = math.tanh %159 : vector<8x32xf32>
    %161 = arith.mulf %156, %160 : vector<8x32xf32>
    %162 = vector.extract_strided_slice %5 {offsets = [40, 128], sizes = [8, 128], strides = [1, 1]} : vector<64x256xf32> to vector<8x128xf32>
    %cst_36 = arith.constant dense<0.000000e+00> : vector<8x128xf32>
    %163 = tpu.matmul %128, %8, %cst_36 {dimension_numbers = #tpu.dot_dimension_numbers<[1], [0], [0], [1], [0, 0, 1, 1], [], []>} : vector<8x32xf32>, vector<32x128xf32>, vector<8x128xf32> -> vector<8x128xf32>
    %164 = arith.addf %163, %162 : vector<8x128xf32>
    %165 = vector.extract_strided_slice %164 {offsets = [0, 0], sizes = [8, 96], strides = [1, 1]} : vector<8x128xf32> to vector<8x96xf32>
    %cst_37 = arith.constant 0.000000e+00 : f32
    %166 = vector.broadcast %cst_37 : f32 to vector<8x96xf32>
    %167 = arith.subf %166, %165 : vector<8x96xf32>
    %168 = math.exp %167 : vector<8x96xf32>
    %cst_38 = arith.constant 1.000000e+00 : f32
    %169 = vector.broadcast %cst_38 : f32 to vector<8x96xf32>
    %170 = arith.addf %169, %168 : vector<8x96xf32>
    %171 = tpu.reciprocal %170 : vector<8x96xf32> -> vector<8x96xf32>
    %172 = vector.extract_strided_slice %164 {offsets = [0, 96], sizes = [8, 32], strides = [1, 1]} : vector<8x128xf32> to vector<8x32xf32>
    %173 = math.tanh %172 : vector<8x32xf32>
    %174 = vector.extract_strided_slice %171 {offsets = [0, 0], sizes = [8, 32], strides = [1, 1]} : vector<8x96xf32> to vector<8x32xf32>
    %175 = vector.extract_strided_slice %171 {offsets = [0, 32], sizes = [8, 32], strides = [1, 1]} : vector<8x96xf32> to vector<8x32xf32>
    %176 = vector.extract_strided_slice %171 {offsets = [0, 64], sizes = [8, 32], strides = [1, 1]} : vector<8x96xf32> to vector<8x32xf32>
    %177 = arith.mulf %175, %131 : vector<8x32xf32>
    %178 = arith.mulf %174, %173 : vector<8x32xf32>
    %179 = arith.addf %177, %178 : vector<8x32xf32>
    %180 = math.tanh %179 : vector<8x32xf32>
    %181 = arith.mulf %176, %180 : vector<8x32xf32>
    %c2_i32 = arith.constant 2 : i32
    %182 = vector.broadcast %c2_i32 : i32 to vector<8x1xi32>
    %183 = arith.cmpi sgt, %6, %182 : vector<8x1xi32>
    %c5_i32 = arith.constant 5 : i32
    %184 = vector.broadcast %c5_i32 : i32 to vector<8x1xi32>
    %185 = arith.cmpi sgt, %6, %184 : vector<8x1xi32>
    %186 = vector.shape_cast %183 : vector<8x1xi1> to vector<8x1xi1>
    %187 = vector.broadcast %186 : vector<8x1xi1> to vector<8x32xi1>
    %188 = arith.select %187, %161, %122 : vector<8x32xi1>, vector<8x32xf32>
    %189 = vector.shape_cast %183 : vector<8x1xi1> to vector<8x1xi1>
    %190 = vector.broadcast %189 : vector<8x1xi1> to vector<8x32xi1>
    %191 = arith.select %190, %159, %125 : vector<8x32xi1>, vector<8x32xf32>
    %192 = vector.shape_cast %185 : vector<8x1xi1> to vector<8x1xi1>
    %193 = vector.broadcast %192 : vector<8x1xi1> to vector<8x32xi1>
    %194 = arith.select %193, %181, %128 : vector<8x32xi1>, vector<8x32xf32>
    %195 = vector.shape_cast %185 : vector<8x1xi1> to vector<8x1xi1>
    %196 = vector.broadcast %195 : vector<8x1xi1> to vector<8x32xi1>
    %197 = arith.select %196, %179, %131 : vector<8x32xi1>, vector<8x32xf32>
    %cst_39 = arith.constant 0.000000e+00 : f32
    %198 = vector.shape_cast %183 : vector<8x1xi1> to vector<8x1xi1>
    %199 = vector.broadcast %198 : vector<8x1xi1> to vector<8x32xi1>
    %200 = vector.broadcast %cst_39 : f32 to vector<8x32xf32>
    %201 = arith.select %199, %161, %200 : vector<8x32xi1>, vector<8x32xf32>
    %c16 = arith.constant 16 : index
    %c0_40 = arith.constant 0 : index
    %202 = vector.load %arg10[%c16, %c0_40] : memref<64x32xf32, #tpu.memory_space<vmem>>, vector<8x32xf32>
    tpu.vector_store %arg10[%c16, %c0_40], %201 {strides = array<i32>} : memref<64x32xf32, #tpu.memory_space<vmem>>, vector<8x32xf32>,
    %cst_41 = arith.constant 0.000000e+00 : f32
    %203 = vector.shape_cast %185 : vector<8x1xi1> to vector<8x1xi1>
    %204 = vector.broadcast %203 : vector<8x1xi1> to vector<8x32xi1>
    %205 = vector.broadcast %cst_41 : f32 to vector<8x32xf32>
    %206 = arith.select %204, %181, %205 : vector<8x32xi1>, vector<8x32xf32>
    %c40 = arith.constant 40 : index
    %c0_42 = arith.constant 0 : index
    %207 = vector.load %arg11[%c40, %c0_42] : memref<64x32xf32, #tpu.memory_space<vmem>>, vector<8x32xf32>
    tpu.vector_store %arg11[%c40, %c0_42], %206 {strides = array<i32>} : memref<64x32xf32, #tpu.memory_space<vmem>>, vector<8x32xf32>,
    %208 = vector.extract_strided_slice %5 {offsets = [24, 0], sizes = [8, 128], strides = [1, 1]} : vector<64x256xf32> to vector<8x128xf32>
    %cst_43 = arith.constant dense<0.000000e+00> : vector<8x128xf32>
    %209 = tpu.matmul %188, %7, %cst_43 {dimension_numbers = #tpu.dot_dimension_numbers<[1], [0], [0], [1], [0, 0, 1, 1], [], []>} : vector<8x32xf32>, vector<32x128xf32>, vector<8x128xf32> -> vector<8x128xf32>
    %210 = arith.addf %209, %208 : vector<8x128xf32>
    %211 = vector.extract_strided_slice %210 {offsets = [0, 0], sizes = [8, 96], strides = [1, 1]} : vector<8x128xf32> to vector<8x96xf32>
    %cst_44 = arith.constant 0.000000e+00 : f32
    %212 = vector.broadcast %cst_44 : f32 to vector<8x96xf32>
    %213 = arith.subf %212, %211 : vector<8x96xf32>
    %214 = math.exp %213 : vector<8x96xf32>
    %cst_45 = arith.constant 1.000000e+00 : f32
    %215 = vector.broadcast %cst_45 : f32 to vector<8x96xf32>
    %216 = arith.addf %215, %214 : vector<8x96xf32>
    %217 = tpu.reciprocal %216 : vector<8x96xf32> -> vector<8x96xf32>
    %218 = vector.extract_strided_slice %210 {offsets = [0, 96], sizes = [8, 32], strides = [1, 1]} : vector<8x128xf32> to vector<8x32xf32>
    %219 = math.tanh %218 : vector<8x32xf32>
    %220 = vector.extract_strided_slice %217 {offsets = [0, 0], sizes = [8, 32], strides = [1, 1]} : vector<8x96xf32> to vector<8x32xf32>
    %221 = vector.extract_strided_slice %217 {offsets = [0, 32], sizes = [8, 32], strides = [1, 1]} : vector<8x96xf32> to vector<8x32xf32>
    %222 = vector.extract_strided_slice %217 {offsets = [0, 64], sizes = [8, 32], strides = [1, 1]} : vector<8x96xf32> to vector<8x32xf32>
    %223 = arith.mulf %221, %191 : vector<8x32xf32>
    %224 = arith.mulf %220, %219 : vector<8x32xf32>
    %225 = arith.addf %223, %224 : vector<8x32xf32>
    %226 = math.tanh %225 : vector<8x32xf32>
    %227 = arith.mulf %222, %226 : vector<8x32xf32>
    %228 = vector.extract_strided_slice %5 {offsets = [32, 128], sizes = [8, 128], strides = [1, 1]} : vector<64x256xf32> to vector<8x128xf32>
    %cst_46 = arith.constant dense<0.000000e+00> : vector<8x128xf32>
    %229 = tpu.matmul %194, %8, %cst_46 {dimension_numbers = #tpu.dot_dimension_numbers<[1], [0], [0], [1], [0, 0, 1, 1], [], []>} : vector<8x32xf32>, vector<32x128xf32>, vector<8x128xf32> -> vector<8x128xf32>
    %230 = arith.addf %229, %228 : vector<8x128xf32>
    %231 = vector.extract_strided_slice %230 {offsets = [0, 0], sizes = [8, 96], strides = [1, 1]} : vector<8x128xf32> to vector<8x96xf32>
    %cst_47 = arith.constant 0.000000e+00 : f32
    %232 = vector.broadcast %cst_47 : f32 to vector<8x96xf32>
    %233 = arith.subf %232, %231 : vector<8x96xf32>
    %234 = math.exp %233 : vector<8x96xf32>
    %cst_48 = arith.constant 1.000000e+00 : f32
    %235 = vector.broadcast %cst_48 : f32 to vector<8x96xf32>
    %236 = arith.addf %235, %234 : vector<8x96xf32>
    %237 = tpu.reciprocal %236 : vector<8x96xf32> -> vector<8x96xf32>
    %238 = vector.extract_strided_slice %230 {offsets = [0, 96], sizes = [8, 32], strides = [1, 1]} : vector<8x128xf32> to vector<8x32xf32>
    %239 = math.tanh %238 : vector<8x32xf32>
    %240 = vector.extract_strided_slice %237 {offsets = [0, 0], sizes = [8, 32], strides = [1, 1]} : vector<8x96xf32> to vector<8x32xf32>
    %241 = vector.extract_strided_slice %237 {offsets = [0, 32], sizes = [8, 32], strides = [1, 1]} : vector<8x96xf32> to vector<8x32xf32>
    %242 = vector.extract_strided_slice %237 {offsets = [0, 64], sizes = [8, 32], strides = [1, 1]} : vector<8x96xf32> to vector<8x32xf32>
    %243 = arith.mulf %241, %197 : vector<8x32xf32>
    %244 = arith.mulf %240, %239 : vector<8x32xf32>
    %245 = arith.addf %243, %244 : vector<8x32xf32>
    %246 = math.tanh %245 : vector<8x32xf32>
    %247 = arith.mulf %242, %246 : vector<8x32xf32>
    %c3_i32 = arith.constant 3 : i32
    %248 = vector.broadcast %c3_i32 : i32 to vector<8x1xi32>
    %249 = arith.cmpi sgt, %6, %248 : vector<8x1xi32>
    %c4_i32 = arith.constant 4 : i32
    %250 = vector.broadcast %c4_i32 : i32 to vector<8x1xi32>
    %251 = arith.cmpi sgt, %6, %250 : vector<8x1xi32>
    %252 = vector.shape_cast %249 : vector<8x1xi1> to vector<8x1xi1>
    %253 = vector.broadcast %252 : vector<8x1xi1> to vector<8x32xi1>
    %254 = arith.select %253, %227, %188 : vector<8x32xi1>, vector<8x32xf32>
    %255 = vector.shape_cast %249 : vector<8x1xi1> to vector<8x1xi1>
    %256 = vector.broadcast %255 : vector<8x1xi1> to vector<8x32xi1>
    %257 = arith.select %256, %225, %191 : vector<8x32xi1>, vector<8x32xf32>
    %258 = vector.shape_cast %251 : vector<8x1xi1> to vector<8x1xi1>
    %259 = vector.broadcast %258 : vector<8x1xi1> to vector<8x32xi1>
    %260 = arith.select %259, %247, %194 : vector<8x32xi1>, vector<8x32xf32>
    %261 = vector.shape_cast %251 : vector<8x1xi1> to vector<8x1xi1>
    %262 = vector.broadcast %261 : vector<8x1xi1> to vector<8x32xi1>
    %263 = arith.select %262, %245, %197 : vector<8x32xi1>, vector<8x32xf32>
    %cst_49 = arith.constant 0.000000e+00 : f32
    %264 = vector.shape_cast %249 : vector<8x1xi1> to vector<8x1xi1>
    %265 = vector.broadcast %264 : vector<8x1xi1> to vector<8x32xi1>
    %266 = vector.broadcast %cst_49 : f32 to vector<8x32xf32>
    %267 = arith.select %265, %227, %266 : vector<8x32xi1>, vector<8x32xf32>
    %c24 = arith.constant 24 : index
    %c0_50 = arith.constant 0 : index
    %268 = vector.load %arg10[%c24, %c0_50] : memref<64x32xf32, #tpu.memory_space<vmem>>, vector<8x32xf32>
    tpu.vector_store %arg10[%c24, %c0_50], %267 {strides = array<i32>} : memref<64x32xf32, #tpu.memory_space<vmem>>, vector<8x32xf32>,
    %cst_51 = arith.constant 0.000000e+00 : f32
    %269 = vector.shape_cast %251 : vector<8x1xi1> to vector<8x1xi1>
    %270 = vector.broadcast %269 : vector<8x1xi1> to vector<8x32xi1>
    %271 = vector.broadcast %cst_51 : f32 to vector<8x32xf32>
    %272 = arith.select %270, %247, %271 : vector<8x32xi1>, vector<8x32xf32>
    %c32 = arith.constant 32 : index
    %c0_52 = arith.constant 0 : index
    %273 = vector.load %arg11[%c32, %c0_52] : memref<64x32xf32, #tpu.memory_space<vmem>>, vector<8x32xf32>
    tpu.vector_store %arg11[%c32, %c0_52], %272 {strides = array<i32>} : memref<64x32xf32, #tpu.memory_space<vmem>>, vector<8x32xf32>,
    %274 = vector.extract_strided_slice %5 {offsets = [32, 0], sizes = [8, 128], strides = [1, 1]} : vector<64x256xf32> to vector<8x128xf32>
    %cst_53 = arith.constant dense<0.000000e+00> : vector<8x128xf32>
    %275 = tpu.matmul %254, %7, %cst_53 {dimension_numbers = #tpu.dot_dimension_numbers<[1], [0], [0], [1], [0, 0, 1, 1], [], []>} : vector<8x32xf32>, vector<32x128xf32>, vector<8x128xf32> -> vector<8x128xf32>
    %276 = arith.addf %275, %274 : vector<8x128xf32>
    %277 = vector.extract_strided_slice %276 {offsets = [0, 0], sizes = [8, 96], strides = [1, 1]} : vector<8x128xf32> to vector<8x96xf32>
    %cst_54 = arith.constant 0.000000e+00 : f32
    %278 = vector.broadcast %cst_54 : f32 to vector<8x96xf32>
    %279 = arith.subf %278, %277 : vector<8x96xf32>
    %280 = math.exp %279 : vector<8x96xf32>
    %cst_55 = arith.constant 1.000000e+00 : f32
    %281 = vector.broadcast %cst_55 : f32 to vector<8x96xf32>
    %282 = arith.addf %281, %280 : vector<8x96xf32>
    %283 = tpu.reciprocal %282 : vector<8x96xf32> -> vector<8x96xf32>
    %284 = vector.extract_strided_slice %276 {offsets = [0, 96], sizes = [8, 32], strides = [1, 1]} : vector<8x128xf32> to vector<8x32xf32>
    %285 = math.tanh %284 : vector<8x32xf32>
    %286 = vector.extract_strided_slice %283 {offsets = [0, 0], sizes = [8, 32], strides = [1, 1]} : vector<8x96xf32> to vector<8x32xf32>
    %287 = vector.extract_strided_slice %283 {offsets = [0, 32], sizes = [8, 32], strides = [1, 1]} : vector<8x96xf32> to vector<8x32xf32>
    %288 = vector.extract_strided_slice %283 {offsets = [0, 64], sizes = [8, 32], strides = [1, 1]} : vector<8x96xf32> to vector<8x32xf32>
    %289 = arith.mulf %287, %257 : vector<8x32xf32>
    %290 = arith.mulf %286, %285 : vector<8x32xf32>
    %291 = arith.addf %289, %290 : vector<8x32xf32>
    %292 = math.tanh %291 : vector<8x32xf32>
    %293 = arith.mulf %288, %292 : vector<8x32xf32>
    %294 = vector.extract_strided_slice %5 {offsets = [24, 128], sizes = [8, 128], strides = [1, 1]} : vector<64x256xf32> to vector<8x128xf32>
    %cst_56 = arith.constant dense<0.000000e+00> : vector<8x128xf32>
    %295 = tpu.matmul %260, %8, %cst_56 {dimension_numbers = #tpu.dot_dimension_numbers<[1], [0], [0], [1], [0, 0, 1, 1], [], []>} : vector<8x32xf32>, vector<32x128xf32>, vector<8x128xf32> -> vector<8x128xf32>
    %296 = arith.addf %295, %294 : vector<8x128xf32>
    %297 = vector.extract_strided_slice %296 {offsets = [0, 0], sizes = [8, 96], strides = [1, 1]} : vector<8x128xf32> to vector<8x96xf32>
    %cst_57 = arith.constant 0.000000e+00 : f32
    %298 = vector.broadcast %cst_57 : f32 to vector<8x96xf32>
    %299 = arith.subf %298, %297 : vector<8x96xf32>
    %300 = math.exp %299 : vector<8x96xf32>
    %cst_58 = arith.constant 1.000000e+00 : f32
    %301 = vector.broadcast %cst_58 : f32 to vector<8x96xf32>
    %302 = arith.addf %301, %300 : vector<8x96xf32>
    %303 = tpu.reciprocal %302 : vector<8x96xf32> -> vector<8x96xf32>
    %304 = vector.extract_strided_slice %296 {offsets = [0, 96], sizes = [8, 32], strides = [1, 1]} : vector<8x128xf32> to vector<8x32xf32>
    %305 = math.tanh %304 : vector<8x32xf32>
    %306 = vector.extract_strided_slice %303 {offsets = [0, 0], sizes = [8, 32], strides = [1, 1]} : vector<8x96xf32> to vector<8x32xf32>
    %307 = vector.extract_strided_slice %303 {offsets = [0, 32], sizes = [8, 32], strides = [1, 1]} : vector<8x96xf32> to vector<8x32xf32>
    %308 = vector.extract_strided_slice %303 {offsets = [0, 64], sizes = [8, 32], strides = [1, 1]} : vector<8x96xf32> to vector<8x32xf32>
    %309 = arith.mulf %307, %263 : vector<8x32xf32>
    %310 = arith.mulf %306, %305 : vector<8x32xf32>
    %311 = arith.addf %309, %310 : vector<8x32xf32>
    %312 = math.tanh %311 : vector<8x32xf32>
    %313 = arith.mulf %308, %312 : vector<8x32xf32>
    %c4_i32_59 = arith.constant 4 : i32
    %314 = vector.broadcast %c4_i32_59 : i32 to vector<8x1xi32>
    %315 = arith.cmpi sgt, %6, %314 : vector<8x1xi32>
    %c3_i32_60 = arith.constant 3 : i32
    %316 = vector.broadcast %c3_i32_60 : i32 to vector<8x1xi32>
    %317 = arith.cmpi sgt, %6, %316 : vector<8x1xi32>
    %318 = vector.shape_cast %315 : vector<8x1xi1> to vector<8x1xi1>
    %319 = vector.broadcast %318 : vector<8x1xi1> to vector<8x32xi1>
    %320 = arith.select %319, %293, %254 : vector<8x32xi1>, vector<8x32xf32>
    %321 = vector.shape_cast %315 : vector<8x1xi1> to vector<8x1xi1>
    %322 = vector.broadcast %321 : vector<8x1xi1> to vector<8x32xi1>
    %323 = arith.select %322, %291, %257 : vector<8x32xi1>, vector<8x32xf32>
    %324 = vector.shape_cast %317 : vector<8x1xi1> to vector<8x1xi1>
    %325 = vector.broadcast %324 : vector<8x1xi1> to vector<8x32xi1>
    %326 = arith.select %325, %313, %260 : vector<8x32xi1>, vector<8x32xf32>
    %327 = vector.shape_cast %317 : vector<8x1xi1> to vector<8x1xi1>
    %328 = vector.broadcast %327 : vector<8x1xi1> to vector<8x32xi1>
    %329 = arith.select %328, %311, %263 : vector<8x32xi1>, vector<8x32xf32>
    %cst_61 = arith.constant 0.000000e+00 : f32
    %330 = vector.shape_cast %315 : vector<8x1xi1> to vector<8x1xi1>
    %331 = vector.broadcast %330 : vector<8x1xi1> to vector<8x32xi1>
    %332 = vector.broadcast %cst_61 : f32 to vector<8x32xf32>
    %333 = arith.select %331, %293, %332 : vector<8x32xi1>, vector<8x32xf32>
    %c32_62 = arith.constant 32 : index
    %c0_63 = arith.constant 0 : index
    %334 = vector.load %arg10[%c32_62, %c0_63] : memref<64x32xf32, #tpu.memory_space<vmem>>, vector<8x32xf32>
    tpu.vector_store %arg10[%c32_62, %c0_63], %333 {strides = array<i32>} : memref<64x32xf32, #tpu.memory_space<vmem>>, vector<8x32xf32>,
    %cst_64 = arith.constant 0.000000e+00 : f32
    %335 = vector.shape_cast %317 : vector<8x1xi1> to vector<8x1xi1>
    %336 = vector.broadcast %335 : vector<8x1xi1> to vector<8x32xi1>
    %337 = vector.broadcast %cst_64 : f32 to vector<8x32xf32>
    %338 = arith.select %336, %313, %337 : vector<8x32xi1>, vector<8x32xf32>
    %c24_65 = arith.constant 24 : index
    %c0_66 = arith.constant 0 : index
    %339 = vector.load %arg11[%c24_65, %c0_66] : memref<64x32xf32, #tpu.memory_space<vmem>>, vector<8x32xf32>
    tpu.vector_store %arg11[%c24_65, %c0_66], %338 {strides = array<i32>} : memref<64x32xf32, #tpu.memory_space<vmem>>, vector<8x32xf32>,
    %340 = vector.extract_strided_slice %5 {offsets = [40, 0], sizes = [8, 128], strides = [1, 1]} : vector<64x256xf32> to vector<8x128xf32>
    %cst_67 = arith.constant dense<0.000000e+00> : vector<8x128xf32>
    %341 = tpu.matmul %320, %7, %cst_67 {dimension_numbers = #tpu.dot_dimension_numbers<[1], [0], [0], [1], [0, 0, 1, 1], [], []>} : vector<8x32xf32>, vector<32x128xf32>, vector<8x128xf32> -> vector<8x128xf32>
    %342 = arith.addf %341, %340 : vector<8x128xf32>
    %343 = vector.extract_strided_slice %342 {offsets = [0, 0], sizes = [8, 96], strides = [1, 1]} : vector<8x128xf32> to vector<8x96xf32>
    %cst_68 = arith.constant 0.000000e+00 : f32
    %344 = vector.broadcast %cst_68 : f32 to vector<8x96xf32>
    %345 = arith.subf %344, %343 : vector<8x96xf32>
    %346 = math.exp %345 : vector<8x96xf32>
    %cst_69 = arith.constant 1.000000e+00 : f32
    %347 = vector.broadcast %cst_69 : f32 to vector<8x96xf32>
    %348 = arith.addf %347, %346 : vector<8x96xf32>
    %349 = tpu.reciprocal %348 : vector<8x96xf32> -> vector<8x96xf32>
    %350 = vector.extract_strided_slice %342 {offsets = [0, 96], sizes = [8, 32], strides = [1, 1]} : vector<8x128xf32> to vector<8x32xf32>
    %351 = math.tanh %350 : vector<8x32xf32>
    %352 = vector.extract_strided_slice %349 {offsets = [0, 0], sizes = [8, 32], strides = [1, 1]} : vector<8x96xf32> to vector<8x32xf32>
    %353 = vector.extract_strided_slice %349 {offsets = [0, 32], sizes = [8, 32], strides = [1, 1]} : vector<8x96xf32> to vector<8x32xf32>
    %354 = vector.extract_strided_slice %349 {offsets = [0, 64], sizes = [8, 32], strides = [1, 1]} : vector<8x96xf32> to vector<8x32xf32>
    %355 = arith.mulf %353, %323 : vector<8x32xf32>
    %356 = arith.mulf %352, %351 : vector<8x32xf32>
    %357 = arith.addf %355, %356 : vector<8x32xf32>
    %358 = math.tanh %357 : vector<8x32xf32>
    %359 = arith.mulf %354, %358 : vector<8x32xf32>
    %360 = vector.extract_strided_slice %5 {offsets = [16, 128], sizes = [8, 128], strides = [1, 1]} : vector<64x256xf32> to vector<8x128xf32>
    %cst_70 = arith.constant dense<0.000000e+00> : vector<8x128xf32>
    %361 = tpu.matmul %326, %8, %cst_70 {dimension_numbers = #tpu.dot_dimension_numbers<[1], [0], [0], [1], [0, 0, 1, 1], [], []>} : vector<8x32xf32>, vector<32x128xf32>, vector<8x128xf32> -> vector<8x128xf32>
    %362 = arith.addf %361, %360 : vector<8x128xf32>
    %363 = vector.extract_strided_slice %362 {offsets = [0, 0], sizes = [8, 96], strides = [1, 1]} : vector<8x128xf32> to vector<8x96xf32>
    %cst_71 = arith.constant 0.000000e+00 : f32
    %364 = vector.broadcast %cst_71 : f32 to vector<8x96xf32>
    %365 = arith.subf %364, %363 : vector<8x96xf32>
    %366 = math.exp %365 : vector<8x96xf32>
    %cst_72 = arith.constant 1.000000e+00 : f32
    %367 = vector.broadcast %cst_72 : f32 to vector<8x96xf32>
    %368 = arith.addf %367, %366 : vector<8x96xf32>
    %369 = tpu.reciprocal %368 : vector<8x96xf32> -> vector<8x96xf32>
    %370 = vector.extract_strided_slice %362 {offsets = [0, 96], sizes = [8, 32], strides = [1, 1]} : vector<8x128xf32> to vector<8x32xf32>
    %371 = math.tanh %370 : vector<8x32xf32>
    %372 = vector.extract_strided_slice %369 {offsets = [0, 0], sizes = [8, 32], strides = [1, 1]} : vector<8x96xf32> to vector<8x32xf32>
    %373 = vector.extract_strided_slice %369 {offsets = [0, 32], sizes = [8, 32], strides = [1, 1]} : vector<8x96xf32> to vector<8x32xf32>
    %374 = vector.extract_strided_slice %369 {offsets = [0, 64], sizes = [8, 32], strides = [1, 1]} : vector<8x96xf32> to vector<8x32xf32>
    %375 = arith.mulf %373, %329 : vector<8x32xf32>
    %376 = arith.mulf %372, %371 : vector<8x32xf32>
    %377 = arith.addf %375, %376 : vector<8x32xf32>
    %378 = math.tanh %377 : vector<8x32xf32>
    %379 = arith.mulf %374, %378 : vector<8x32xf32>
    %c5_i32_73 = arith.constant 5 : i32
    %380 = vector.broadcast %c5_i32_73 : i32 to vector<8x1xi32>
    %381 = arith.cmpi sgt, %6, %380 : vector<8x1xi32>
    %c2_i32_74 = arith.constant 2 : i32
    %382 = vector.broadcast %c2_i32_74 : i32 to vector<8x1xi32>
    %383 = arith.cmpi sgt, %6, %382 : vector<8x1xi32>
    %384 = vector.shape_cast %381 : vector<8x1xi1> to vector<8x1xi1>
    %385 = vector.broadcast %384 : vector<8x1xi1> to vector<8x32xi1>
    %386 = arith.select %385, %359, %320 : vector<8x32xi1>, vector<8x32xf32>
    %387 = vector.shape_cast %381 : vector<8x1xi1> to vector<8x1xi1>
    %388 = vector.broadcast %387 : vector<8x1xi1> to vector<8x32xi1>
    %389 = arith.select %388, %357, %323 : vector<8x32xi1>, vector<8x32xf32>
    %390 = vector.shape_cast %383 : vector<8x1xi1> to vector<8x1xi1>
    %391 = vector.broadcast %390 : vector<8x1xi1> to vector<8x32xi1>
    %392 = arith.select %391, %379, %326 : vector<8x32xi1>, vector<8x32xf32>
    %393 = vector.shape_cast %383 : vector<8x1xi1> to vector<8x1xi1>
    %394 = vector.broadcast %393 : vector<8x1xi1> to vector<8x32xi1>
    %395 = arith.select %394, %377, %329 : vector<8x32xi1>, vector<8x32xf32>
    %cst_75 = arith.constant 0.000000e+00 : f32
    %396 = vector.shape_cast %381 : vector<8x1xi1> to vector<8x1xi1>
    %397 = vector.broadcast %396 : vector<8x1xi1> to vector<8x32xi1>
    %398 = vector.broadcast %cst_75 : f32 to vector<8x32xf32>
    %399 = arith.select %397, %359, %398 : vector<8x32xi1>, vector<8x32xf32>
    %c40_76 = arith.constant 40 : index
    %c0_77 = arith.constant 0 : index
    %400 = vector.load %arg10[%c40_76, %c0_77] : memref<64x32xf32, #tpu.memory_space<vmem>>, vector<8x32xf32>
    tpu.vector_store %arg10[%c40_76, %c0_77], %399 {strides = array<i32>} : memref<64x32xf32, #tpu.memory_space<vmem>>, vector<8x32xf32>,
    %cst_78 = arith.constant 0.000000e+00 : f32
    %401 = vector.shape_cast %383 : vector<8x1xi1> to vector<8x1xi1>
    %402 = vector.broadcast %401 : vector<8x1xi1> to vector<8x32xi1>
    %403 = vector.broadcast %cst_78 : f32 to vector<8x32xf32>
    %404 = arith.select %402, %379, %403 : vector<8x32xi1>, vector<8x32xf32>
    %c16_79 = arith.constant 16 : index
    %c0_80 = arith.constant 0 : index
    %405 = vector.load %arg11[%c16_79, %c0_80] : memref<64x32xf32, #tpu.memory_space<vmem>>, vector<8x32xf32>
    tpu.vector_store %arg11[%c16_79, %c0_80], %404 {strides = array<i32>} : memref<64x32xf32, #tpu.memory_space<vmem>>, vector<8x32xf32>,
    %406 = vector.extract_strided_slice %5 {offsets = [48, 0], sizes = [8, 128], strides = [1, 1]} : vector<64x256xf32> to vector<8x128xf32>
    %cst_81 = arith.constant dense<0.000000e+00> : vector<8x128xf32>
    %407 = tpu.matmul %386, %7, %cst_81 {dimension_numbers = #tpu.dot_dimension_numbers<[1], [0], [0], [1], [0, 0, 1, 1], [], []>} : vector<8x32xf32>, vector<32x128xf32>, vector<8x128xf32> -> vector<8x128xf32>
    %408 = arith.addf %407, %406 : vector<8x128xf32>
    %409 = vector.extract_strided_slice %408 {offsets = [0, 0], sizes = [8, 96], strides = [1, 1]} : vector<8x128xf32> to vector<8x96xf32>
    %cst_82 = arith.constant 0.000000e+00 : f32
    %410 = vector.broadcast %cst_82 : f32 to vector<8x96xf32>
    %411 = arith.subf %410, %409 : vector<8x96xf32>
    %412 = math.exp %411 : vector<8x96xf32>
    %cst_83 = arith.constant 1.000000e+00 : f32
    %413 = vector.broadcast %cst_83 : f32 to vector<8x96xf32>
    %414 = arith.addf %413, %412 : vector<8x96xf32>
    %415 = tpu.reciprocal %414 : vector<8x96xf32> -> vector<8x96xf32>
    %416 = vector.extract_strided_slice %408 {offsets = [0, 96], sizes = [8, 32], strides = [1, 1]} : vector<8x128xf32> to vector<8x32xf32>
    %417 = math.tanh %416 : vector<8x32xf32>
    %418 = vector.extract_strided_slice %415 {offsets = [0, 0], sizes = [8, 32], strides = [1, 1]} : vector<8x96xf32> to vector<8x32xf32>
    %419 = vector.extract_strided_slice %415 {offsets = [0, 32], sizes = [8, 32], strides = [1, 1]} : vector<8x96xf32> to vector<8x32xf32>
    %420 = vector.extract_strided_slice %415 {offsets = [0, 64], sizes = [8, 32], strides = [1, 1]} : vector<8x96xf32> to vector<8x32xf32>
    %421 = arith.mulf %419, %389 : vector<8x32xf32>
    %422 = arith.mulf %418, %417 : vector<8x32xf32>
    %423 = arith.addf %421, %422 : vector<8x32xf32>
    %424 = math.tanh %423 : vector<8x32xf32>
    %425 = arith.mulf %420, %424 : vector<8x32xf32>
    %426 = vector.extract_strided_slice %5 {offsets = [8, 128], sizes = [8, 128], strides = [1, 1]} : vector<64x256xf32> to vector<8x128xf32>
    %cst_84 = arith.constant dense<0.000000e+00> : vector<8x128xf32>
    %427 = tpu.matmul %392, %8, %cst_84 {dimension_numbers = #tpu.dot_dimension_numbers<[1], [0], [0], [1], [0, 0, 1, 1], [], []>} : vector<8x32xf32>, vector<32x128xf32>, vector<8x128xf32> -> vector<8x128xf32>
    %428 = arith.addf %427, %426 : vector<8x128xf32>
    %429 = vector.extract_strided_slice %428 {offsets = [0, 0], sizes = [8, 96], strides = [1, 1]} : vector<8x128xf32> to vector<8x96xf32>
    %cst_85 = arith.constant 0.000000e+00 : f32
    %430 = vector.broadcast %cst_85 : f32 to vector<8x96xf32>
    %431 = arith.subf %430, %429 : vector<8x96xf32>
    %432 = math.exp %431 : vector<8x96xf32>
    %cst_86 = arith.constant 1.000000e+00 : f32
    %433 = vector.broadcast %cst_86 : f32 to vector<8x96xf32>
    %434 = arith.addf %433, %432 : vector<8x96xf32>
    %435 = tpu.reciprocal %434 : vector<8x96xf32> -> vector<8x96xf32>
    %436 = vector.extract_strided_slice %428 {offsets = [0, 96], sizes = [8, 32], strides = [1, 1]} : vector<8x128xf32> to vector<8x32xf32>
    %437 = math.tanh %436 : vector<8x32xf32>
    %438 = vector.extract_strided_slice %435 {offsets = [0, 0], sizes = [8, 32], strides = [1, 1]} : vector<8x96xf32> to vector<8x32xf32>
    %439 = vector.extract_strided_slice %435 {offsets = [0, 32], sizes = [8, 32], strides = [1, 1]} : vector<8x96xf32> to vector<8x32xf32>
    %440 = vector.extract_strided_slice %435 {offsets = [0, 64], sizes = [8, 32], strides = [1, 1]} : vector<8x96xf32> to vector<8x32xf32>
    %441 = arith.mulf %439, %395 : vector<8x32xf32>
    %442 = arith.mulf %438, %437 : vector<8x32xf32>
    %443 = arith.addf %441, %442 : vector<8x32xf32>
    %444 = math.tanh %443 : vector<8x32xf32>
    %445 = arith.mulf %440, %444 : vector<8x32xf32>
    %c6_i32_87 = arith.constant 6 : i32
    %446 = vector.broadcast %c6_i32_87 : i32 to vector<8x1xi32>
    %447 = arith.cmpi sgt, %6, %446 : vector<8x1xi32>
    %c1_i32_88 = arith.constant 1 : i32
    %448 = vector.broadcast %c1_i32_88 : i32 to vector<8x1xi32>
    %449 = arith.cmpi sgt, %6, %448 : vector<8x1xi32>
    %450 = vector.shape_cast %447 : vector<8x1xi1> to vector<8x1xi1>
    %451 = vector.broadcast %450 : vector<8x1xi1> to vector<8x32xi1>
    %452 = arith.select %451, %425, %386 : vector<8x32xi1>, vector<8x32xf32>
    %453 = vector.shape_cast %447 : vector<8x1xi1> to vector<8x1xi1>
    %454 = vector.broadcast %453 : vector<8x1xi1> to vector<8x32xi1>
    %455 = arith.select %454, %423, %389 : vector<8x32xi1>, vector<8x32xf32>
    %456 = vector.shape_cast %449 : vector<8x1xi1> to vector<8x1xi1>
    %457 = vector.broadcast %456 : vector<8x1xi1> to vector<8x32xi1>
    %458 = arith.select %457, %445, %392 : vector<8x32xi1>, vector<8x32xf32>
    %459 = vector.shape_cast %449 : vector<8x1xi1> to vector<8x1xi1>
    %460 = vector.broadcast %459 : vector<8x1xi1> to vector<8x32xi1>
    %461 = arith.select %460, %443, %395 : vector<8x32xi1>, vector<8x32xf32>
    %cst_89 = arith.constant 0.000000e+00 : f32
    %462 = vector.shape_cast %447 : vector<8x1xi1> to vector<8x1xi1>
    %463 = vector.broadcast %462 : vector<8x1xi1> to vector<8x32xi1>
    %464 = vector.broadcast %cst_89 : f32 to vector<8x32xf32>
    %465 = arith.select %463, %425, %464 : vector<8x32xi1>, vector<8x32xf32>
    %c48_90 = arith.constant 48 : index
    %c0_91 = arith.constant 0 : index
    %466 = vector.load %arg10[%c48_90, %c0_91] : memref<64x32xf32, #tpu.memory_space<vmem>>, vector<8x32xf32>
    tpu.vector_store %arg10[%c48_90, %c0_91], %465 {strides = array<i32>} : memref<64x32xf32, #tpu.memory_space<vmem>>, vector<8x32xf32>,
    %cst_92 = arith.constant 0.000000e+00 : f32
    %467 = vector.shape_cast %449 : vector<8x1xi1> to vector<8x1xi1>
    %468 = vector.broadcast %467 : vector<8x1xi1> to vector<8x32xi1>
    %469 = vector.broadcast %cst_92 : f32 to vector<8x32xf32>
    %470 = arith.select %468, %445, %469 : vector<8x32xi1>, vector<8x32xf32>
    %c8_93 = arith.constant 8 : index
    %c0_94 = arith.constant 0 : index
    %471 = vector.load %arg11[%c8_93, %c0_94] : memref<64x32xf32, #tpu.memory_space<vmem>>, vector<8x32xf32>
    tpu.vector_store %arg11[%c8_93, %c0_94], %470 {strides = array<i32>} : memref<64x32xf32, #tpu.memory_space<vmem>>, vector<8x32xf32>,
    %472 = vector.extract_strided_slice %5 {offsets = [56, 0], sizes = [8, 128], strides = [1, 1]} : vector<64x256xf32> to vector<8x128xf32>
    %cst_95 = arith.constant dense<0.000000e+00> : vector<8x128xf32>
    %473 = tpu.matmul %452, %7, %cst_95 {dimension_numbers = #tpu.dot_dimension_numbers<[1], [0], [0], [1], [0, 0, 1, 1], [], []>} : vector<8x32xf32>, vector<32x128xf32>, vector<8x128xf32> -> vector<8x128xf32>
    %474 = arith.addf %473, %472 : vector<8x128xf32>
    %475 = vector.extract_strided_slice %474 {offsets = [0, 0], sizes = [8, 96], strides = [1, 1]} : vector<8x128xf32> to vector<8x96xf32>
    %cst_96 = arith.constant 0.000000e+00 : f32
    %476 = vector.broadcast %cst_96 : f32 to vector<8x96xf32>
    %477 = arith.subf %476, %475 : vector<8x96xf32>
    %478 = math.exp %477 : vector<8x96xf32>
    %cst_97 = arith.constant 1.000000e+00 : f32
    %479 = vector.broadcast %cst_97 : f32 to vector<8x96xf32>
    %480 = arith.addf %479, %478 : vector<8x96xf32>
    %481 = tpu.reciprocal %480 : vector<8x96xf32> -> vector<8x96xf32>
    %482 = vector.extract_strided_slice %474 {offsets = [0, 96], sizes = [8, 32], strides = [1, 1]} : vector<8x128xf32> to vector<8x32xf32>
    %483 = math.tanh %482 : vector<8x32xf32>
    %484 = vector.extract_strided_slice %481 {offsets = [0, 0], sizes = [8, 32], strides = [1, 1]} : vector<8x96xf32> to vector<8x32xf32>
    %485 = vector.extract_strided_slice %481 {offsets = [0, 32], sizes = [8, 32], strides = [1, 1]} : vector<8x96xf32> to vector<8x32xf32>
    %486 = vector.extract_strided_slice %481 {offsets = [0, 64], sizes = [8, 32], strides = [1, 1]} : vector<8x96xf32> to vector<8x32xf32>
    %487 = arith.mulf %485, %455 : vector<8x32xf32>
    %488 = arith.mulf %484, %483 : vector<8x32xf32>
    %489 = arith.addf %487, %488 : vector<8x32xf32>
    %490 = math.tanh %489 : vector<8x32xf32>
    %491 = arith.mulf %486, %490 : vector<8x32xf32>
    %492 = vector.extract_strided_slice %5 {offsets = [0, 128], sizes = [8, 128], strides = [1, 1]} : vector<64x256xf32> to vector<8x128xf32>
    %cst_98 = arith.constant dense<0.000000e+00> : vector<8x128xf32>
    %493 = tpu.matmul %458, %8, %cst_98 {dimension_numbers = #tpu.dot_dimension_numbers<[1], [0], [0], [1], [0, 0, 1, 1], [], []>} : vector<8x32xf32>, vector<32x128xf32>, vector<8x128xf32> -> vector<8x128xf32>
    %494 = arith.addf %493, %492 : vector<8x128xf32>
    %495 = vector.extract_strided_slice %494 {offsets = [0, 0], sizes = [8, 96], strides = [1, 1]} : vector<8x128xf32> to vector<8x96xf32>
    %cst_99 = arith.constant 0.000000e+00 : f32
    %496 = vector.broadcast %cst_99 : f32 to vector<8x96xf32>
    %497 = arith.subf %496, %495 : vector<8x96xf32>
    %498 = math.exp %497 : vector<8x96xf32>
    %cst_100 = arith.constant 1.000000e+00 : f32
    %499 = vector.broadcast %cst_100 : f32 to vector<8x96xf32>
    %500 = arith.addf %499, %498 : vector<8x96xf32>
    %501 = tpu.reciprocal %500 : vector<8x96xf32> -> vector<8x96xf32>
    %502 = vector.extract_strided_slice %494 {offsets = [0, 96], sizes = [8, 32], strides = [1, 1]} : vector<8x128xf32> to vector<8x32xf32>
    %503 = math.tanh %502 : vector<8x32xf32>
    %504 = vector.extract_strided_slice %501 {offsets = [0, 0], sizes = [8, 32], strides = [1, 1]} : vector<8x96xf32> to vector<8x32xf32>
    %505 = vector.extract_strided_slice %501 {offsets = [0, 32], sizes = [8, 32], strides = [1, 1]} : vector<8x96xf32> to vector<8x32xf32>
    %506 = vector.extract_strided_slice %501 {offsets = [0, 64], sizes = [8, 32], strides = [1, 1]} : vector<8x96xf32> to vector<8x32xf32>
    %507 = arith.mulf %505, %461 : vector<8x32xf32>
    %508 = arith.mulf %504, %503 : vector<8x32xf32>
    %509 = arith.addf %507, %508 : vector<8x32xf32>
    %510 = math.tanh %509 : vector<8x32xf32>
    %511 = arith.mulf %506, %510 : vector<8x32xf32>
    %c7_i32_101 = arith.constant 7 : i32
    %512 = vector.broadcast %c7_i32_101 : i32 to vector<8x1xi32>
    %513 = arith.cmpi sgt, %6, %512 : vector<8x1xi32>
    %c0_i32_102 = arith.constant 0 : i32
    %514 = vector.broadcast %c0_i32_102 : i32 to vector<8x1xi32>
    %515 = arith.cmpi sgt, %6, %514 : vector<8x1xi32>
    %cst_103 = arith.constant 0.000000e+00 : f32
    %516 = vector.shape_cast %513 : vector<8x1xi1> to vector<8x1xi1>
    %517 = vector.broadcast %516 : vector<8x1xi1> to vector<8x32xi1>
    %518 = vector.broadcast %cst_103 : f32 to vector<8x32xf32>
    %519 = arith.select %517, %491, %518 : vector<8x32xi1>, vector<8x32xf32>
    %c56_104 = arith.constant 56 : index
    %c0_105 = arith.constant 0 : index
    %520 = vector.load %arg10[%c56_104, %c0_105] : memref<64x32xf32, #tpu.memory_space<vmem>>, vector<8x32xf32>
    tpu.vector_store %arg10[%c56_104, %c0_105], %519 {strides = array<i32>} : memref<64x32xf32, #tpu.memory_space<vmem>>, vector<8x32xf32>,
    %cst_106 = arith.constant 0.000000e+00 : f32
    %521 = vector.shape_cast %515 : vector<8x1xi1> to vector<8x1xi1>
    %522 = vector.broadcast %521 : vector<8x1xi1> to vector<8x32xi1>
    %523 = vector.broadcast %cst_106 : f32 to vector<8x32xf32>
    %524 = arith.select %522, %511, %523 : vector<8x32xi1>, vector<8x32xf32>
    %c0_107 = arith.constant 0 : index
    %c0_108 = arith.constant 0 : index
    %525 = vector.load %arg11[%c0_107, %c0_108] : memref<64x32xf32, #tpu.memory_space<vmem>>, vector<8x32xf32>
    tpu.vector_store %arg11[%c0_107, %c0_108], %524 {strides = array<i32>} : memref<64x32xf32, #tpu.memory_space<vmem>>, vector<8x32xf32>,
    %c0_109 = arith.constant 0 : index
    %c0_110 = arith.constant 0 : index
    %526 = vector.load %arg10[%c0_109, %c0_110] : memref<64x32xf32, #tpu.memory_space<vmem>>, vector<64x32xf32>
    %c0_111 = arith.constant 0 : index
    %c0_112 = arith.constant 0 : index
    %527 = vector.load %arg6[%c0_111, %c0_112] : memref<32x128xf32, #tpu.memory_space<vmem>>, vector<32x128xf32>
    %cst_113 = arith.constant dense<0.000000e+00> : vector<64x128xf32>
    %528 = tpu.matmul %526, %527, %cst_113 {dimension_numbers = #tpu.dot_dimension_numbers<[1], [0], [0], [1], [0, 0, 1, 1], [], []>} : vector<64x32xf32>, vector<32x128xf32>, vector<64x128xf32> -> vector<64x128xf32>
    %c0_114 = arith.constant 0 : index
    %c0_115 = arith.constant 0 : index
    %529 = vector.load %arg11[%c0_114, %c0_115] : memref<64x32xf32, #tpu.memory_space<vmem>>, vector<64x32xf32>
    %c0_116 = arith.constant 0 : index
    %c0_117 = arith.constant 0 : index
    %530 = vector.load %arg7[%c0_116, %c0_117] : memref<32x128xf32, #tpu.memory_space<vmem>>, vector<32x128xf32>
    %cst_118 = arith.constant dense<0.000000e+00> : vector<64x128xf32>
    %531 = tpu.matmul %529, %530, %cst_118 {dimension_numbers = #tpu.dot_dimension_numbers<[1], [0], [0], [1], [0, 0, 1, 1], [], []>} : vector<64x32xf32>, vector<32x128xf32>, vector<64x128xf32> -> vector<64x128xf32>
    %532 = arith.addf %528, %531 : vector<64x128xf32>
    %c0_119 = arith.constant 0 : index
    %c0_120 = arith.constant 0 : index
    %533 = vector.load %arg8[%c0_119, %c0_120] : memref<1x128xf32, #tpu.memory_space<vmem>>, vector<1x128xf32>
    %534 = vector.broadcast %533 : vector<1x128xf32> to vector<64x128xf32>
    %535 = arith.addf %532, %534 : vector<64x128xf32>
    %c0_121 = arith.constant 0 : index
    %c0_122 = arith.constant 0 : index
    %536 = vector.load %arg9[%c0_121, %c0_122] : memref<64x128xf32, #tpu.memory_space<vmem>>, vector<64x128xf32>
    tpu.vector_store %arg9[%c0_121, %c0_122], %535 {strides = array<i32>} : memref<64x128xf32, #tpu.memory_space<vmem>>, vector<64x128xf32>,
    return
  }
}

</mosaic_0001>

<llo_original>
// kernel: tpu_custom_call.1
$region0: #{tpu_custom_call.1}
  #allocation0 [shape = 'u32[]', space=smem, size = 0x4, offset = 0x4, fixed_abs, tag = 'smem constant byte address 0x4 - core index']
  #allocation1 [shape = 'u32[144,128]{1,0:T(1,128)}', space=vmem, size = 0x12000, scoped, tag = 'internal scratch']
  #allocation2 [shape = 'f32[64,32]{1,0:T(8,128)}', space=vmem, size = 0x8000, scoped, tag = 'scratch operand']
  #allocation3 [shape = 'f32[64,32]{1,0:T(8,128)}', space=vmem, size = 0x8000, scoped, tag = 'scratch operand']
  %s0 = inlined_call_operand.vmem [shape: f32[64,16], index: 0, kind: input, shape index: {}]
  %s1 = inlined_call_operand.vmem [shape: s32[8,1], index: 1, kind: input, shape index: {}]
  %s2 = inlined_call_operand.vmem [shape: f32[16,256], index: 2, kind: input, shape index: {}]
  %s3 = inlined_call_operand.vmem [shape: f32[32,128], index: 3, kind: input, shape index: {}]
  %s4 = inlined_call_operand.vmem [shape: f32[32,128], index: 4, kind: input, shape index: {}]
  %s5 = inlined_call_operand.vmem [shape: f32[1,256], index: 5, kind: input, shape index: {}]
  %s6 = inlined_call_operand.hbm [shape: f32[32,128], index: 6, kind: input, shape index: {}]
  %s7 = inlined_call_operand.hbm [shape: f32[32,128], index: 7, kind: input, shape index: {}]
  %s8 = inlined_call_operand.vmem [shape: f32[1,128], index: 8, kind: input, shape index: {}]
  %s9 = inlined_call_operand.hbm [shape: f32[64,128], index: 9, kind: output, shape index: {}]
  %s10 = sld [smem:[#allocation0]]
  $region54: #{tpu_custom_call.1} parent=0
    _
  %s12 = ssub.s32 1, %s10
  %s13 = scalar_select 0, %s12, %s10
  $region1: #{tpu_custom_call.1} parent=0
    #allocation4 [shape = 'u8[16384]{0}', space=vmem, size = 0x4000, scoped, tag = 'input window, operand 6, single buffered']
    #allocation5 [shape = 's32[1]{0}', space=sflag, size = 0x4, scoped, tag = 'scoped memory for tpu_custom_call.1']
    #allocation6 [shape = 's32[1]{0}', space=sflag, size = 0x4, scoped, tag = 'scoped memory for tpu_custom_call.1']
    #allocation7 [shape = 'u8[16384]{0}', space=vmem, size = 0x4000, scoped, tag = 'input window, operand 7, single buffered']
    #allocation8 [shape = 's32[1]{0}', space=sflag, size = 0x4, scoped, tag = 'scoped memory for tpu_custom_call.1']
    #allocation9 [shape = 'u8[32768]{0}', space=vmem, size = 0x8000, scoped, tag = 'output window, operand 0, single buffered']
    %14 = vsyncpa [#allocation5], 0
    %15 = vsyncpa [#allocation8], 0
    %16 = vsyncpa [#allocation6], 0
    // Predicated region
    $region2: #{tpu_custom_call.1} parent=1 // pred_check
      _
    $region3: #{tpu_custom_call.1} parent=1 // pred_check_branch
      %18 = sbr.rel (0) target = $region5
    $region4: #{tpu_custom_call.1} parent=1 // pred_region
      _
    $region5: #{tpu_custom_call.1} parent=1 // pred_fallthru
      _
    // Predicated region
    $region6: #{tpu_custom_call.1} parent=1 // pred_check
      _
    $region7: #{tpu_custom_call.1} parent=1 // pred_check_branch
      %20 = sbr.rel (0) target = $region9
    $region8: #{tpu_custom_call.1} parent=1 // pred_region
      _
    $region9: #{tpu_custom_call.1} parent=1 // pred_fallthru
      _
    // Predicated region
    $region10: #{tpu_custom_call.1} parent=1 // pred_check
      _
    $region11: #{tpu_custom_call.1} parent=1 // pred_check_branch
      %22 = sbr.rel (0) target = $region13
    $region12: #{tpu_custom_call.1} parent=1 // pred_region
      _
    $region13: #{tpu_custom_call.1} parent=1 // pred_fallthru
      _
    // Predicated region
    $region14: #{tpu_custom_call.1} parent=1 // pred_check
      _
    $region15: #{tpu_custom_call.1} parent=1 // pred_check_branch
      %24 = sbr.rel (0) target = $region17
    $region16: #{tpu_custom_call.1} parent=1 // pred_region
      _
    $region17: #{tpu_custom_call.1} parent=1 // pred_fallthru
      _
    // Predicated region
    $region18: #{tpu_custom_call.1} parent=1 // pred_check
      _
    $region19: #{tpu_custom_call.1} parent=1 // pred_check_branch
      %26 = sbr.rel (0) target = $region21
    $region20: #{tpu_custom_call.1} parent=1 // pred_region
      _
    $region21: #{tpu_custom_call.1} parent=1 // pred_fallthru
      _
    // Predicated region
    $region22: #{tpu_custom_call.1} parent=1 // pred_check
      _
    $region23: #{tpu_custom_call.1} parent=1 // pred_check_branch
      %28 = sbr.rel (0) target = $region25
    $region24: #{tpu_custom_call.1} parent=1 // pred_region
      _
    $region25: #{tpu_custom_call.1} parent=1 // pred_fallthru
      _
    // Predicated region
    $region26: #{tpu_custom_call.1} parent=1 // pred_check
      _
    $region27: #{tpu_custom_call.1} parent=1 // pred_check_branch
      %30 = sbr.rel (0) target = $region29
    $region28: #{tpu_custom_call.1} parent=1 // pred_region
      %s32 = ssub.s32 512, 512
      %33 = vsyncadd [#allocation5], %s32
      %s34 = sshll.u32 [#allocation4], 4
      %s35 = int_to_ptr.vmem [resolvable:$true] %s34
      %40 = dma.hbm_to_vmem [thread:$0]  %s6, 512, %s35, [#allocation5], 128, 128, 8
    $region29: #{tpu_custom_call.1} parent=1 // pred_fallthru
      _
    // Predicated region
    $region30: #{tpu_custom_call.1} parent=1 // pred_check
      _
    $region31: #{tpu_custom_call.1} parent=1 // pred_check_branch
      %42 = sbr.rel (0) target = $region33
    $region32: #{tpu_custom_call.1} parent=1 // pred_region
      %s44 = ssub.s32 512, 512
      %45 = vsyncadd [#allocation8], %s44
      %s46 = sshll.u32 [#allocation7], 4
      %s47 = int_to_ptr.vmem [resolvable:$true] %s46
      %52 = dma.hbm_to_vmem [thread:$0]  %s7, 512, %s47, [#allocation8], 128, 128, 8
    $region33: #{tpu_custom_call.1} parent=1 // pred_fallthru
      _
    // Predicated region
    $region34: #{tpu_custom_call.1} parent=1 // pred_check
      _
    $region35: #{tpu_custom_call.1} parent=1 // pred_check_branch
      %54 = sbr.rel (0) target = $region37
    $region36: #{tpu_custom_call.1} parent=1 // pred_region
      _
    $region37: #{tpu_custom_call.1} parent=1 // pred_fallthru
      _
    // Predicated region
    $region38: #{tpu_custom_call.1} parent=1 // pred_check
      _
    $region39: #{tpu_custom_call.1} parent=1 // pred_check_branch
      %56 = sbr.rel (0) target = $region41
    $region40: #{tpu_custom_call.1} parent=1 // pred_region
      %57 = dma.done [#allocation5], 512
    $region41: #{tpu_custom_call.1} parent=1 // pred_fallthru
      _
    // Predicated region
    $region42: #{tpu_custom_call.1} parent=1 // pred_check
      _
    $region43: #{tpu_custom_call.1} parent=1 // pred_check_branch
      %59 = sbr.rel (0) target = $region45
    $region44: #{tpu_custom_call.1} parent=1 // pred_region
      %60 = dma.done [#allocation8], 512
    $region45: #{tpu_custom_call.1} parent=1 // pred_fallthru
      _
    %v61 = vld [vmem:[%s0] sm:$0xff]
    %v62 = vld [vmem:[%s0 + $0x8] sm:$0xff]
    %v63 = vld [vmem:[%s0 + $0x10] sm:$0xff]
    %v64 = vld [vmem:[%s0 + $0x18] sm:$0xff]
    %v65 = vld [vmem:[%s0 + $0x20] sm:$0xff]
    %v66 = vld [vmem:[%s0 + $0x28] sm:$0xff]
    %v67 = vld [vmem:[%s0 + $0x30] sm:$0xff]
    %v68 = vld [vmem:[%s0 + $0x38] sm:$0xff]
    %v69 = vld [vmem:[%s2] sm:$0xff]
    %v70 = vld [vmem:[%s2 + $0x8] sm:$0xff]
    %v71 = vld [vmem:[%s2 + $0x10] sm:$0xff]
    %v72 = vld [vmem:[%s2 + $0x18] sm:$0xff]
    %v73 = vld [vmem:[%s5] sm:$0x3]
    %v75 = vlaneseq
    %v76 = vshrl.u32 %v75, 7
    %v77 = vsub.s32 0, %v76
    %v78 = vrot.slane %v73, %v77
    %v79 = vlaneseq
    %v80 = vshrl.u32 %v79, 7
    %v81 = vsub.s32 1, %v80
    %v82 = vrot.slane %v73, %v81
    %vm85 = vcmask 130048
    %v87 = vsel %vm85, %v61, 0
    %v90 = vsel %vm85, %v62, 0
    %v93 = vsel %vm85, %v63, 0
    %v96 = vsel %vm85, %v64, 0
    %v99 = vsel %vm85, %v65, 0
    %v102 = vsel %vm85, %v66, 0
    %v105 = vsel %vm85, %v67, 0
    %v108 = vsel %vm85, %v68, 0
    %110 = vmatprep.subr.mxu0 0.0
    %111 = vmatpush1.msra.mxu0 0.0
    %112 = vmatprep.subr.mxu0 0.0
    %113 = vmatpush1.msra.mxu0 0.0
    %114 = vmatprep.subr.mxu0 0.0
    %115 = vmatpush1.msra.mxu0 0.0
    %116 = vmatprep.subr.mxu0 0.0
    %117 = vmatpush1.msra.mxu0 0.0
    %118 = vmatprep.subr.mxu0 0.0
    %119 = vmatpush1.msra.mxu0 0.0
    %120 = vmatprep.subr.mxu0 0.0
    %121 = vmatpush1.msra.mxu0 0.0
    %122 = vmatprep.subr.mxu0 0.0
    %123 = vmatpush1.msra.mxu0 0.0
    %124 = vmatprep.subr.mxu0 0.0
    %125 = vmatpush1.msra.mxu0 0.0
    %126 = vmatprep.subr.mxu0 0.0
    %127 = vmatpush1.msra.mxu0 0.0
    %128 = vmatprep.subr.mxu0 0.0
    %129 = vmatpush1.msra.mxu0 0.0
    %130 = vmatprep.subr.mxu0 0.0
    %131 = vmatpush1.msra.mxu0 0.0
    %132 = vmatprep.subr.mxu0 0.0
    %133 = vmatpush1.msra.mxu0 0.0
    %134 = vmatprep.subr.mxu0 0.0
    %135 = vmatpush1.msra.mxu0 0.0
    %136 = vmatprep.subr.mxu0 0.0
    %137 = vmatpush1.msra.mxu0 0.0
    %138 = vmatprep.subr.mxu0 %v72
    %139 = vmatpush1.msra.mxu0 %v71
    %140 = vmatprep.subr.mxu0 %v70
    %141 = vmatpush1.msra.mxu0 %v69
    %142 = vmatprep.subr.mxu0 0.0
    %143 = vmatpush2.msra.mxu0 0.0
    %144 = vmatprep.subr.mxu0 0.0
    %145 = vmatpush2.msra.mxu0 0.0
    %146 = vmatprep.subr.mxu0 0.0
    %147 = vmatpush2.msra.mxu0 0.0
    %148 = vmatprep.subr.mxu0 0.0
    %149 = vmatpush2.msra.mxu0 0.0
    %150 = vmatprep.subr.mxu0 0.0
    %151 = vmatpush2.msra.mxu0 0.0
    %152 = vmatprep.subr.mxu0 0.0
    %153 = vmatpush2.msra.mxu0 0.0
    %154 = vmatprep.subr.mxu0 0.0
    %155 = vmatpush2.msra.mxu0 0.0
    %156 = vmatprep.subr.mxu0 0.0
    %157 = vmatpush2.msra.mxu0 0.0
    %158 = vmatprep.subr.mxu0 0.0
    %159 = vmatpush2.msra.mxu0 0.0
    %160 = vmatprep.subr.mxu0 0.0
    %161 = vmatpush2.msra.mxu0 0.0
    %162 = vmatprep.subr.mxu0 0.0
    %163 = vmatpush2.msra.mxu0 0.0
    %164 = vmatprep.subr.mxu0 0.0
    %165 = vmatpush2.msra.mxu0 0.0
    %166 = vmatprep.subr.mxu0 0.0
    %167 = vmatpush2.msra.mxu0 0.0
    %168 = vmatprep.subr.mxu0 0.0
    %169 = vmatpush2.msra.mxu0 0.0
    %170 = vmatprep.subr.mxu0 0.0
    %171 = vmatpush2.msra.mxu0 0.0
    %172 = vmatprep.subr.mxu0 0.0
    %173 = vmatpush2.msra.mxu0 0.0
    %174 = vmatprep.mubr.f32.mxu0 0.0
    %175 = vmatmul.mubr.f32.gmra.mxu0 %v87
    %v176 = vpop.f32.mrf.mxu0
    %v177 = vadd.f32 %v78, %v176
    %v178 = vpop.f32.mrf.mxu0
    %v179 = vadd.f32 %v82, %v178
    %180 = vmatprep.mubr.f32.mxu0 0.0
    %181 = vmatmul.mubr.f32.gmra.mxu0 %v90
    %v182 = vpop.f32.mrf.mxu0
    %v183 = vadd.f32 %v78, %v182
    %v184 = vpop.f32.mrf.mxu0
    %v185 = vadd.f32 %v82, %v184
    %186 = vmatprep.mubr.f32.mxu0 0.0
    %187 = vmatmul.mubr.f32.gmra.mxu0 %v93
    %v188 = vpop.f32.mrf.mxu0
    %v189 = vadd.f32 %v78, %v188
    %v190 = vpop.f32.mrf.mxu0
    %v191 = vadd.f32 %v82, %v190
    %192 = vmatprep.mubr.f32.mxu0 0.0
    %193 = vmatmul.mubr.f32.gmra.mxu0 %v96
    %v194 = vpop.f32.mrf.mxu0
    %v195 = vadd.f32 %v78, %v194
    %v196 = vpop.f32.mrf.mxu0
    %v197 = vadd.f32 %v82, %v196
    %198 = vmatprep.mubr.f32.mxu0 0.0
    %199 = vmatmul.mubr.f32.gmra.mxu0 %v99
    %v200 = vpop.f32.mrf.mxu0
    %v201 = vadd.f32 %v78, %v200
    %v202 = vpop.f32.mrf.mxu0
    %v203 = vadd.f32 %v82, %v202
    %204 = vmatprep.mubr.f32.mxu0 0.0
    %205 = vmatmul.mubr.f32.gmra.mxu0 %v102
    %v206 = vpop.f32.mrf.mxu0
    %v207 = vadd.f32 %v78, %v206
    %v208 = vpop.f32.mrf.mxu0
    %v209 = vadd.f32 %v82, %v208
    %210 = vmatprep.mubr.f32.mxu0 0.0
    %211 = vmatmul.mubr.f32.gmra.mxu0 %v105
    %v212 = vpop.f32.mrf.mxu0
    %v213 = vadd.f32 %v78, %v212
    %v214 = vpop.f32.mrf.mxu0
    %v215 = vadd.f32 %v82, %v214
    %216 = vmatprep.mubr.f32.mxu0 0.0
    %217 = vmatmul.mubr.f32.gmra.mxu0 %v108
    %v218 = vpop.f32.mrf.mxu0
    %v219 = vadd.f32 %v78, %v218
    %v220 = vpop.f32.mrf.mxu0
    %v221 = vadd.f32 %v82, %v220
    %222 = vdwg.mxu0
    %v223 = vld [vmem:[%s1] sm:$0xff]
    %v224 = vld [vmem:[%s3] sm:$0xff]
    %v225 = vld [vmem:[%s3 + $0x8] sm:$0xff]
    %v226 = vld [vmem:[%s3 + $0x10] sm:$0xff]
    %v227 = vld [vmem:[%s3 + $0x18] sm:$0xff]
    %v228 = vld [vmem:[%s4] sm:$0xff]
    %v229 = vld [vmem:[%s4 + $0x8] sm:$0xff]
    %v230 = vld [vmem:[%s4 + $0x10] sm:$0xff]
    %v231 = vld [vmem:[%s4 + $0x18] sm:$0xff]
    %vm232 = vcmask 261120
    %v234 = vsel %vm232, 0.0, 0
    %236 = vmatprep.subr.mxu0 0.0
    %237 = vmatpush1.msra.mxu0 0.0
    %238 = vmatprep.subr.mxu0 0.0
    %239 = vmatpush1.msra.mxu0 0.0
    %240 = vmatprep.subr.mxu0 0.0
    %241 = vmatpush1.msra.mxu0 0.0
    %242 = vmatprep.subr.mxu0 0.0
    %243 = vmatpush1.msra.mxu0 0.0
    %244 = vmatprep.subr.mxu0 0.0
    %245 = vmatpush1.msra.mxu0 0.0
    %246 = vmatprep.subr.mxu0 0.0
    %247 = vmatpush1.msra.mxu0 0.0
    %248 = vmatprep.subr.mxu0 0.0
    %249 = vmatpush1.msra.mxu0 0.0
    %250 = vmatprep.subr.mxu0 0.0
    %251 = vmatpush1.msra.mxu0 0.0
    %252 = vmatprep.subr.mxu0 0.0
    %253 = vmatpush1.msra.mxu0 0.0
    %254 = vmatprep.subr.mxu0 0.0
    %255 = vmatpush1.msra.mxu0 0.0
    %256 = vmatprep.subr.mxu0 0.0
    %257 = vmatpush1.msra.mxu0 0.0
    %258 = vmatprep.subr.mxu0 0.0
    %259 = vmatpush1.msra.mxu0 0.0
    %260 = vmatprep.subr.mxu0 0.0
    %261 = vmatpush1.msra.mxu0 %v227
    %262 = vmatprep.subr.mxu0 0.0
    %263 = vmatpush1.msra.mxu0 %v226
    %264 = vmatprep.subr.mxu0 0.0
    %265 = vmatpush1.msra.mxu0 %v225
    %266 = vmatprep.subr.mxu0 0.0
    %267 = vmatpush1.msra.mxu0 %v224
    %268 = vmatprep.subr.mxu0 0.0
    %269 = vmatpush2.msra.mxu0 0.0
    %270 = vmatprep.subr.mxu0 0.0
    %271 = vmatpush2.msra.mxu0 0.0
    %272 = vmatprep.subr.mxu0 0.0
    %273 = vmatpush2.msra.mxu0 0.0
    %274 = vmatprep.subr.mxu0 0.0
    %275 = vmatpush2.msra.mxu0 0.0
    %276 = vmatprep.subr.mxu0 0.0
    %277 = vmatpush2.msra.mxu0 0.0
    %278 = vmatprep.subr.mxu0 0.0
    %279 = vmatpush2.msra.mxu0 0.0
    %280 = vmatprep.subr.mxu0 0.0
    %281 = vmatpush2.msra.mxu0 0.0
    %282 = vmatprep.subr.mxu0 0.0
    %283 = vmatpush2.msra.mxu0 0.0
    %284 = vmatprep.subr.mxu0 0.0
    %285 = vmatpush2.msra.mxu0 0.0
    %286 = vmatprep.subr.mxu0 0.0
    %287 = vmatpush2.msra.mxu0 0.0
    %288 = vmatprep.subr.mxu0 0.0
    %289 = vmatpush2.msra.mxu0 0.0
    %290 = vmatprep.subr.mxu0 0.0
    %291 = vmatpush2.msra.mxu0 0.0
    %292 = vmatprep.subr.mxu0 0.0
    %293 = vmatpush2.msra.mxu0 0.0
    %294 = vmatprep.subr.mxu0 0.0
    %295 = vmatpush2.msra.mxu0 0.0
    %296 = vmatprep.subr.mxu0 0.0
    %297 = vmatpush2.msra.mxu0 0.0
    %298 = vmatprep.subr.mxu0 0.0
    %299 = vmatpush2.msra.mxu0 0.0
    %300 = vmatprep.mubr.f32.mxu0 0.0
    %301 = vmatmul.mubr.f32.gmra.mxu0 %v234
    %v302 = vpop.f32.mrf.mxu0
    %v303 = vadd.f32 %v177, %v302
    %v304 = vpop.f32.mrf.mxu0
    %305 = vdwg.mxu0
    %v306 = vsub.f32 0.0, %v303
    %v307 = vmul.f32 %v306, 1.442695
    %v308 = vpow.pop %v307
    %v309 = vadd.f32 %v308, 1.0
    %v310 = vrcp.pop %v309
    %v311 = vtanh.pop %v303
    %v312 = vmul.f32 %v310, 0.0
    %314 = vrot.lane.b32.xlu0 %v311, 32
    %v315 = vpop.permute.xlu0 %314
    %v317 = vmul.f32 %v310, %v315
    %319 = vrot.lane.b32.xlu0 %v317, 32
    %v320 = vpop.permute.xlu0 %319
    %v322 = vadd.f32 %v312, %v320
    %v323 = vtanh.pop %v322
    %325 = vrot.lane.b32.xlu0 %v323, 32
    %v326 = vpop.permute.xlu0 %325
    %v328 = vmul.f32 %v310, %v326
    %329 = vmatprep.subr.mxu0 0.0
    %330 = vmatpush1.msra.mxu0 0.0
    %331 = vmatprep.subr.mxu0 0.0
    %332 = vmatpush1.msra.mxu0 0.0
    %333 = vmatprep.subr.mxu0 0.0
    %334 = vmatpush1.msra.mxu0 0.0
    %335 = vmatprep.subr.mxu0 0.0
    %336 = vmatpush1.msra.mxu0 0.0
    %337 = vmatprep.subr.mxu0 0.0
    %338 = vmatpush1.msra.mxu0 0.0
    %339 = vmatprep.subr.mxu0 0.0
    %340 = vmatpush1.msra.mxu0 0.0
    %341 = vmatprep.subr.mxu0 0.0
    %342 = vmatpush1.msra.mxu0 0.0
    %343 = vmatprep.subr.mxu0 0.0
    %344 = vmatpush1.msra.mxu0 0.0
    %345 = vmatprep.subr.mxu0 0.0
    %346 = vmatpush1.msra.mxu0 0.0
    %347 = vmatprep.subr.mxu0 0.0
    %348 = vmatpush1.msra.mxu0 0.0
    %349 = vmatprep.subr.mxu0 0.0
    %350 = vmatpush1.msra.mxu0 0.0
    %351 = vmatprep.subr.mxu0 0.0
    %352 = vmatpush1.msra.mxu0 0.0
    %353 = vmatprep.subr.mxu0 0.0
    %354 = vmatpush1.msra.mxu0 %v231
    %355 = vmatprep.subr.mxu0 0.0
    %356 = vmatpush1.msra.mxu0 %v230
    %357 = vmatprep.subr.mxu0 0.0
    %358 = vmatpush1.msra.mxu0 %v229
    %359 = vmatprep.subr.mxu0 0.0
    %360 = vmatpush1.msra.mxu0 %v228
    %361 = vmatprep.subr.mxu0 0.0
    %362 = vmatpush2.msra.mxu0 0.0
    %363 = vmatprep.subr.mxu0 0.0
    %364 = vmatpush2.msra.mxu0 0.0
    %365 = vmatprep.subr.mxu0 0.0
    %366 = vmatpush2.msra.mxu0 0.0
    %367 = vmatprep.subr.mxu0 0.0
    %368 = vmatpush2.msra.mxu0 0.0
    %369 = vmatprep.subr.mxu0 0.0
    %370 = vmatpush2.msra.mxu0 0.0
    %371 = vmatprep.subr.mxu0 0.0
    %372 = vmatpush2.msra.mxu0 0.0
    %373 = vmatprep.subr.mxu0 0.0
    %374 = vmatpush2.msra.mxu0 0.0
    %375 = vmatprep.subr.mxu0 0.0
    %376 = vmatpush2.msra.mxu0 0.0
    %377 = vmatprep.subr.mxu0 0.0
    %378 = vmatpush2.msra.mxu0 0.0
    %379 = vmatprep.subr.mxu0 0.0
    %380 = vmatpush2.msra.mxu0 0.0
    %381 = vmatprep.subr.mxu0 0.0
    %382 = vmatpush2.msra.mxu0 0.0
    %383 = vmatprep.subr.mxu0 0.0
    %384 = vmatpush2.msra.mxu0 0.0
    %385 = vmatprep.subr.mxu0 0.0
    %386 = vmatpush2.msra.mxu0 0.0
    %387 = vmatprep.subr.mxu0 0.0
    %388 = vmatpush2.msra.mxu0 0.0
    %389 = vmatprep.subr.mxu0 0.0
    %390 = vmatpush2.msra.mxu0 0.0
    %391 = vmatprep.subr.mxu0 0.0
    %392 = vmatpush2.msra.mxu0 0.0
    %393 = vmatprep.mubr.f32.mxu0 0.0
    %394 = vmatmul.mubr.f32.gmra.mxu0 %v234
    %v395 = vpop.f32.mrf.mxu0
    %v396 = vadd.f32 %v221, %v395
    %v397 = vpop.f32.mrf.mxu0
    %398 = vdwg.mxu0
    %v399 = vsub.f32 0.0, %v396
    %v400 = vmul.f32 %v399, 1.442695
    %v401 = vpow.pop %v400
    %v402 = vadd.f32 %v401, 1.0
    %v403 = vrcp.pop %v402
    %v404 = vtanh.pop %v396
    %v405 = vmul.f32 %v403, 0.0
    %407 = vrot.lane.b32.xlu0 %v404, 32
    %v408 = vpop.permute.xlu0 %407
    %v410 = vmul.f32 %v403, %v408
    %412 = vrot.lane.b32.xlu0 %v410, 32
    %v413 = vpop.permute.xlu0 %412
    %v415 = vadd.f32 %v405, %v413
    %v416 = vtanh.pop %v415
    %418 = vrot.lane.b32.xlu0 %v416, 32
    %v419 = vpop.permute.xlu0 %418
    %v421 = vmul.f32 %v403, %v419
    %vm422 = vcmp.gt.s32.totalorder %v223, 0
    %vm423 = vcmp.gt.s32.totalorder %v223, 7
    %v424 = vsel %vm422, 1, 0
    %425 = vset.pattern.permute.xlu0 0
    %426 = vperm.xlu0 %425, %v424
    %v427 = vpop.permute.xlu0 %426
    %vm428 = vcmp.eq.s32.totalorder %v427, 1
    %v429 = vsel %vm428, %v328, 0.0
    %v430 = vsel %vm428, %v322, 0.0
    %v431 = vsel %vm423, 1, 0
    %432 = vset.pattern.permute.xlu0 0
    %433 = vperm.xlu0 %432, %v431
    %v434 = vpop.permute.xlu0 %433
    %vm435 = vcmp.eq.s32.totalorder %v434, 1
    %v436 = vsel %vm435, %v421, 0.0
    %v437 = vsel %vm435, %v415, 0.0
    %439 = vrot.lane.b32.xlu0 %v429, 64
    %v440 = vpop.permute.xlu0 %439
    %442 = vst.msk [vmem:[#allocation2] sm:$0xff] %vm232, %v440
    %444 = vrot.lane.b32.xlu0 %v436, 64
    %v445 = vpop.permute.xlu0 %444
    %447 = vst.msk [vmem:[#allocation3 + $0x38] sm:$0xff] %vm232, %v445
    %v448 = vsel %vm232, %v440, 0
    %450 = vmatprep.subr.mxu0 0.0
    %451 = vmatpush1.msra.mxu0 0.0
    %452 = vmatprep.subr.mxu0 0.0
    %453 = vmatpush1.msra.mxu0 0.0
    %454 = vmatprep.subr.mxu0 0.0
    %455 = vmatpush1.msra.mxu0 0.0
    %456 = vmatprep.subr.mxu0 0.0
    %457 = vmatpush1.msra.mxu0 0.0
    %458 = vmatprep.subr.mxu0 0.0
    %459 = vmatpush1.msra.mxu0 0.0
    %460 = vmatprep.subr.mxu0 0.0
    %461 = vmatpush1.msra.mxu0 0.0
    %462 = vmatprep.subr.mxu0 0.0
    %463 = vmatpush1.msra.mxu0 0.0
    %464 = vmatprep.subr.mxu0 0.0
    %465 = vmatpush1.msra.mxu0 0.0
    %466 = vmatprep.subr.mxu0 0.0
    %467 = vmatpush1.msra.mxu0 0.0
    %468 = vmatprep.subr.mxu0 0.0
    %469 = vmatpush1.msra.mxu0 0.0
    %470 = vmatprep.subr.mxu0 0.0
    %471 = vmatpush1.msra.mxu0 0.0
    %472 = vmatprep.subr.mxu0 0.0
    %473 = vmatpush1.msra.mxu0 0.0
    %474 = vmatprep.subr.mxu0 0.0
    %475 = vmatpush1.msra.mxu0 %v227
    %476 = vmatprep.subr.mxu0 0.0
    %477 = vmatpush1.msra.mxu0 %v226
    %478 = vmatprep.subr.mxu0 0.0
    %479 = vmatpush1.msra.mxu0 %v225
    %480 = vmatprep.subr.mxu0 0.0
    %481 = vmatpush1.msra.mxu0 %v224
    %482 = vmatprep.subr.mxu0 0.0
    %483 = vmatpush2.msra.mxu0 0.0
    %484 = vmatprep.subr.mxu0 0.0
    %485 = vmatpush2.msra.mxu0 0.0
    %486 = vmatprep.subr.mxu0 0.0
    %487 = vmatpush2.msra.mxu0 0.0
    %488 = vmatprep.subr.mxu0 0.0
    %489 = vmatpush2.msra.mxu0 0.0
    %490 = vmatprep.subr.mxu0 0.0
    %491 = vmatpush2.msra.mxu0 0.0
    %492 = vmatprep.subr.mxu0 0.0
    %493 = vmatpush2.msra.mxu0 0.0
    %494 = vmatprep.subr.mxu0 0.0
    %495 = vmatpush2.msra.mxu0 0.0
    %496 = vmatprep.subr.mxu0 0.0
    %497 = vmatpush2.msra.mxu0 0.0
    %498 = vmatprep.subr.mxu0 0.0
    %499 = vmatpush2.msra.mxu0 0.0
    %500 = vmatprep.subr.mxu0 0.0
    %501 = vmatpush2.msra.mxu0 0.0
    %502 = vmatprep.subr.mxu0 0.0
    %503 = vmatpush2.msra.mxu0 0.0
    %504 = vmatprep.subr.mxu0 0.0
    %505 = vmatpush2.msra.mxu0 0.0
    %506 = vmatprep.subr.mxu0 0.0
    %507 = vmatpush2.msra.mxu0 0.0
    %508 = vmatprep.subr.mxu0 0.0
    %509 = vmatpush2.msra.mxu0 0.0
    %510 = vmatprep.subr.mxu0 0.0
    %511 = vmatpush2.msra.mxu0 0.0
    %512 = vmatprep.subr.mxu0 0.0
    %513 = vmatpush2.msra.mxu0 0.0
    %514 = vmatprep.mubr.f32.mxu0 0.0
    %515 = vmatmul.mubr.f32.gmra.mxu0 %v448
    %v516 = vpop.f32.mrf.mxu0
    %v517 = vadd.f32 %v183, %v516
    %v518 = vpop.f32.mrf.mxu0
    %519 = vdwg.mxu0
    %v520 = vsub.f32 0.0, %v517
    %v521 = vmul.f32 %v520, 1.442695
    %v522 = vpow.pop %v521
    %v523 = vadd.f32 %v522, 1.0
    %v524 = vrcp.pop %v523
    %v525 = vtanh.pop %v517
    %v526 = vmul.f32 %v524, %v430
    %528 = vrot.lane.b32.xlu0 %v525, 32
    %v529 = vpop.permute.xlu0 %528
    %v531 = vmul.f32 %v524, %v529
    %533 = vrot.lane.b32.xlu0 %v531, 32
    %v534 = vpop.permute.xlu0 %533
    %v536 = vadd.f32 %v526, %v534
    %v537 = vtanh.pop %v536
    %539 = vrot.lane.b32.xlu0 %v537, 32
    %v540 = vpop.permute.xlu0 %539
    %v542 = vmul.f32 %v524, %v540
    %v543 = vsel %vm232, %v445, 0
    %545 = vmatprep.subr.mxu0 0.0
    %546 = vmatpush1.msra.mxu0 0.0
    %547 = vmatprep.subr.mxu0 0.0
    %548 = vmatpush1.msra.mxu0 0.0
    %549 = vmatprep.subr.mxu0 0.0
    %550 = vmatpush1.msra.mxu0 0.0
    %551 = vmatprep.subr.mxu0 0.0
    %552 = vmatpush1.msra.mxu0 0.0
    %553 = vmatprep.subr.mxu0 0.0
    %554 = vmatpush1.msra.mxu0 0.0
    %555 = vmatprep.subr.mxu0 0.0
    %556 = vmatpush1.msra.mxu0 0.0
    %557 = vmatprep.subr.mxu0 0.0
    %558 = vmatpush1.msra.mxu0 0.0
    %559 = vmatprep.subr.mxu0 0.0
    %560 = vmatpush1.msra.mxu0 0.0
    %561 = vmatprep.subr.mxu0 0.0
    %562 = vmatpush1.msra.mxu0 0.0
    %563 = vmatprep.subr.mxu0 0.0
    %564 = vmatpush1.msra.mxu0 0.0
    %565 = vmatprep.subr.mxu0 0.0
    %566 = vmatpush1.msra.mxu0 0.0
    %567 = vmatprep.subr.mxu0 0.0
    %568 = vmatpush1.msra.mxu0 0.0
    %569 = vmatprep.subr.mxu0 0.0
    %570 = vmatpush1.msra.mxu0 %v231
    %571 = vmatprep.subr.mxu0 0.0
    %572 = vmatpush1.msra.mxu0 %v230
    %573 = vmatprep.subr.mxu0 0.0
    %574 = vmatpush1.msra.mxu0 %v229
    %575 = vmatprep.subr.mxu0 0.0
    %576 = vmatpush1.msra.mxu0 %v228
    %577 = vmatprep.subr.mxu0 0.0
    %578 = vmatpush2.msra.mxu0 0.0
    %579 = vmatprep.subr.mxu0 0.0
    %580 = vmatpush2.msra.mxu0 0.0
    %581 = vmatprep.subr.mxu0 0.0
    %582 = vmatpush2.msra.mxu0 0.0
    %583 = vmatprep.subr.mxu0 0.0
    %584 = vmatpush2.msra.mxu0 0.0
    %585 = vmatprep.subr.mxu0 0.0
    %586 = vmatpush2.msra.mxu0 0.0
    %587 = vmatprep.subr.mxu0 0.0
    %588 = vmatpush2.msra.mxu0 0.0
    %589 = vmatprep.subr.mxu0 0.0
    %590 = vmatpush2.msra.mxu0 0.0
    %591 = vmatprep.subr.mxu0 0.0
    %592 = vmatpush2.msra.mxu0 0.0
    %593 = vmatprep.subr.mxu0 0.0
    %594 = vmatpush2.msra.mxu0 0.0
    %595 = vmatprep.subr.mxu0 0.0
    %596 = vmatpush2.msra.mxu0 0.0
    %597 = vmatprep.subr.mxu0 0.0
    %598 = vmatpush2.msra.mxu0 0.0
    %599 = vmatprep.subr.mxu0 0.0
    %600 = vmatpush2.msra.mxu0 0.0
    %601 = vmatprep.subr.mxu0 0.0
    %602 = vmatpush2.msra.mxu0 0.0
    %603 = vmatprep.subr.mxu0 0.0
    %604 = vmatpush2.msra.mxu0 0.0
    %605 = vmatprep.subr.mxu0 0.0
    %606 = vmatpush2.msra.mxu0 0.0
    %607 = vmatprep.subr.mxu0 0.0
    %608 = vmatpush2.msra.mxu0 0.0
    %609 = vmatprep.mubr.f32.mxu0 0.0
    %610 = vmatmul.mubr.f32.gmra.mxu0 %v543
    %v611 = vpop.f32.mrf.mxu0
    %v612 = vadd.f32 %v215, %v611
    %v613 = vpop.f32.mrf.mxu0
    %614 = vdwg.mxu0
    %v615 = vsub.f32 0.0, %v612
    %v616 = vmul.f32 %v615, 1.442695
    %v617 = vpow.pop %v616
    %v618 = vadd.f32 %v617, 1.0
    %v619 = vrcp.pop %v618
    %v620 = vtanh.pop %v612
    %v621 = vmul.f32 %v619, %v437
    %623 = vrot.lane.b32.xlu0 %v620, 32
    %v624 = vpop.permute.xlu0 %623
    %v626 = vmul.f32 %v619, %v624
    %628 = vrot.lane.b32.xlu0 %v626, 32
    %v629 = vpop.permute.xlu0 %628
    %v631 = vadd.f32 %v621, %v629
    %v632 = vtanh.pop %v631
    %634 = vrot.lane.b32.xlu0 %v632, 32
    %v635 = vpop.permute.xlu0 %634
    %v637 = vmul.f32 %v619, %v635
    %vm638 = vcmp.gt.s32.totalorder %v223, 1
    %vm639 = vcmp.gt.s32.totalorder %v223, 6
    %v640 = vsel %vm638, 1, 0
    %641 = vset.pattern.permute.xlu0 0
    %642 = vperm.xlu0 %641, %v640
    %v643 = vpop.permute.xlu0 %642
    %vm644 = vcmp.eq.s32.totalorder %v643, 1
    %v645 = vsel %vm644, %v542, %v429
    %v646 = vsel %vm644, %v536, %v430
    %v647 = vsel %vm639, 1, 0
    %648 = vset.pattern.permute.xlu0 0
    %649 = vperm.xlu0 %648, %v647
    %v650 = vpop.permute.xlu0 %649
    %vm651 = vcmp.eq.s32.totalorder %v650, 1
    %v652 = vsel %vm651, %v637, %v436
    %v653 = vsel %vm651, %v631, %v437
    %v654 = vsel %vm644, %v542, 0.0
    %656 = vrot.lane.b32.xlu0 %v654, 64
    %v657 = vpop.permute.xlu0 %656
    %659 = vst.msk [vmem:[#allocation2 + $0x8] sm:$0xff] %vm232, %v657
    %v660 = vsel %vm651, %v637, 0.0
    %662 = vrot.lane.b32.xlu0 %v660, 64
    %v663 = vpop.permute.xlu0 %662
    %665 = vst.msk [vmem:[#allocation3 + $0x30] sm:$0xff] %vm232, %v663
    %667 = vrot.lane.b32.xlu0 %v645, 64
    %v668 = vpop.permute.xlu0 %667
    %v669 = vsel %vm232, %v668, 0
    %671 = vmatprep.subr.mxu0 0.0
    %672 = vmatpush1.msra.mxu0 0.0
    %673 = vmatprep.subr.mxu0 0.0
    %674 = vmatpush1.msra.mxu0 0.0
    %675 = vmatprep.subr.mxu0 0.0
    %676 = vmatpush1.msra.mxu0 0.0
    %677 = vmatprep.subr.mxu0 0.0
    %678 = vmatpush1.msra.mxu0 0.0
    %679 = vmatprep.subr.mxu0 0.0
    %680 = vmatpush1.msra.mxu0 0.0
    %681 = vmatprep.subr.mxu0 0.0
    %682 = vmatpush1.msra.mxu0 0.0
    %683 = vmatprep.subr.mxu0 0.0
    %684 = vmatpush1.msra.mxu0 0.0
    %685 = vmatprep.subr.mxu0 0.0
    %686 = vmatpush1.msra.mxu0 0.0
    %687 = vmatprep.subr.mxu0 0.0
    %688 = vmatpush1.msra.mxu0 0.0
    %689 = vmatprep.subr.mxu0 0.0
    %690 = vmatpush1.msra.mxu0 0.0
    %691 = vmatprep.subr.mxu0 0.0
    %692 = vmatpush1.msra.mxu0 0.0
    %693 = vmatprep.subr.mxu0 0.0
    %694 = vmatpush1.msra.mxu0 0.0
    %695 = vmatprep.subr.mxu0 0.0
    %696 = vmatpush1.msra.mxu0 %v227
    %697 = vmatprep.subr.mxu0 0.0
    %698 = vmatpush1.msra.mxu0 %v226
    %699 = vmatprep.subr.mxu0 0.0
    %700 = vmatpush1.msra.mxu0 %v225
    %701 = vmatprep.subr.mxu0 0.0
    %702 = vmatpush1.msra.mxu0 %v224
    %703 = vmatprep.subr.mxu0 0.0
    %704 = vmatpush2.msra.mxu0 0.0
    %705 = vmatprep.subr.mxu0 0.0
    %706 = vmatpush2.msra.mxu0 0.0
    %707 = vmatprep.subr.mxu0 0.0
    %708 = vmatpush2.msra.mxu0 0.0
    %709 = vmatprep.subr.mxu0 0.0
    %710 = vmatpush2.msra.mxu0 0.0
    %711 = vmatprep.subr.mxu0 0.0
    %712 = vmatpush2.msra.mxu0 0.0
    %713 = vmatprep.subr.mxu0 0.0
    %714 = vmatpush2.msra.mxu0 0.0
    %715 = vmatprep.subr.mxu0 0.0
    %716 = vmatpush2.msra.mxu0 0.0
    %717 = vmatprep.subr.mxu0 0.0
    %718 = vmatpush2.msra.mxu0 0.0
    %719 = vmatprep.subr.mxu0 0.0
    %720 = vmatpush2.msra.mxu0 0.0
    %721 = vmatprep.subr.mxu0 0.0
    %722 = vmatpush2.msra.mxu0 0.0
    %723 = vmatprep.subr.mxu0 0.0
    %724 = vmatpush2.msra.mxu0 0.0
    %725 = vmatprep.subr.mxu0 0.0
    %726 = vmatpush2.msra.mxu0 0.0
    %727 = vmatprep.subr.mxu0 0.0
    %728 = vmatpush2.msra.mxu0 0.0
    %729 = vmatprep.subr.mxu0 0.0
    %730 = vmatpush2.msra.mxu0 0.0
    %731 = vmatprep.subr.mxu0 0.0
    %732 = vmatpush2.msra.mxu0 0.0
    %733 = vmatprep.subr.mxu0 0.0
    %734 = vmatpush2.msra.mxu0 0.0
    %735 = vmatprep.mubr.f32.mxu0 0.0
    %736 = vmatmul.mubr.f32.gmra.mxu0 %v669
    %v737 = vpop.f32.mrf.mxu0
    %v738 = vadd.f32 %v189, %v737
    %v739 = vpop.f32.mrf.mxu0
    %740 = vdwg.mxu0
    %v741 = vsub.f32 0.0, %v738
    %v742 = vmul.f32 %v741, 1.442695
    %v743 = vpow.pop %v742
    %v744 = vadd.f32 %v743, 1.0
    %v745 = vrcp.pop %v744
    %v746 = vtanh.pop %v738
    %v747 = vmul.f32 %v745, %v646
    %749 = vrot.lane.b32.xlu0 %v746, 32
    %v750 = vpop.permute.xlu0 %749
    %v752 = vmul.f32 %v745, %v750
    %754 = vrot.lane.b32.xlu0 %v752, 32
    %v755 = vpop.permute.xlu0 %754
    %v757 = vadd.f32 %v747, %v755
    %v758 = vtanh.pop %v757
    %760 = vrot.lane.b32.xlu0 %v758, 32
    %v761 = vpop.permute.xlu0 %760
    %v763 = vmul.f32 %v745, %v761
    %765 = vrot.lane.b32.xlu0 %v652, 64
    %v766 = vpop.permute.xlu0 %765
    %v767 = vsel %vm232, %v766, 0
    %769 = vmatprep.subr.mxu0 0.0
    %770 = vmatpush1.msra.mxu0 0.0
    %771 = vmatprep.subr.mxu0 0.0
    %772 = vmatpush1.msra.mxu0 0.0
    %773 = vmatprep.subr.mxu0 0.0
    %774 = vmatpush1.msra.mxu0 0.0
    %775 = vmatprep.subr.mxu0 0.0
    %776 = vmatpush1.msra.mxu0 0.0
    %777 = vmatprep.subr.mxu0 0.0
    %778 = vmatpush1.msra.mxu0 0.0
    %779 = vmatprep.subr.mxu0 0.0
    %780 = vmatpush1.msra.mxu0 0.0
    %781 = vmatprep.subr.mxu0 0.0
    %782 = vmatpush1.msra.mxu0 0.0
    %783 = vmatprep.subr.mxu0 0.0
    %784 = vmatpush1.msra.mxu0 0.0
    %785 = vmatprep.subr.mxu0 0.0
    %786 = vmatpush1.msra.mxu0 0.0
    %787 = vmatprep.subr.mxu0 0.0
    %788 = vmatpush1.msra.mxu0 0.0
    %789 = vmatprep.subr.mxu0 0.0
    %790 = vmatpush1.msra.mxu0 0.0
    %791 = vmatprep.subr.mxu0 0.0
    %792 = vmatpush1.msra.mxu0 0.0
    %793 = vmatprep.subr.mxu0 0.0
    %794 = vmatpush1.msra.mxu0 %v231
    %795 = vmatprep.subr.mxu0 0.0
    %796 = vmatpush1.msra.mxu0 %v230
    %797 = vmatprep.subr.mxu0 0.0
    %798 = vmatpush1.msra.mxu0 %v229
    %799 = vmatprep.subr.mxu0 0.0
    %800 = vmatpush1.msra.mxu0 %v228
    %801 = vmatprep.subr.mxu0 0.0
    %802 = vmatpush2.msra.mxu0 0.0
    %803 = vmatprep.subr.mxu0 0.0
    %804 = vmatpush2.msra.mxu0 0.0
    %805 = vmatprep.subr.mxu0 0.0
    %806 = vmatpush2.msra.mxu0 0.0
    %807 = vmatprep.subr.mxu0 0.0
    %808 = vmatpush2.msra.mxu0 0.0
    %809 = vmatprep.subr.mxu0 0.0
    %810 = vmatpush2.msra.mxu0 0.0
    %811 = vmatprep.subr.mxu0 0.0
    %812 = vmatpush2.msra.mxu0 0.0
    %813 = vmatprep.subr.mxu0 0.0
    %814 = vmatpush2.msra.mxu0 0.0
    %815 = vmatprep.subr.mxu0 0.0
    %816 = vmatpush2.msra.mxu0 0.0
    %817 = vmatprep.subr.mxu0 0.0
    %818 = vmatpush2.msra.mxu0 0.0
    %819 = vmatprep.subr.mxu0 0.0
    %820 = vmatpush2.msra.mxu0 0.0
    %821 = vmatprep.subr.mxu0 0.0
    %822 = vmatpush2.msra.mxu0 0.0
    %823 = vmatprep.subr.mxu0 0.0
    %824 = vmatpush2.msra.mxu0 0.0
    %825 = vmatprep.subr.mxu0 0.0
    %826 = vmatpush2.msra.mxu0 0.0
    %827 = vmatprep.subr.mxu0 0.0
    %828 = vmatpush2.msra.mxu0 0.0
    %829 = vmatprep.subr.mxu0 0.0
    %830 = vmatpush2.msra.mxu0 0.0
    %831 = vmatprep.subr.mxu0 0.0
    %832 = vmatpush2.msra.mxu0 0.0
    %833 = vmatprep.mubr.f32.mxu0 0.0
    %834 = vmatmul.mubr.f32.gmra.mxu0 %v767
    %v835 = vpop.f32.mrf.mxu0
    %v836 = vadd.f32 %v209, %v835
    %v837 = vpop.f32.mrf.mxu0
    %838 = vdwg.mxu0
    %v839 = vsub.f32 0.0, %v836
    %v840 = vmul.f32 %v839, 1.442695
    %v841 = vpow.pop %v840
    %v842 = vadd.f32 %v841, 1.0
    %v843 = vrcp.pop %v842
    %v844 = vtanh.pop %v836
    %v845 = vmul.f32 %v843, %v653
    %847 = vrot.lane.b32.xlu0 %v844, 32
    %v848 = vpop.permute.xlu0 %847
    %v850 = vmul.f32 %v843, %v848
    %852 = vrot.lane.b32.xlu0 %v850, 32
    %v853 = vpop.permute.xlu0 %852
    %v855 = vadd.f32 %v845, %v853
    %v856 = vtanh.pop %v855
    %858 = vrot.lane.b32.xlu0 %v856, 32
    %v859 = vpop.permute.xlu0 %858
    %v861 = vmul.f32 %v843, %v859
    %vm862 = vcmp.gt.s32.totalorder %v223, 2
    %vm863 = vcmp.gt.s32.totalorder %v223, 5
    %v864 = vsel %vm862, 1, 0
    %865 = vset.pattern.permute.xlu0 0
    %866 = vperm.xlu0 %865, %v864
    %v867 = vpop.permute.xlu0 %866
    %vm868 = vcmp.eq.s32.totalorder %v867, 1
    %v869 = vsel %vm868, %v763, %v645
    %v870 = vsel %vm868, %v757, %v646
    %v871 = vsel %vm863, 1, 0
    %872 = vset.pattern.permute.xlu0 0
    %873 = vperm.xlu0 %872, %v871
    %v874 = vpop.permute.xlu0 %873
    %vm875 = vcmp.eq.s32.totalorder %v874, 1
    %v876 = vsel %vm875, %v861, %v652
    %v877 = vsel %vm875, %v855, %v653
    %v878 = vsel %vm868, %v763, 0.0
    %880 = vrot.lane.b32.xlu0 %v878, 64
    %v881 = vpop.permute.xlu0 %880
    %883 = vst.msk [vmem:[#allocation2 + $0x10] sm:$0xff] %vm232, %v881
    %v884 = vsel %vm875, %v861, 0.0
    %886 = vrot.lane.b32.xlu0 %v884, 64
    %v887 = vpop.permute.xlu0 %886
    %889 = vst.msk [vmem:[#allocation3 + $0x28] sm:$0xff] %vm232, %v887
    %891 = vrot.lane.b32.xlu0 %v869, 64
    %v892 = vpop.permute.xlu0 %891
    %v893 = vsel %vm232, %v892, 0
    %895 = vmatprep.subr.mxu0 0.0
    %896 = vmatpush1.msra.mxu0 0.0
    %897 = vmatprep.subr.mxu0 0.0
    %898 = vmatpush1.msra.mxu0 0.0
    %899 = vmatprep.subr.mxu0 0.0
    %900 = vmatpush1.msra.mxu0 0.0
    %901 = vmatprep.subr.mxu0 0.0
    %902 = vmatpush1.msra.mxu0 0.0
    %903 = vmatprep.subr.mxu0 0.0
    %904 = vmatpush1.msra.mxu0 0.0
    %905 = vmatprep.subr.mxu0 0.0
    %906 = vmatpush1.msra.mxu0 0.0
    %907 = vmatprep.subr.mxu0 0.0
    %908 = vmatpush1.msra.mxu0 0.0
    %909 = vmatprep.subr.mxu0 0.0
    %910 = vmatpush1.msra.mxu0 0.0
    %911 = vmatprep.subr.mxu0 0.0
    %912 = vmatpush1.msra.mxu0 0.0
    %913 = vmatprep.subr.mxu0 0.0
    %914 = vmatpush1.msra.mxu0 0.0
    %915 = vmatprep.subr.mxu0 0.0
    %916 = vmatpush1.msra.mxu0 0.0
    %917 = vmatprep.subr.mxu0 0.0
    %918 = vmatpush1.msra.mxu0 0.0
    %919 = vmatprep.subr.mxu0 0.0
    %920 = vmatpush1.msra.mxu0 %v227
    %921 = vmatprep.subr.mxu0 0.0
    %922 = vmatpush1.msra.mxu0 %v226
    %923 = vmatprep.subr.mxu0 0.0
    %924 = vmatpush1.msra.mxu0 %v225
    %925 = vmatprep.subr.mxu0 0.0
    %926 = vmatpush1.msra.mxu0 %v224
    %927 = vmatprep.subr.mxu0 0.0
    %928 = vmatpush2.msra.mxu0 0.0
    %929 = vmatprep.subr.mxu0 0.0
    %930 = vmatpush2.msra.mxu0 0.0
    %931 = vmatprep.subr.mxu0 0.0
    %932 = vmatpush2.msra.mxu0 0.0
    %933 = vmatprep.subr.mxu0 0.0
    %934 = vmatpush2.msra.mxu0 0.0
    %935 = vmatprep.subr.mxu0 0.0
    %936 = vmatpush2.msra.mxu0 0.0
    %937 = vmatprep.subr.mxu0 0.0
    %938 = vmatpush2.msra.mxu0 0.0
    %939 = vmatprep.subr.mxu0 0.0
    %940 = vmatpush2.msra.mxu0 0.0
    %941 = vmatprep.subr.mxu0 0.0
    %942 = vmatpush2.msra.mxu0 0.0
    %943 = vmatprep.subr.mxu0 0.0
    %944 = vmatpush2.msra.mxu0 0.0
    %945 = vmatprep.subr.mxu0 0.0
    %946 = vmatpush2.msra.mxu0 0.0
    %947 = vmatprep.subr.mxu0 0.0
    %948 = vmatpush2.msra.mxu0 0.0
    %949 = vmatprep.subr.mxu0 0.0
    %950 = vmatpush2.msra.mxu0 0.0
    %951 = vmatprep.subr.mxu0 0.0
    %952 = vmatpush2.msra.mxu0 0.0
    %953 = vmatprep.subr.mxu0 0.0
    %954 = vmatpush2.msra.mxu0 0.0
    %955 = vmatprep.subr.mxu0 0.0
    %956 = vmatpush2.msra.mxu0 0.0
    %957 = vmatprep.subr.mxu0 0.0
    %958 = vmatpush2.msra.mxu0 0.0
    %959 = vmatprep.mubr.f32.mxu0 0.0
    %960 = vmatmul.mubr.f32.gmra.mxu0 %v893
    %v961 = vpop.f32.mrf.mxu0
    %v962 = vadd.f32 %v195, %v961
    %v963 = vpop.f32.mrf.mxu0
    %964 = vdwg.mxu0
    %v965 = vsub.f32 0.0, %v962
    %v966 = vmul.f32 %v965, 1.442695
    %v967 = vpow.pop %v966
    %v968 = vadd.f32 %v967, 1.0
    %v969 = vrcp.pop %v968
    %v970 = vtanh.pop %v962
    %v971 = vmul.f32 %v969, %v870
    %973 = vrot.lane.b32.xlu0 %v970, 32
    %v974 = vpop.permute.xlu0 %973
    %v976 = vmul.f32 %v969, %v974
    %978 = vrot.lane.b32.xlu0 %v976, 32
    %v979 = vpop.permute.xlu0 %978
    %v981 = vadd.f32 %v971, %v979
    %v982 = vtanh.pop %v981
    %984 = vrot.lane.b32.xlu0 %v982, 32
    %v985 = vpop.permute.xlu0 %984
    %v987 = vmul.f32 %v969, %v985
    %989 = vrot.lane.b32.xlu0 %v876, 64
    %v990 = vpop.permute.xlu0 %989
    %v991 = vsel %vm232, %v990, 0
    %993 = vmatprep.subr.mxu0 0.0
    %994 = vmatpush1.msra.mxu0 0.0
    %995 = vmatprep.subr.mxu0 0.0
    %996 = vmatpush1.msra.mxu0 0.0
    %997 = vmatprep.subr.mxu0 0.0
    %998 = vmatpush1.msra.mxu0 0.0
    %999 = vmatprep.subr.mxu0 0.0
    %1000 = vmatpush1.msra.mxu0 0.0
    %1001 = vmatprep.subr.mxu0 0.0
    %1002 = vmatpush1.msra.mxu0 0.0
    %1003 = vmatprep.subr.mxu0 0.0
    %1004 = vmatpush1.msra.mxu0 0.0
    %1005 = vmatprep.subr.mxu0 0.0
    %1006 = vmatpush1.msra.mxu0 0.0
    %1007 = vmatprep.subr.mxu0 0.0
    %1008 = vmatpush1.msra.mxu0 0.0
    %1009 = vmatprep.subr.mxu0 0.0
    %1010 = vmatpush1.msra.mxu0 0.0
    %1011 = vmatprep.subr.mxu0 0.0
    %1012 = vmatpush1.msra.mxu0 0.0
    %1013 = vmatprep.subr.mxu0 0.0
    %1014 = vmatpush1.msra.mxu0 0.0
    %1015 = vmatprep.subr.mxu0 0.0
    %1016 = vmatpush1.msra.mxu0 0.0
    %1017 = vmatprep.subr.mxu0 0.0
    %1018 = vmatpush1.msra.mxu0 %v231
    %1019 = vmatprep.subr.mxu0 0.0
    %1020 = vmatpush1.msra.mxu0 %v230
    %1021 = vmatprep.subr.mxu0 0.0
    %1022 = vmatpush1.msra.mxu0 %v229
    %1023 = vmatprep.subr.mxu0 0.0
    %1024 = vmatpush1.msra.mxu0 %v228
    %1025 = vmatprep.subr.mxu0 0.0
    %1026 = vmatpush2.msra.mxu0 0.0
    %1027 = vmatprep.subr.mxu0 0.0
    %1028 = vmatpush2.msra.mxu0 0.0
    %1029 = vmatprep.subr.mxu0 0.0
    %1030 = vmatpush2.msra.mxu0 0.0
    %1031 = vmatprep.subr.mxu0 0.0
    %1032 = vmatpush2.msra.mxu0 0.0
    %1033 = vmatprep.subr.mxu0 0.0
    %1034 = vmatpush2.msra.mxu0 0.0
    %1035 = vmatprep.subr.mxu0 0.0
    %1036 = vmatpush2.msra.mxu0 0.0
    %1037 = vmatprep.subr.mxu0 0.0
    %1038 = vmatpush2.msra.mxu0 0.0
    %1039 = vmatprep.subr.mxu0 0.0
    %1040 = vmatpush2.msra.mxu0 0.0
    %1041 = vmatprep.subr.mxu0 0.0
    %1042 = vmatpush2.msra.mxu0 0.0
    %1043 = vmatprep.subr.mxu0 0.0
    %1044 = vmatpush2.msra.mxu0 0.0
    %1045 = vmatprep.subr.mxu0 0.0
    %1046 = vmatpush2.msra.mxu0 0.0
    %1047 = vmatprep.subr.mxu0 0.0
    %1048 = vmatpush2.msra.mxu0 0.0
    %1049 = vmatprep.subr.mxu0 0.0
    %1050 = vmatpush2.msra.mxu0 0.0
    %1051 = vmatprep.subr.mxu0 0.0
    %1052 = vmatpush2.msra.mxu0 0.0
    %1053 = vmatprep.subr.mxu0 0.0
    %1054 = vmatpush2.msra.mxu0 0.0
    %1055 = vmatprep.subr.mxu0 0.0
    %1056 = vmatpush2.msra.mxu0 0.0
    %1057 = vmatprep.mubr.f32.mxu0 0.0
    %1058 = vmatmul.mubr.f32.gmra.mxu0 %v991
    %v1059 = vpop.f32.mrf.mxu0
    %v1060 = vadd.f32 %v203, %v1059
    %v1061 = vpop.f32.mrf.mxu0
    %1062 = vdwg.mxu0
    %v1063 = vsub.f32 0.0, %v1060
    %v1064 = vmul.f32 %v1063, 1.442695
    %v1065 = vpow.pop %v1064
    %v1066 = vadd.f32 %v1065, 1.0
    %v1067 = vrcp.pop %v1066
    %v1068 = vtanh.pop %v1060
    %v1069 = vmul.f32 %v1067, %v877
    %1071 = vrot.lane.b32.xlu0 %v1068, 32
    %v1072 = vpop.permute.xlu0 %1071
    %v1074 = vmul.f32 %v1067, %v1072
    %1076 = vrot.lane.b32.xlu0 %v1074, 32
    %v1077 = vpop.permute.xlu0 %1076
    %v1079 = vadd.f32 %v1069, %v1077
    %v1080 = vtanh.pop %v1079
    %1082 = vrot.lane.b32.xlu0 %v1080, 32
    %v1083 = vpop.permute.xlu0 %1082
    %v1085 = vmul.f32 %v1067, %v1083
    %vm1086 = vcmp.gt.s32.totalorder %v223, 3
    %vm1087 = vcmp.gt.s32.totalorder %v223, 4
    %v1088 = vsel %vm1086, 1, 0
    %1089 = vset.pattern.permute.xlu0 0
    %1090 = vperm.xlu0 %1089, %v1088
    %v1091 = vpop.permute.xlu0 %1090
    %vm1092 = vcmp.eq.s32.totalorder %v1091, 1
    %v1093 = vsel %vm1092, %v987, %v869
    %v1094 = vsel %vm1092, %v981, %v870
    %v1095 = vsel %vm1087, 1, 0
    %1096 = vset.pattern.permute.xlu0 0
    %1097 = vperm.xlu0 %1096, %v1095
    %v1098 = vpop.permute.xlu0 %1097
    %vm1099 = vcmp.eq.s32.totalorder %v1098, 1
    %v1100 = vsel %vm1099, %v1085, %v876
    %v1101 = vsel %vm1099, %v1079, %v877
    %v1102 = vsel %vm1092, %v987, 0.0
    %1104 = vrot.lane.b32.xlu0 %v1102, 64
    %v1105 = vpop.permute.xlu0 %1104
    %1107 = vst.msk [vmem:[#allocation2 + $0x18] sm:$0xff] %vm232, %v1105
    %v1108 = vsel %vm1099, %v1085, 0.0
    %1110 = vrot.lane.b32.xlu0 %v1108, 64
    %v1111 = vpop.permute.xlu0 %1110
    %1113 = vst.msk [vmem:[#allocation3 + $0x20] sm:$0xff] %vm232, %v1111
    %1115 = vrot.lane.b32.xlu0 %v1093, 64
    %v1116 = vpop.permute.xlu0 %1115
    %v1117 = vsel %vm232, %v1116, 0
    %1119 = vmatprep.subr.mxu0 0.0
    %1120 = vmatpush1.msra.mxu0 0.0
    %1121 = vmatprep.subr.mxu0 0.0
    %1122 = vmatpush1.msra.mxu0 0.0
    %1123 = vmatprep.subr.mxu0 0.0
    %1124 = vmatpush1.msra.mxu0 0.0
    %1125 = vmatprep.subr.mxu0 0.0
    %1126 = vmatpush1.msra.mxu0 0.0
    %1127 = vmatprep.subr.mxu0 0.0
    %1128 = vmatpush1.msra.mxu0 0.0
    %1129 = vmatprep.subr.mxu0 0.0
    %1130 = vmatpush1.msra.mxu0 0.0
    %1131 = vmatprep.subr.mxu0 0.0
    %1132 = vmatpush1.msra.mxu0 0.0
    %1133 = vmatprep.subr.mxu0 0.0
    %1134 = vmatpush1.msra.mxu0 0.0
    %1135 = vmatprep.subr.mxu0 0.0
    %1136 = vmatpush1.msra.mxu0 0.0
    %1137 = vmatprep.subr.mxu0 0.0
    %1138 = vmatpush1.msra.mxu0 0.0
    %1139 = vmatprep.subr.mxu0 0.0
    %1140 = vmatpush1.msra.mxu0 0.0
    %1141 = vmatprep.subr.mxu0 0.0
    %1142 = vmatpush1.msra.mxu0 0.0
    %1143 = vmatprep.subr.mxu0 0.0
    %1144 = vmatpush1.msra.mxu0 %v227
    %1145 = vmatprep.subr.mxu0 0.0
    %1146 = vmatpush1.msra.mxu0 %v226
    %1147 = vmatprep.subr.mxu0 0.0
    %1148 = vmatpush1.msra.mxu0 %v225
    %1149 = vmatprep.subr.mxu0 0.0
    %1150 = vmatpush1.msra.mxu0 %v224
    %1151 = vmatprep.subr.mxu0 0.0
    %1152 = vmatpush2.msra.mxu0 0.0
    %1153 = vmatprep.subr.mxu0 0.0
    %1154 = vmatpush2.msra.mxu0 0.0
    %1155 = vmatprep.subr.mxu0 0.0
    %1156 = vmatpush2.msra.mxu0 0.0
    %1157 = vmatprep.subr.mxu0 0.0
    %1158 = vmatpush2.msra.mxu0 0.0
    %1159 = vmatprep.subr.mxu0 0.0
    %1160 = vmatpush2.msra.mxu0 0.0
    %1161 = vmatprep.subr.mxu0 0.0
    %1162 = vmatpush2.msra.mxu0 0.0
    %1163 = vmatprep.subr.mxu0 0.0
    %1164 = vmatpush2.msra.mxu0 0.0
    %1165 = vmatprep.subr.mxu0 0.0
    %1166 = vmatpush2.msra.mxu0 0.0
    %1167 = vmatprep.subr.mxu0 0.0
    %1168 = vmatpush2.msra.mxu0 0.0
    %1169 = vmatprep.subr.mxu0 0.0
    %1170 = vmatpush2.msra.mxu0 0.0
    %1171 = vmatprep.subr.mxu0 0.0
    %1172 = vmatpush2.msra.mxu0 0.0
    %1173 = vmatprep.subr.mxu0 0.0
    %1174 = vmatpush2.msra.mxu0 0.0
    %1175 = vmatprep.subr.mxu0 0.0
    %1176 = vmatpush2.msra.mxu0 0.0
    %1177 = vmatprep.subr.mxu0 0.0
    %1178 = vmatpush2.msra.mxu0 0.0
    %1179 = vmatprep.subr.mxu0 0.0
    %1180 = vmatpush2.msra.mxu0 0.0
    %1181 = vmatprep.subr.mxu0 0.0
    %1182 = vmatpush2.msra.mxu0 0.0
    %1183 = vmatprep.mubr.f32.mxu0 0.0
    %1184 = vmatmul.mubr.f32.gmra.mxu0 %v1117
    %v1185 = vpop.f32.mrf.mxu0
    %v1186 = vadd.f32 %v201, %v1185
    %v1187 = vpop.f32.mrf.mxu0
    %1188 = vdwg.mxu0
    %v1189 = vsub.f32 0.0, %v1186
    %v1190 = vmul.f32 %v1189, 1.442695
    %v1191 = vpow.pop %v1190
    %v1192 = vadd.f32 %v1191, 1.0
    %v1193 = vrcp.pop %v1192
    %v1194 = vtanh.pop %v1186
    %v1195 = vmul.f32 %v1193, %v1094
    %1197 = vrot.lane.b32.xlu0 %v1194, 32
    %v1198 = vpop.permute.xlu0 %1197
    %v1200 = vmul.f32 %v1193, %v1198
    %1202 = vrot.lane.b32.xlu0 %v1200, 32
    %v1203 = vpop.permute.xlu0 %1202
    %v1205 = vadd.f32 %v1195, %v1203
    %v1206 = vtanh.pop %v1205
    %1208 = vrot.lane.b32.xlu0 %v1206, 32
    %v1209 = vpop.permute.xlu0 %1208
    %v1211 = vmul.f32 %v1193, %v1209
    %1213 = vrot.lane.b32.xlu0 %v1100, 64
    %v1214 = vpop.permute.xlu0 %1213
    %v1215 = vsel %vm232, %v1214, 0
    %1217 = vmatprep.subr.mxu0 0.0
    %1218 = vmatpush1.msra.mxu0 0.0
    %1219 = vmatprep.subr.mxu0 0.0
    %1220 = vmatpush1.msra.mxu0 0.0
    %1221 = vmatprep.subr.mxu0 0.0
    %1222 = vmatpush1.msra.mxu0 0.0
    %1223 = vmatprep.subr.mxu0 0.0
    %1224 = vmatpush1.msra.mxu0 0.0
    %1225 = vmatprep.subr.mxu0 0.0
    %1226 = vmatpush1.msra.mxu0 0.0
    %1227 = vmatprep.subr.mxu0 0.0
    %1228 = vmatpush1.msra.mxu0 0.0
    %1229 = vmatprep.subr.mxu0 0.0
    %1230 = vmatpush1.msra.mxu0 0.0
    %1231 = vmatprep.subr.mxu0 0.0
    %1232 = vmatpush1.msra.mxu0 0.0
    %1233 = vmatprep.subr.mxu0 0.0
    %1234 = vmatpush1.msra.mxu0 0.0
    %1235 = vmatprep.subr.mxu0 0.0
    %1236 = vmatpush1.msra.mxu0 0.0
    %1237 = vmatprep.subr.mxu0 0.0
    %1238 = vmatpush1.msra.mxu0 0.0
    %1239 = vmatprep.subr.mxu0 0.0
    %1240 = vmatpush1.msra.mxu0 0.0
    %1241 = vmatprep.subr.mxu0 0.0
    %1242 = vmatpush1.msra.mxu0 %v231
    %1243 = vmatprep.subr.mxu0 0.0
    %1244 = vmatpush1.msra.mxu0 %v230
    %1245 = vmatprep.subr.mxu0 0.0
    %1246 = vmatpush1.msra.mxu0 %v229
    %1247 = vmatprep.subr.mxu0 0.0
    %1248 = vmatpush1.msra.mxu0 %v228
    %1249 = vmatprep.subr.mxu0 0.0
    %1250 = vmatpush2.msra.mxu0 0.0
    %1251 = vmatprep.subr.mxu0 0.0
    %1252 = vmatpush2.msra.mxu0 0.0
    %1253 = vmatprep.subr.mxu0 0.0
    %1254 = vmatpush2.msra.mxu0 0.0
    %1255 = vmatprep.subr.mxu0 0.0
    %1256 = vmatpush2.msra.mxu0 0.0
    %1257 = vmatprep.subr.mxu0 0.0
    %1258 = vmatpush2.msra.mxu0 0.0
    %1259 = vmatprep.subr.mxu0 0.0
    %1260 = vmatpush2.msra.mxu0 0.0
    %1261 = vmatprep.subr.mxu0 0.0
    %1262 = vmatpush2.msra.mxu0 0.0
    %1263 = vmatprep.subr.mxu0 0.0
    %1264 = vmatpush2.msra.mxu0 0.0
    %1265 = vmatprep.subr.mxu0 0.0
    %1266 = vmatpush2.msra.mxu0 0.0
    %1267 = vmatprep.subr.mxu0 0.0
    %1268 = vmatpush2.msra.mxu0 0.0
    %1269 = vmatprep.subr.mxu0 0.0
    %1270 = vmatpush2.msra.mxu0 0.0
    %1271 = vmatprep.subr.mxu0 0.0
    %1272 = vmatpush2.msra.mxu0 0.0
    %1273 = vmatprep.subr.mxu0 0.0
    %1274 = vmatpush2.msra.mxu0 0.0
    %1275 = vmatprep.subr.mxu0 0.0
    %1276 = vmatpush2.msra.mxu0 0.0
    %1277 = vmatprep.subr.mxu0 0.0
    %1278 = vmatpush2.msra.mxu0 0.0
    %1279 = vmatprep.subr.mxu0 0.0
    %1280 = vmatpush2.msra.mxu0 0.0
    %1281 = vmatprep.mubr.f32.mxu0 0.0
    %1282 = vmatmul.mubr.f32.gmra.mxu0 %v1215
    %v1283 = vpop.f32.mrf.mxu0
    %v1284 = vadd.f32 %v197, %v1283
    %v1285 = vpop.f32.mrf.mxu0
    %1286 = vdwg.mxu0
    %v1287 = vsub.f32 0.0, %v1284
    %v1288 = vmul.f32 %v1287, 1.442695
    %v1289 = vpow.pop %v1288
    %v1290 = vadd.f32 %v1289, 1.0
    %v1291 = vrcp.pop %v1290
    %v1292 = vtanh.pop %v1284
    %v1293 = vmul.f32 %v1291, %v1101
    %1295 = vrot.lane.b32.xlu0 %v1292, 32
    %v1296 = vpop.permute.xlu0 %1295
    %v1298 = vmul.f32 %v1291, %v1296
    %1300 = vrot.lane.b32.xlu0 %v1298, 32
    %v1301 = vpop.permute.xlu0 %1300
    %v1303 = vadd.f32 %v1293, %v1301
    %v1304 = vtanh.pop %v1303
    %1306 = vrot.lane.b32.xlu0 %v1304, 32
    %v1307 = vpop.permute.xlu0 %1306
    %v1309 = vmul.f32 %v1291, %v1307
    %v1310 = vsel %vm1099, %v1211, %v1093
    %v1311 = vsel %vm1099, %v1205, %v1094
    %v1312 = vsel %vm1092, %v1309, %v1100
    %v1313 = vsel %vm1092, %v1303, %v1101
    %v1314 = vsel %vm1099, %v1211, 0.0
    %1316 = vrot.lane.b32.xlu0 %v1314, 64
    %v1317 = vpop.permute.xlu0 %1316
    %1319 = vst.msk [vmem:[#allocation2 + $0x20] sm:$0xff] %vm232, %v1317
    %v1320 = vsel %vm1092, %v1309, 0.0
    %1322 = vrot.lane.b32.xlu0 %v1320, 64
    %v1323 = vpop.permute.xlu0 %1322
    %1325 = vst.msk [vmem:[#allocation3 + $0x18] sm:$0xff] %vm232, %v1323
    %1327 = vrot.lane.b32.xlu0 %v1310, 64
    %v1328 = vpop.permute.xlu0 %1327
    %v1329 = vsel %vm232, %v1328, 0
    %1331 = vmatprep.subr.mxu0 0.0
    %1332 = vmatpush1.msra.mxu0 0.0
    %1333 = vmatprep.subr.mxu0 0.0
    %1334 = vmatpush1.msra.mxu0 0.0
    %1335 = vmatprep.subr.mxu0 0.0
    %1336 = vmatpush1.msra.mxu0 0.0
    %1337 = vmatprep.subr.mxu0 0.0
    %1338 = vmatpush1.msra.mxu0 0.0
    %1339 = vmatprep.subr.mxu0 0.0
    %1340 = vmatpush1.msra.mxu0 0.0
    %1341 = vmatprep.subr.mxu0 0.0
    %1342 = vmatpush1.msra.mxu0 0.0
    %1343 = vmatprep.subr.mxu0 0.0
    %1344 = vmatpush1.msra.mxu0 0.0
    %1345 = vmatprep.subr.mxu0 0.0
    %1346 = vmatpush1.msra.mxu0 0.0
    %1347 = vmatprep.subr.mxu0 0.0
    %1348 = vmatpush1.msra.mxu0 0.0
    %1349 = vmatprep.subr.mxu0 0.0
    %1350 = vmatpush1.msra.mxu0 0.0
    %1351 = vmatprep.subr.mxu0 0.0
    %1352 = vmatpush1.msra.mxu0 0.0
    %1353 = vmatprep.subr.mxu0 0.0
    %1354 = vmatpush1.msra.mxu0 0.0
    %1355 = vmatprep.subr.mxu0 0.0
    %1356 = vmatpush1.msra.mxu0 %v227
    %1357 = vmatprep.subr.mxu0 0.0
    %1358 = vmatpush1.msra.mxu0 %v226
    %1359 = vmatprep.subr.mxu0 0.0
    %1360 = vmatpush1.msra.mxu0 %v225
    %1361 = vmatprep.subr.mxu0 0.0
    %1362 = vmatpush1.msra.mxu0 %v224
    %1363 = vmatprep.subr.mxu0 0.0
    %1364 = vmatpush2.msra.mxu0 0.0
    %1365 = vmatprep.subr.mxu0 0.0
    %1366 = vmatpush2.msra.mxu0 0.0
    %1367 = vmatprep.subr.mxu0 0.0
    %1368 = vmatpush2.msra.mxu0 0.0
    %1369 = vmatprep.subr.mxu0 0.0
    %1370 = vmatpush2.msra.mxu0 0.0
    %1371 = vmatprep.subr.mxu0 0.0
    %1372 = vmatpush2.msra.mxu0 0.0
    %1373 = vmatprep.subr.mxu0 0.0
    %1374 = vmatpush2.msra.mxu0 0.0
    %1375 = vmatprep.subr.mxu0 0.0
    %1376 = vmatpush2.msra.mxu0 0.0
    %1377 = vmatprep.subr.mxu0 0.0
    %1378 = vmatpush2.msra.mxu0 0.0
    %1379 = vmatprep.subr.mxu0 0.0
    %1380 = vmatpush2.msra.mxu0 0.0
    %1381 = vmatprep.subr.mxu0 0.0
    %1382 = vmatpush2.msra.mxu0 0.0
    %1383 = vmatprep.subr.mxu0 0.0
    %1384 = vmatpush2.msra.mxu0 0.0
    %1385 = vmatprep.subr.mxu0 0.0
    %1386 = vmatpush2.msra.mxu0 0.0
    %1387 = vmatprep.subr.mxu0 0.0
    %1388 = vmatpush2.msra.mxu0 0.0
    %1389 = vmatprep.subr.mxu0 0.0
    %1390 = vmatpush2.msra.mxu0 0.0
    %1391 = vmatprep.subr.mxu0 0.0
    %1392 = vmatpush2.msra.mxu0 0.0
    %1393 = vmatprep.subr.mxu0 0.0
    %1394 = vmatpush2.msra.mxu0 0.0
    %1395 = vmatprep.mubr.f32.mxu0 0.0
    %1396 = vmatmul.mubr.f32.gmra.mxu0 %v1329
    %v1397 = vpop.f32.mrf.mxu0
    %v1398 = vadd.f32 %v207, %v1397
    %v1399 = vpop.f32.mrf.mxu0
    %1400 = vdwg.mxu0
    %v1401 = vsub.f32 0.0, %v1398
    %v1402 = vmul.f32 %v1401, 1.442695
    %v1403 = vpow.pop %v1402
    %v1404 = vadd.f32 %v1403, 1.0
    %v1405 = vrcp.pop %v1404
    %v1406 = vtanh.pop %v1398
    %v1407 = vmul.f32 %v1405, %v1311
    %1409 = vrot.lane.b32.xlu0 %v1406, 32
    %v1410 = vpop.permute.xlu0 %1409
    %v1412 = vmul.f32 %v1405, %v1410
    %1414 = vrot.lane.b32.xlu0 %v1412, 32
    %v1415 = vpop.permute.xlu0 %1414
    %v1417 = vadd.f32 %v1407, %v1415
    %v1418 = vtanh.pop %v1417
    %1420 = vrot.lane.b32.xlu0 %v1418, 32
    %v1421 = vpop.permute.xlu0 %1420
    %v1423 = vmul.f32 %v1405, %v1421
    %1425 = vrot.lane.b32.xlu0 %v1312, 64
    %v1426 = vpop.permute.xlu0 %1425
    %v1427 = vsel %vm232, %v1426, 0
    %1429 = vmatprep.subr.mxu0 0.0
    %1430 = vmatpush1.msra.mxu0 0.0
    %1431 = vmatprep.subr.mxu0 0.0
    %1432 = vmatpush1.msra.mxu0 0.0
    %1433 = vmatprep.subr.mxu0 0.0
    %1434 = vmatpush1.msra.mxu0 0.0
    %1435 = vmatprep.subr.mxu0 0.0
    %1436 = vmatpush1.msra.mxu0 0.0
    %1437 = vmatprep.subr.mxu0 0.0
    %1438 = vmatpush1.msra.mxu0 0.0
    %1439 = vmatprep.subr.mxu0 0.0
    %1440 = vmatpush1.msra.mxu0 0.0
    %1441 = vmatprep.subr.mxu0 0.0
    %1442 = vmatpush1.msra.mxu0 0.0
    %1443 = vmatprep.subr.mxu0 0.0
    %1444 = vmatpush1.msra.mxu0 0.0
    %1445 = vmatprep.subr.mxu0 0.0
    %1446 = vmatpush1.msra.mxu0 0.0
    %1447 = vmatprep.subr.mxu0 0.0
    %1448 = vmatpush1.msra.mxu0 0.0
    %1449 = vmatprep.subr.mxu0 0.0
    %1450 = vmatpush1.msra.mxu0 0.0
    %1451 = vmatprep.subr.mxu0 0.0
    %1452 = vmatpush1.msra.mxu0 0.0
    %1453 = vmatprep.subr.mxu0 0.0
    %1454 = vmatpush1.msra.mxu0 %v231
    %1455 = vmatprep.subr.mxu0 0.0
    %1456 = vmatpush1.msra.mxu0 %v230
    %1457 = vmatprep.subr.mxu0 0.0
    %1458 = vmatpush1.msra.mxu0 %v229
    %1459 = vmatprep.subr.mxu0 0.0
    %1460 = vmatpush1.msra.mxu0 %v228
    %1461 = vmatprep.subr.mxu0 0.0
    %1462 = vmatpush2.msra.mxu0 0.0
    %1463 = vmatprep.subr.mxu0 0.0
    %1464 = vmatpush2.msra.mxu0 0.0
    %1465 = vmatprep.subr.mxu0 0.0
    %1466 = vmatpush2.msra.mxu0 0.0
    %1467 = vmatprep.subr.mxu0 0.0
    %1468 = vmatpush2.msra.mxu0 0.0
    %1469 = vmatprep.subr.mxu0 0.0
    %1470 = vmatpush2.msra.mxu0 0.0
    %1471 = vmatprep.subr.mxu0 0.0
    %1472 = vmatpush2.msra.mxu0 0.0
    %1473 = vmatprep.subr.mxu0 0.0
    %1474 = vmatpush2.msra.mxu0 0.0
    %1475 = vmatprep.subr.mxu0 0.0
    %1476 = vmatpush2.msra.mxu0 0.0
    %1477 = vmatprep.subr.mxu0 0.0
    %1478 = vmatpush2.msra.mxu0 0.0
    %1479 = vmatprep.subr.mxu0 0.0
    %1480 = vmatpush2.msra.mxu0 0.0
    %1481 = vmatprep.subr.mxu0 0.0
    %1482 = vmatpush2.msra.mxu0 0.0
    %1483 = vmatprep.subr.mxu0 0.0
    %1484 = vmatpush2.msra.mxu0 0.0
    %1485 = vmatprep.subr.mxu0 0.0
    %1486 = vmatpush2.msra.mxu0 0.0
    %1487 = vmatprep.subr.mxu0 0.0
    %1488 = vmatpush2.msra.mxu0 0.0
    %1489 = vmatprep.subr.mxu0 0.0
    %1490 = vmatpush2.msra.mxu0 0.0
    %1491 = vmatprep.subr.mxu0 0.0
    %1492 = vmatpush2.msra.mxu0 0.0
    %1493 = vmatprep.mubr.f32.mxu0 0.0
    %1494 = vmatmul.mubr.f32.gmra.mxu0 %v1427
    %v1495 = vpop.f32.mrf.mxu0
    %v1496 = vadd.f32 %v191, %v1495
    %v1497 = vpop.f32.mrf.mxu0
    %1498 = vdwg.mxu0
    %v1499 = vsub.f32 0.0, %v1496
    %v1500 = vmul.f32 %v1499, 1.442695
    %v1501 = vpow.pop %v1500
    %v1502 = vadd.f32 %v1501, 1.0
    %v1503 = vrcp.pop %v1502
    %v1504 = vtanh.pop %v1496
    %v1505 = vmul.f32 %v1503, %v1313
    %1507 = vrot.lane.b32.xlu0 %v1504, 32
    %v1508 = vpop.permute.xlu0 %1507
    %v1510 = vmul.f32 %v1503, %v1508
    %1512 = vrot.lane.b32.xlu0 %v1510, 32
    %v1513 = vpop.permute.xlu0 %1512
    %v1515 = vadd.f32 %v1505, %v1513
    %v1516 = vtanh.pop %v1515
    %1518 = vrot.lane.b32.xlu0 %v1516, 32
    %v1519 = vpop.permute.xlu0 %1518
    %v1521 = vmul.f32 %v1503, %v1519
    %v1522 = vsel %vm875, %v1423, %v1310
    %v1523 = vsel %vm875, %v1417, %v1311
    %v1524 = vsel %vm868, %v1521, %v1312
    %v1525 = vsel %vm868, %v1515, %v1313
    %v1526 = vsel %vm875, %v1423, 0.0
    %1528 = vrot.lane.b32.xlu0 %v1526, 64
    %v1529 = vpop.permute.xlu0 %1528
    %1531 = vst.msk [vmem:[#allocation2 + $0x28] sm:$0xff] %vm232, %v1529
    %v1532 = vsel %vm868, %v1521, 0.0
    %1534 = vrot.lane.b32.xlu0 %v1532, 64
    %v1535 = vpop.permute.xlu0 %1534
    %1537 = vst.msk [vmem:[#allocation3 + $0x10] sm:$0xff] %vm232, %v1535
    %1539 = vrot.lane.b32.xlu0 %v1522, 64
    %v1540 = vpop.permute.xlu0 %1539
    %v1541 = vsel %vm232, %v1540, 0
    %1543 = vmatprep.subr.mxu0 0.0
    %1544 = vmatpush1.msra.mxu0 0.0
    %1545 = vmatprep.subr.mxu0 0.0
    %1546 = vmatpush1.msra.mxu0 0.0
    %1547 = vmatprep.subr.mxu0 0.0
    %1548 = vmatpush1.msra.mxu0 0.0
    %1549 = vmatprep.subr.mxu0 0.0
    %1550 = vmatpush1.msra.mxu0 0.0
    %1551 = vmatprep.subr.mxu0 0.0
    %1552 = vmatpush1.msra.mxu0 0.0
    %1553 = vmatprep.subr.mxu0 0.0
    %1554 = vmatpush1.msra.mxu0 0.0
    %1555 = vmatprep.subr.mxu0 0.0
    %1556 = vmatpush1.msra.mxu0 0.0
    %1557 = vmatprep.subr.mxu0 0.0
    %1558 = vmatpush1.msra.mxu0 0.0
    %1559 = vmatprep.subr.mxu0 0.0
    %1560 = vmatpush1.msra.mxu0 0.0
    %1561 = vmatprep.subr.mxu0 0.0
    %1562 = vmatpush1.msra.mxu0 0.0
    %1563 = vmatprep.subr.mxu0 0.0
    %1564 = vmatpush1.msra.mxu0 0.0
    %1565 = vmatprep.subr.mxu0 0.0
    %1566 = vmatpush1.msra.mxu0 0.0
    %1567 = vmatprep.subr.mxu0 0.0
    %1568 = vmatpush1.msra.mxu0 %v227
    %1569 = vmatprep.subr.mxu0 0.0
    %1570 = vmatpush1.msra.mxu0 %v226
    %1571 = vmatprep.subr.mxu0 0.0
    %1572 = vmatpush1.msra.mxu0 %v225
    %1573 = vmatprep.subr.mxu0 0.0
    %1574 = vmatpush1.msra.mxu0 %v224
    %1575 = vmatprep.subr.mxu0 0.0
    %1576 = vmatpush2.msra.mxu0 0.0
    %1577 = vmatprep.subr.mxu0 0.0
    %1578 = vmatpush2.msra.mxu0 0.0
    %1579 = vmatprep.subr.mxu0 0.0
    %1580 = vmatpush2.msra.mxu0 0.0
    %1581 = vmatprep.subr.mxu0 0.0
    %1582 = vmatpush2.msra.mxu0 0.0
    %1583 = vmatprep.subr.mxu0 0.0
    %1584 = vmatpush2.msra.mxu0 0.0
    %1585 = vmatprep.subr.mxu0 0.0
    %1586 = vmatpush2.msra.mxu0 0.0
    %1587 = vmatprep.subr.mxu0 0.0
    %1588 = vmatpush2.msra.mxu0 0.0
    %1589 = vmatprep.subr.mxu0 0.0
    %1590 = vmatpush2.msra.mxu0 0.0
    %1591 = vmatprep.subr.mxu0 0.0
    %1592 = vmatpush2.msra.mxu0 0.0
    %1593 = vmatprep.subr.mxu0 0.0
    %1594 = vmatpush2.msra.mxu0 0.0
    %1595 = vmatprep.subr.mxu0 0.0
    %1596 = vmatpush2.msra.mxu0 0.0
    %1597 = vmatprep.subr.mxu0 0.0
    %1598 = vmatpush2.msra.mxu0 0.0
    %1599 = vmatprep.subr.mxu0 0.0
    %1600 = vmatpush2.msra.mxu0 0.0
    %1601 = vmatprep.subr.mxu0 0.0
    %1602 = vmatpush2.msra.mxu0 0.0
    %1603 = vmatprep.subr.mxu0 0.0
    %1604 = vmatpush2.msra.mxu0 0.0
    %1605 = vmatprep.subr.mxu0 0.0
    %1606 = vmatpush2.msra.mxu0 0.0
    %1607 = vmatprep.mubr.f32.mxu0 0.0
    %1608 = vmatmul.mubr.f32.gmra.mxu0 %v1541
    %v1609 = vpop.f32.mrf.mxu0
    %v1610 = vadd.f32 %v213, %v1609
    %v1611 = vpop.f32.mrf.mxu0
    %1612 = vdwg.mxu0
    %v1613 = vsub.f32 0.0, %v1610
    %v1614 = vmul.f32 %v1613, 1.442695
    %v1615 = vpow.pop %v1614
    %v1616 = vadd.f32 %v1615, 1.0
    %v1617 = vrcp.pop %v1616
    %v1618 = vtanh.pop %v1610
    %v1619 = vmul.f32 %v1617, %v1523
    %1621 = vrot.lane.b32.xlu0 %v1618, 32
    %v1622 = vpop.permute.xlu0 %1621
    %v1624 = vmul.f32 %v1617, %v1622
    %1626 = vrot.lane.b32.xlu0 %v1624, 32
    %v1627 = vpop.permute.xlu0 %1626
    %v1629 = vadd.f32 %v1619, %v1627
    %v1630 = vtanh.pop %v1629
    %1632 = vrot.lane.b32.xlu0 %v1630, 32
    %v1633 = vpop.permute.xlu0 %1632
    %v1635 = vmul.f32 %v1617, %v1633
    %1637 = vrot.lane.b32.xlu0 %v1524, 64
    %v1638 = vpop.permute.xlu0 %1637
    %v1639 = vsel %vm232, %v1638, 0
    %1641 = vmatprep.subr.mxu0 0.0
    %1642 = vmatpush1.msra.mxu0 0.0
    %1643 = vmatprep.subr.mxu0 0.0
    %1644 = vmatpush1.msra.mxu0 0.0
    %1645 = vmatprep.subr.mxu0 0.0
    %1646 = vmatpush1.msra.mxu0 0.0
    %1647 = vmatprep.subr.mxu0 0.0
    %1648 = vmatpush1.msra.mxu0 0.0
    %1649 = vmatprep.subr.mxu0 0.0
    %1650 = vmatpush1.msra.mxu0 0.0
    %1651 = vmatprep.subr.mxu0 0.0
    %1652 = vmatpush1.msra.mxu0 0.0
    %1653 = vmatprep.subr.mxu0 0.0
    %1654 = vmatpush1.msra.mxu0 0.0
    %1655 = vmatprep.subr.mxu0 0.0
    %1656 = vmatpush1.msra.mxu0 0.0
    %1657 = vmatprep.subr.mxu0 0.0
    %1658 = vmatpush1.msra.mxu0 0.0
    %1659 = vmatprep.subr.mxu0 0.0
    %1660 = vmatpush1.msra.mxu0 0.0
    %1661 = vmatprep.subr.mxu0 0.0
    %1662 = vmatpush1.msra.mxu0 0.0
    %1663 = vmatprep.subr.mxu0 0.0
    %1664 = vmatpush1.msra.mxu0 0.0
    %1665 = vmatprep.subr.mxu0 0.0
    %1666 = vmatpush1.msra.mxu0 %v231
    %1667 = vmatprep.subr.mxu0 0.0
    %1668 = vmatpush1.msra.mxu0 %v230
    %1669 = vmatprep.subr.mxu0 0.0
    %1670 = vmatpush1.msra.mxu0 %v229
    %1671 = vmatprep.subr.mxu0 0.0
    %1672 = vmatpush1.msra.mxu0 %v228
    %1673 = vmatprep.subr.mxu0 0.0
    %1674 = vmatpush2.msra.mxu0 0.0
    %1675 = vmatprep.subr.mxu0 0.0
    %1676 = vmatpush2.msra.mxu0 0.0
    %1677 = vmatprep.subr.mxu0 0.0
    %1678 = vmatpush2.msra.mxu0 0.0
    %1679 = vmatprep.subr.mxu0 0.0
    %1680 = vmatpush2.msra.mxu0 0.0
    %1681 = vmatprep.subr.mxu0 0.0
    %1682 = vmatpush2.msra.mxu0 0.0
    %1683 = vmatprep.subr.mxu0 0.0
    %1684 = vmatpush2.msra.mxu0 0.0
    %1685 = vmatprep.subr.mxu0 0.0
    %1686 = vmatpush2.msra.mxu0 0.0
    %1687 = vmatprep.subr.mxu0 0.0
    %1688 = vmatpush2.msra.mxu0 0.0
    %1689 = vmatprep.subr.mxu0 0.0
    %1690 = vmatpush2.msra.mxu0 0.0
    %1691 = vmatprep.subr.mxu0 0.0
    %1692 = vmatpush2.msra.mxu0 0.0
    %1693 = vmatprep.subr.mxu0 0.0
    %1694 = vmatpush2.msra.mxu0 0.0
    %1695 = vmatprep.subr.mxu0 0.0
    %1696 = vmatpush2.msra.mxu0 0.0
    %1697 = vmatprep.subr.mxu0 0.0
    %1698 = vmatpush2.msra.mxu0 0.0
    %1699 = vmatprep.subr.mxu0 0.0
    %1700 = vmatpush2.msra.mxu0 0.0
    %1701 = vmatprep.subr.mxu0 0.0
    %1702 = vmatpush2.msra.mxu0 0.0
    %1703 = vmatprep.subr.mxu0 0.0
    %1704 = vmatpush2.msra.mxu0 0.0
    %1705 = vmatprep.mubr.f32.mxu0 0.0
    %1706 = vmatmul.mubr.f32.gmra.mxu0 %v1639
    %v1707 = vpop.f32.mrf.mxu0
    %v1708 = vadd.f32 %v185, %v1707
    %v1709 = vpop.f32.mrf.mxu0
    %1710 = vdwg.mxu0
    %v1711 = vsub.f32 0.0, %v1708
    %v1712 = vmul.f32 %v1711, 1.442695
    %v1713 = vpow.pop %v1712
    %v1714 = vadd.f32 %v1713, 1.0
    %v1715 = vrcp.pop %v1714
    %v1716 = vtanh.pop %v1708
    %v1717 = vmul.f32 %v1715, %v1525
    %1719 = vrot.lane.b32.xlu0 %v1716, 32
    %v1720 = vpop.permute.xlu0 %1719
    %v1722 = vmul.f32 %v1715, %v1720
    %1724 = vrot.lane.b32.xlu0 %v1722, 32
    %v1725 = vpop.permute.xlu0 %1724
    %v1727 = vadd.f32 %v1717, %v1725
    %v1728 = vtanh.pop %v1727
    %1730 = vrot.lane.b32.xlu0 %v1728, 32
    %v1731 = vpop.permute.xlu0 %1730
    %v1733 = vmul.f32 %v1715, %v1731
    %v1734 = vsel %vm651, %v1635, %v1522
    %v1735 = vsel %vm651, %v1629, %v1523
    %v1736 = vsel %vm644, %v1733, %v1524
    %v1737 = vsel %vm644, %v1727, %v1525
    %v1738 = vsel %vm651, %v1635, 0.0
    %1740 = vrot.lane.b32.xlu0 %v1738, 64
    %v1741 = vpop.permute.xlu0 %1740
    %1743 = vst.msk [vmem:[#allocation2 + $0x30] sm:$0xff] %vm232, %v1741
    %v1744 = vsel %vm644, %v1733, 0.0
    %1746 = vrot.lane.b32.xlu0 %v1744, 64
    %v1747 = vpop.permute.xlu0 %1746
    %1749 = vst.msk [vmem:[#allocation3 + $0x8] sm:$0xff] %vm232, %v1747
    %1751 = vrot.lane.b32.xlu0 %v1734, 64
    %v1752 = vpop.permute.xlu0 %1751
    %v1753 = vsel %vm232, %v1752, 0
    %1755 = vmatprep.subr.mxu0 0.0
    %1756 = vmatpush1.msra.mxu0 0.0
    %1757 = vmatprep.subr.mxu0 0.0
    %1758 = vmatpush1.msra.mxu0 0.0
    %1759 = vmatprep.subr.mxu0 0.0
    %1760 = vmatpush1.msra.mxu0 0.0
    %1761 = vmatprep.subr.mxu0 0.0
    %1762 = vmatpush1.msra.mxu0 0.0
    %1763 = vmatprep.subr.mxu0 0.0
    %1764 = vmatpush1.msra.mxu0 0.0
    %1765 = vmatprep.subr.mxu0 0.0
    %1766 = vmatpush1.msra.mxu0 0.0
    %1767 = vmatprep.subr.mxu0 0.0
    %1768 = vmatpush1.msra.mxu0 0.0
    %1769 = vmatprep.subr.mxu0 0.0
    %1770 = vmatpush1.msra.mxu0 0.0
    %1771 = vmatprep.subr.mxu0 0.0
    %1772 = vmatpush1.msra.mxu0 0.0
    %1773 = vmatprep.subr.mxu0 0.0
    %1774 = vmatpush1.msra.mxu0 0.0
    %1775 = vmatprep.subr.mxu0 0.0
    %1776 = vmatpush1.msra.mxu0 0.0
    %1777 = vmatprep.subr.mxu0 0.0
    %1778 = vmatpush1.msra.mxu0 0.0
    %1779 = vmatprep.subr.mxu0 0.0
    %1780 = vmatpush1.msra.mxu0 %v227
    %1781 = vmatprep.subr.mxu0 0.0
    %1782 = vmatpush1.msra.mxu0 %v226
    %1783 = vmatprep.subr.mxu0 0.0
    %1784 = vmatpush1.msra.mxu0 %v225
    %1785 = vmatprep.subr.mxu0 0.0
    %1786 = vmatpush1.msra.mxu0 %v224
    %1787 = vmatprep.subr.mxu0 0.0
    %1788 = vmatpush2.msra.mxu0 0.0
    %1789 = vmatprep.subr.mxu0 0.0
    %1790 = vmatpush2.msra.mxu0 0.0
    %1791 = vmatprep.subr.mxu0 0.0
    %1792 = vmatpush2.msra.mxu0 0.0
    %1793 = vmatprep.subr.mxu0 0.0
    %1794 = vmatpush2.msra.mxu0 0.0
    %1795 = vmatprep.subr.mxu0 0.0
    %1796 = vmatpush2.msra.mxu0 0.0
    %1797 = vmatprep.subr.mxu0 0.0
    %1798 = vmatpush2.msra.mxu0 0.0
    %1799 = vmatprep.subr.mxu0 0.0
    %1800 = vmatpush2.msra.mxu0 0.0
    %1801 = vmatprep.subr.mxu0 0.0
    %1802 = vmatpush2.msra.mxu0 0.0
    %1803 = vmatprep.subr.mxu0 0.0
    %1804 = vmatpush2.msra.mxu0 0.0
    %1805 = vmatprep.subr.mxu0 0.0
    %1806 = vmatpush2.msra.mxu0 0.0
    %1807 = vmatprep.subr.mxu0 0.0
    %1808 = vmatpush2.msra.mxu0 0.0
    %1809 = vmatprep.subr.mxu0 0.0
    %1810 = vmatpush2.msra.mxu0 0.0
    %1811 = vmatprep.subr.mxu0 0.0
    %1812 = vmatpush2.msra.mxu0 0.0
    %1813 = vmatprep.subr.mxu0 0.0
    %1814 = vmatpush2.msra.mxu0 0.0
    %1815 = vmatprep.subr.mxu0 0.0
    %1816 = vmatpush2.msra.mxu0 0.0
    %1817 = vmatprep.subr.mxu0 0.0
    %1818 = vmatpush2.msra.mxu0 0.0
    %1819 = vmatprep.mubr.f32.mxu0 0.0
    %1820 = vmatmul.mubr.f32.gmra.mxu0 %v1753
    %v1821 = vpop.f32.mrf.mxu0
    %v1822 = vadd.f32 %v219, %v1821
    %v1823 = vpop.f32.mrf.mxu0
    %1824 = vdwg.mxu0
    %v1825 = vsub.f32 0.0, %v1822
    %v1826 = vmul.f32 %v1825, 1.442695
    %v1827 = vpow.pop %v1826
    %v1828 = vadd.f32 %v1827, 1.0
    %v1829 = vrcp.pop %v1828
    %v1830 = vtanh.pop %v1822
    %v1831 = vmul.f32 %v1829, %v1735
    %1833 = vrot.lane.b32.xlu0 %v1830, 32
    %v1834 = vpop.permute.xlu0 %1833
    %v1836 = vmul.f32 %v1829, %v1834
    %1838 = vrot.lane.b32.xlu0 %v1836, 32
    %v1839 = vpop.permute.xlu0 %1838
    %v1841 = vadd.f32 %v1831, %v1839
    %v1842 = vtanh.pop %v1841
    %1844 = vrot.lane.b32.xlu0 %v1842, 32
    %v1845 = vpop.permute.xlu0 %1844
    %v1847 = vmul.f32 %v1829, %v1845
    %1849 = vrot.lane.b32.xlu0 %v1736, 64
    %v1850 = vpop.permute.xlu0 %1849
    %v1851 = vsel %vm232, %v1850, 0
    %1853 = vmatprep.subr.mxu0 0.0
    %1854 = vmatpush1.msra.mxu0 0.0
    %1855 = vmatprep.subr.mxu0 0.0
    %1856 = vmatpush1.msra.mxu0 0.0
    %1857 = vmatprep.subr.mxu0 0.0
    %1858 = vmatpush1.msra.mxu0 0.0
    %1859 = vmatprep.subr.mxu0 0.0
    %1860 = vmatpush1.msra.mxu0 0.0
    %1861 = vmatprep.subr.mxu0 0.0
    %1862 = vmatpush1.msra.mxu0 0.0
    %1863 = vmatprep.subr.mxu0 0.0
    %1864 = vmatpush1.msra.mxu0 0.0
    %1865 = vmatprep.subr.mxu0 0.0
    %1866 = vmatpush1.msra.mxu0 0.0
    %1867 = vmatprep.subr.mxu0 0.0
    %1868 = vmatpush1.msra.mxu0 0.0
    %1869 = vmatprep.subr.mxu0 0.0
    %1870 = vmatpush1.msra.mxu0 0.0
    %1871 = vmatprep.subr.mxu0 0.0
    %1872 = vmatpush1.msra.mxu0 0.0
    %1873 = vmatprep.subr.mxu0 0.0
    %1874 = vmatpush1.msra.mxu0 0.0
    %1875 = vmatprep.subr.mxu0 0.0
    %1876 = vmatpush1.msra.mxu0 0.0
    %1877 = vmatprep.subr.mxu0 0.0
    %1878 = vmatpush1.msra.mxu0 %v231
    %1879 = vmatprep.subr.mxu0 0.0
    %1880 = vmatpush1.msra.mxu0 %v230
    %1881 = vmatprep.subr.mxu0 0.0
    %1882 = vmatpush1.msra.mxu0 %v229
    %1883 = vmatprep.subr.mxu0 0.0
    %1884 = vmatpush1.msra.mxu0 %v228
    %1885 = vmatprep.subr.mxu0 0.0
    %1886 = vmatpush2.msra.mxu0 0.0
    %1887 = vmatprep.subr.mxu0 0.0
    %1888 = vmatpush2.msra.mxu0 0.0
    %1889 = vmatprep.subr.mxu0 0.0
    %1890 = vmatpush2.msra.mxu0 0.0
    %1891 = vmatprep.subr.mxu0 0.0
    %1892 = vmatpush2.msra.mxu0 0.0
    %1893 = vmatprep.subr.mxu0 0.0
    %1894 = vmatpush2.msra.mxu0 0.0
    %1895 = vmatprep.subr.mxu0 0.0
    %1896 = vmatpush2.msra.mxu0 0.0
    %1897 = vmatprep.subr.mxu0 0.0
    %1898 = vmatpush2.msra.mxu0 0.0
    %1899 = vmatprep.subr.mxu0 0.0
    %1900 = vmatpush2.msra.mxu0 0.0
    %1901 = vmatprep.subr.mxu0 0.0
    %1902 = vmatpush2.msra.mxu0 0.0
    %1903 = vmatprep.subr.mxu0 0.0
    %1904 = vmatpush2.msra.mxu0 0.0
    %1905 = vmatprep.subr.mxu0 0.0
    %1906 = vmatpush2.msra.mxu0 0.0
    %1907 = vmatprep.subr.mxu0 0.0
    %1908 = vmatpush2.msra.mxu0 0.0
    %1909 = vmatprep.subr.mxu0 0.0
    %1910 = vmatpush2.msra.mxu0 0.0
    %1911 = vmatprep.subr.mxu0 0.0
    %1912 = vmatpush2.msra.mxu0 0.0
    %1913 = vmatprep.subr.mxu0 0.0
    %1914 = vmatpush2.msra.mxu0 0.0
    %1915 = vmatprep.subr.mxu0 0.0
    %1916 = vmatpush2.msra.mxu0 0.0
    %1917 = vmatprep.mubr.f32.mxu0 0.0
    %1918 = vmatmul.mubr.f32.gmra.mxu0 %v1851
    %v1919 = vpop.f32.mrf.mxu0
    %v1920 = vadd.f32 %v179, %v1919
    %v1921 = vpop.f32.mrf.mxu0
    %1922 = vdwg.mxu0
    %v1923 = vsub.f32 0.0, %v1920
    %v1924 = vmul.f32 %v1923, 1.442695
    %v1925 = vpow.pop %v1924
    %v1926 = vadd.f32 %v1925, 1.0
    %v1927 = vrcp.pop %v1926
    %v1928 = vtanh.pop %v1920
    %v1929 = vmul.f32 %v1927, %v1737
    %1931 = vrot.lane.b32.xlu0 %v1928, 32
    %v1932 = vpop.permute.xlu0 %1931
    %v1934 = vmul.f32 %v1927, %v1932
    %1936 = vrot.lane.b32.xlu0 %v1934, 32
    %v1937 = vpop.permute.xlu0 %1936
    %v1939 = vadd.f32 %v1929, %v1937
    %v1940 = vtanh.pop %v1939
    %1942 = vrot.lane.b32.xlu0 %v1940, 32
    %v1943 = vpop.permute.xlu0 %1942
    %v1945 = vmul.f32 %v1927, %v1943
    %v1946 = vsel %vm435, %v1847, 0.0
    %1948 = vrot.lane.b32.xlu0 %v1946, 64
    %v1949 = vpop.permute.xlu0 %1948
    %1951 = vst.msk [vmem:[#allocation2 + $0x38] sm:$0xff] %vm232, %v1949
    %v1952 = vsel %vm428, %v1945, 0.0
    %1954 = vrot.lane.b32.xlu0 %v1952, 64
    %v1955 = vpop.permute.xlu0 %1954
    %1957 = vst.msk [vmem:[#allocation3] sm:$0xff] %vm232, %v1955
    %v1958 = vld [vmem:[#allocation2] sm:$0xff]
    %v1959 = vld [vmem:[#allocation2 + $0x8] sm:$0xff]
    %v1960 = vld [vmem:[#allocation2 + $0x10] sm:$0xff]
    %v1961 = vld [vmem:[#allocation2 + $0x18] sm:$0xff]
    %v1962 = vld [vmem:[#allocation2 + $0x20] sm:$0xff]
    %v1963 = vld [vmem:[#allocation2 + $0x28] sm:$0xff]
    %v1964 = vld [vmem:[#allocation2 + $0x30] sm:$0xff]
    %v1965 = vld [vmem:[#allocation2 + $0x38] sm:$0xff]
    %v1966 = vld [vmem:[#allocation4] sm:$0xff]
    %v1967 = vld [vmem:[#allocation4 + $0x8] sm:$0xff]
    %v1968 = vld [vmem:[#allocation4 + $0x10] sm:$0xff]
    %v1969 = vld [vmem:[#allocation4 + $0x18] sm:$0xff]
    %v1970 = vld [vmem:[#allocation3] sm:$0xff]
    %v1971 = vld [vmem:[#allocation3 + $0x8] sm:$0xff]
    %v1972 = vld [vmem:[#allocation3 + $0x10] sm:$0xff]
    %v1973 = vld [vmem:[#allocation3 + $0x18] sm:$0xff]
    %v1974 = vld [vmem:[#allocation3 + $0x20] sm:$0xff]
    %v1975 = vld [vmem:[#allocation3 + $0x28] sm:$0xff]
    %v1976 = vld [vmem:[#allocation3 + $0x30] sm:$0xff]
    %v1977 = vld [vmem:[#allocation3 + $0x38] sm:$0xff]
    %v1978 = vld [vmem:[#allocation7] sm:$0xff]
    %v1979 = vld [vmem:[#allocation7 + $0x8] sm:$0xff]
    %v1980 = vld [vmem:[#allocation7 + $0x10] sm:$0xff]
    %v1981 = vld [vmem:[#allocation7 + $0x18] sm:$0xff]
    %v1983 = vsel %vm232, %v1970, 0
    %v1986 = vsel %vm232, %v1971, 0
    %v1989 = vsel %vm232, %v1972, 0
    %v1992 = vsel %vm232, %v1973, 0
    %v1995 = vsel %vm232, %v1974, 0
    %v1998 = vsel %vm232, %v1975, 0
    %v2001 = vsel %vm232, %v1976, 0
    %v2004 = vsel %vm232, %v1977, 0
    %2006 = vmatprep.subr.mxu0 0.0
    %2007 = vmatpush1.msra.mxu0 0.0
    %2008 = vmatprep.subr.mxu0 0.0
    %2009 = vmatpush1.msra.mxu0 0.0
    %2010 = vmatprep.subr.mxu0 0.0
    %2011 = vmatpush1.msra.mxu0 0.0
    %2012 = vmatprep.subr.mxu0 0.0
    %2013 = vmatpush1.msra.mxu0 0.0
    %2014 = vmatprep.subr.mxu0 0.0
    %2015 = vmatpush1.msra.mxu0 0.0
    %2016 = vmatprep.subr.mxu0 0.0
    %2017 = vmatpush1.msra.mxu0 0.0
    %2018 = vmatprep.subr.mxu0 0.0
    %2019 = vmatpush1.msra.mxu0 0.0
    %2020 = vmatprep.subr.mxu0 0.0
    %2021 = vmatpush1.msra.mxu0 0.0
    %2022 = vmatprep.subr.mxu0 0.0
    %2023 = vmatpush1.msra.mxu0 0.0
    %2024 = vmatprep.subr.mxu0 0.0
    %2025 = vmatpush1.msra.mxu0 0.0
    %2026 = vmatprep.subr.mxu0 0.0
    %2027 = vmatpush1.msra.mxu0 0.0
    %2028 = vmatprep.subr.mxu0 0.0
    %2029 = vmatpush1.msra.mxu0 0.0
    %2030 = vmatprep.subr.mxu0 0.0
    %2031 = vmatpush1.msra.mxu0 %v1981
    %2032 = vmatprep.subr.mxu0 0.0
    %2033 = vmatpush1.msra.mxu0 %v1980
    %2034 = vmatprep.subr.mxu0 0.0
    %2035 = vmatpush1.msra.mxu0 %v1979
    %2036 = vmatprep.subr.mxu0 0.0
    %2037 = vmatpush1.msra.mxu0 %v1978
    %2038 = vmatprep.subr.mxu0 0.0
    %2039 = vmatpush2.msra.mxu0 0.0
    %2040 = vmatprep.subr.mxu0 0.0
    %2041 = vmatpush2.msra.mxu0 0.0
    %2042 = vmatprep.subr.mxu0 0.0
    %2043 = vmatpush2.msra.mxu0 0.0
    %2044 = vmatprep.subr.mxu0 0.0
    %2045 = vmatpush2.msra.mxu0 0.0
    %2046 = vmatprep.subr.mxu0 0.0
    %2047 = vmatpush2.msra.mxu0 0.0
    %2048 = vmatprep.subr.mxu0 0.0
    %2049 = vmatpush2.msra.mxu0 0.0
    %2050 = vmatprep.subr.mxu0 0.0
    %2051 = vmatpush2.msra.mxu0 0.0
    %2052 = vmatprep.subr.mxu0 0.0
    %2053 = vmatpush2.msra.mxu0 0.0
    %2054 = vmatprep.subr.mxu0 0.0
    %2055 = vmatpush2.msra.mxu0 0.0
    %2056 = vmatprep.subr.mxu0 0.0
    %2057 = vmatpush2.msra.mxu0 0.0
    %2058 = vmatprep.subr.mxu0 0.0
    %2059 = vmatpush2.msra.mxu0 0.0
    %2060 = vmatprep.subr.mxu0 0.0
    %2061 = vmatpush2.msra.mxu0 0.0
    %2062 = vmatprep.subr.mxu0 0.0
    %2063 = vmatpush2.msra.mxu0 0.0
    %2064 = vmatprep.subr.mxu0 0.0
    %2065 = vmatpush2.msra.mxu0 0.0
    %2066 = vmatprep.subr.mxu0 0.0
    %2067 = vmatpush2.msra.mxu0 0.0
    %2068 = vmatprep.subr.mxu0 0.0
    %2069 = vmatpush2.msra.mxu0 0.0
    %2070 = vmatprep.mubr.f32.mxu0 0.0
    %2071 = vmatmul.mubr.f32.gmra.mxu0 %v1983
    %v2072 = vpop.f32.mrf.mxu0
    %v2073 = vadd.f32 0.0, %v2072
    %v2074 = vpop.f32.mrf.mxu0
    %2075 = vmatprep.mubr.f32.mxu0 0.0
    %2076 = vmatmul.mubr.f32.gmra.mxu0 %v1986
    %v2077 = vpop.f32.mrf.mxu0
    %v2078 = vadd.f32 0.0, %v2077
    %v2079 = vpop.f32.mrf.mxu0
    %2080 = vmatprep.mubr.f32.mxu0 0.0
    %2081 = vmatmul.mubr.f32.gmra.mxu0 %v1989
    %v2082 = vpop.f32.mrf.mxu0
    %v2083 = vadd.f32 0.0, %v2082
    %v2084 = vpop.f32.mrf.mxu0
    %2085 = vmatprep.mubr.f32.mxu0 0.0
    %2086 = vmatmul.mubr.f32.gmra.mxu0 %v1992
    %v2087 = vpop.f32.mrf.mxu0
    %v2088 = vadd.f32 0.0, %v2087
    %v2089 = vpop.f32.mrf.mxu0
    %2090 = vmatprep.mubr.f32.mxu0 0.0
    %2091 = vmatmul.mubr.f32.gmra.mxu0 %v1995
    %v2092 = vpop.f32.mrf.mxu0
    %v2093 = vadd.f32 0.0, %v2092
    %v2094 = vpop.f32.mrf.mxu0
    %2095 = vmatprep.mubr.f32.mxu0 0.0
    %2096 = vmatmul.mubr.f32.gmra.mxu0 %v1998
    %v2097 = vpop.f32.mrf.mxu0
    %v2098 = vadd.f32 0.0, %v2097
    %v2099 = vpop.f32.mrf.mxu0
    %2100 = vmatprep.mubr.f32.mxu0 0.0
    %2101 = vmatmul.mubr.f32.gmra.mxu0 %v2001
    %v2102 = vpop.f32.mrf.mxu0
    %v2103 = vadd.f32 0.0, %v2102
    %v2104 = vpop.f32.mrf.mxu0
    %2105 = vmatprep.mubr.f32.mxu0 0.0
    %2106 = vmatmul.mubr.f32.gmra.mxu0 %v2004
    %v2107 = vpop.f32.mrf.mxu0
    %v2108 = vadd.f32 0.0, %v2107
    %v2109 = vpop.f32.mrf.mxu0
    %2110 = vdwg.mxu0
    %v2112 = vsel %vm232, %v1958, 0
    %v2115 = vsel %vm232, %v1959, 0
    %v2118 = vsel %vm232, %v1960, 0
    %v2121 = vsel %vm232, %v1961, 0
    %v2124 = vsel %vm232, %v1962, 0
    %v2127 = vsel %vm232, %v1963, 0
    %v2130 = vsel %vm232, %v1964, 0
    %v2133 = vsel %vm232, %v1965, 0
    %2135 = vmatprep.subr.mxu0 0.0
    %2136 = vmatpush1.msra.mxu0 0.0
    %2137 = vmatprep.subr.mxu0 0.0
    %2138 = vmatpush1.msra.mxu0 0.0
    %2139 = vmatprep.subr.mxu0 0.0
    %2140 = vmatpush1.msra.mxu0 0.0
    %2141 = vmatprep.subr.mxu0 0.0
    %2142 = vmatpush1.msra.mxu0 0.0
    %2143 = vmatprep.subr.mxu0 0.0
    %2144 = vmatpush1.msra.mxu0 0.0
    %2145 = vmatprep.subr.mxu0 0.0
    %2146 = vmatpush1.msra.mxu0 0.0
    %2147 = vmatprep.subr.mxu0 0.0
    %2148 = vmatpush1.msra.mxu0 0.0
    %2149 = vmatprep.subr.mxu0 0.0
    %2150 = vmatpush1.msra.mxu0 0.0
    %2151 = vmatprep.subr.mxu0 0.0
    %2152 = vmatpush1.msra.mxu0 0.0
    %2153 = vmatprep.subr.mxu0 0.0
    %2154 = vmatpush1.msra.mxu0 0.0
    %2155 = vmatprep.subr.mxu0 0.0
    %2156 = vmatpush1.msra.mxu0 0.0
    %2157 = vmatprep.subr.mxu0 0.0
    %2158 = vmatpush1.msra.mxu0 0.0
    %2159 = vmatprep.subr.mxu0 0.0
    %2160 = vmatpush1.msra.mxu0 %v1969
    %2161 = vmatprep.subr.mxu0 0.0
    %2162 = vmatpush1.msra.mxu0 %v1968
    %2163 = vmatprep.subr.mxu0 0.0
    %2164 = vmatpush1.msra.mxu0 %v1967
    %2165 = vmatprep.subr.mxu0 0.0
    %2166 = vmatpush1.msra.mxu0 %v1966
    %2167 = vmatprep.subr.mxu0 0.0
    %2168 = vmatpush2.msra.mxu0 0.0
    %2169 = vmatprep.subr.mxu0 0.0
    %2170 = vmatpush2.msra.mxu0 0.0
    %2171 = vmatprep.subr.mxu0 0.0
    %2172 = vmatpush2.msra.mxu0 0.0
    %2173 = vmatprep.subr.mxu0 0.0
    %2174 = vmatpush2.msra.mxu0 0.0
    %2175 = vmatprep.subr.mxu0 0.0
    %2176 = vmatpush2.msra.mxu0 0.0
    %2177 = vmatprep.subr.mxu0 0.0
    %2178 = vmatpush2.msra.mxu0 0.0
    %2179 = vmatprep.subr.mxu0 0.0
    %2180 = vmatpush2.msra.mxu0 0.0
    %2181 = vmatprep.subr.mxu0 0.0
    %2182 = vmatpush2.msra.mxu0 0.0
    %2183 = vmatprep.subr.mxu0 0.0
    %2184 = vmatpush2.msra.mxu0 0.0
    %2185 = vmatprep.subr.mxu0 0.0
    %2186 = vmatpush2.msra.mxu0 0.0
    %2187 = vmatprep.subr.mxu0 0.0
    %2188 = vmatpush2.msra.mxu0 0.0
    %2189 = vmatprep.subr.mxu0 0.0
    %2190 = vmatpush2.msra.mxu0 0.0
    %2191 = vmatprep.subr.mxu0 0.0
    %2192 = vmatpush2.msra.mxu0 0.0
    %2193 = vmatprep.subr.mxu0 0.0
    %2194 = vmatpush2.msra.mxu0 0.0
    %2195 = vmatprep.subr.mxu0 0.0
    %2196 = vmatpush2.msra.mxu0 0.0
    %2197 = vmatprep.subr.mxu0 0.0
    %2198 = vmatpush2.msra.mxu0 0.0
    %2199 = vmatprep.mubr.f32.mxu0 0.0
    %2200 = vmatmul.mubr.f32.gmra.mxu0 %v2112
    %v2201 = vpop.f32.mrf.mxu0
    %v2202 = vadd.f32 %v2073, %v2201
    %v2203 = vpop.f32.mrf.mxu0
    %2204 = vmatprep.mubr.f32.mxu0 0.0
    %2205 = vmatmul.mubr.f32.gmra.mxu0 %v2115
    %v2206 = vpop.f32.mrf.mxu0
    %v2207 = vadd.f32 %v2078, %v2206
    %v2208 = vpop.f32.mrf.mxu0
    %2209 = vmatprep.mubr.f32.mxu0 0.0
    %2210 = vmatmul.mubr.f32.gmra.mxu0 %v2118
    %v2211 = vpop.f32.mrf.mxu0
    %v2212 = vadd.f32 %v2083, %v2211
    %v2213 = vpop.f32.mrf.mxu0
    %2214 = vmatprep.mubr.f32.mxu0 0.0
    %2215 = vmatmul.mubr.f32.gmra.mxu0 %v2121
    %v2216 = vpop.f32.mrf.mxu0
    %v2217 = vadd.f32 %v2088, %v2216
    %v2218 = vpop.f32.mrf.mxu0
    %2219 = vmatprep.mubr.f32.mxu0 0.0
    %2220 = vmatmul.mubr.f32.gmra.mxu0 %v2124
    %v2221 = vpop.f32.mrf.mxu0
    %v2222 = vadd.f32 %v2093, %v2221
    %v2223 = vpop.f32.mrf.mxu0
    %2224 = vmatprep.mubr.f32.mxu0 0.0
    %2225 = vmatmul.mubr.f32.gmra.mxu0 %v2127
    %v2226 = vpop.f32.mrf.mxu0
    %v2227 = vadd.f32 %v2098, %v2226
    %v2228 = vpop.f32.mrf.mxu0
    %2229 = vmatprep.mubr.f32.mxu0 0.0
    %2230 = vmatmul.mubr.f32.gmra.mxu0 %v2130
    %v2231 = vpop.f32.mrf.mxu0
    %v2232 = vadd.f32 %v2103, %v2231
    %v2233 = vpop.f32.mrf.mxu0
    %2234 = vmatprep.mubr.f32.mxu0 0.0
    %2235 = vmatmul.mubr.f32.gmra.mxu0 %v2133
    %v2236 = vpop.f32.mrf.mxu0
    %v2237 = vadd.f32 %v2108, %v2236
    %v2238 = vpop.f32.mrf.mxu0
    %2239 = vdwg.mxu0
    %v2240 = vld [vmem:[%s8] sm:$0x1]
    %v2242 = vlaneseq
    %v2243 = vshrl.u32 %v2242, 7
    %v2244 = vsub.s32 0, %v2243
    %v2245 = vrot.slane %v2240, %v2244
    %v2247 = vadd.f32 %v2202, %v2245
    %v2248 = vadd.f32 %v2207, %v2245
    %v2249 = vadd.f32 %v2212, %v2245
    %v2250 = vadd.f32 %v2217, %v2245
    %v2251 = vadd.f32 %v2222, %v2245
    %v2252 = vadd.f32 %v2227, %v2245
    %v2253 = vadd.f32 %v2232, %v2245
    %v2254 = vadd.f32 %v2237, %v2245
    %2255 = vst [vmem:[#allocation9] sm:$0xff] %v2247
    %2256 = vst [vmem:[#allocation9 + $0x8] sm:$0xff] %v2248
    %2257 = vst [vmem:[#allocation9 + $0x10] sm:$0xff] %v2249
    %2258 = vst [vmem:[#allocation9 + $0x18] sm:$0xff] %v2250
    %2259 = vst [vmem:[#allocation9 + $0x20] sm:$0xff] %v2251
    %2260 = vst [vmem:[#allocation9 + $0x28] sm:$0xff] %v2252
    %2261 = vst [vmem:[#allocation9 + $0x30] sm:$0xff] %v2253
    %2262 = vst [vmem:[#allocation9 + $0x38] sm:$0xff] %v2254
    // Predicated region
    $region46: #{tpu_custom_call.1} parent=1 // pred_check
      _
    $region47: #{tpu_custom_call.1} parent=1 // pred_check_branch
      %2264 = sbr.rel (0) target = $region49
    $region48: #{tpu_custom_call.1} parent=1 // pred_region
      %s2266 = ssub.s32 1024, 1024
      %2267 = vsyncadd [#allocation6], %s2266
      %s2268 = sshll.u32 [#allocation9], 4
      %s2269 = int_to_ptr.vmem [resolvable:$true] %s2268
      %2274 = dma.vmem_to_hbm [thread:$0]  %s2269, 1024, %s9, [#allocation6], 128, 128, 8
    $region49: #{tpu_custom_call.1} parent=1 // pred_fallthru
      _
    // Predicated region
    $region50: #{tpu_custom_call.1} parent=1 // pred_check
      _
    $region51: #{tpu_custom_call.1} parent=1 // pred_check_branch
      %2276 = sbr.rel (0) target = $region53
    $region52: #{tpu_custom_call.1} parent=1 // pred_region
      %2277 = dma.done [#allocation6], 1024
    $region53: #{tpu_custom_call.1} parent=1 // pred_fallthru
      _
    %2278 = vsyncpa [#allocation5], 1
    %2279 = vsyncpa [#allocation8], 1
    %2280 = vsyncpa [#allocation6], 1

</llo_original>
